<compile_context>
chip_gen: v7x
topology: tpu7x:2x2x1
jax: 0.10.0
libtpu: 0.0.40
codegen_flags: <defaults>
</compile_context>

<pallas_src>
import numpy as np
import jax
import jax.numpy as jnp
from jax import lax
from jax.experimental import pallas as pl
from jax.experimental.pallas import tpu as pltpu

H = 32                      # GRU hidden size
LANE = 128                  # lane block per gate (slices on 128-lane boundaries)
NGATE = 3                   # PyTorch GRU gate order: r, z, n
WCOLS = NGATE * LANE        # 384
BIAS_LANE = 2 * H           # constant-1 lane of h carrying the n-gate hidden bias
BIG = 1.0e4                 # z-gate saturation constant (sigmoid -> exactly 1.0 in f32)


# --------------------------------------------------------------------------- #
# Kernel
# --------------------------------------------------------------------------- #
def bigru_kernel(xin_ref, whh_ref, nvalid_ref, out_ref):
    T, B, _ = xin_ref.shape
    P = xin_ref.shape[-1] // NGATE           # 128
    Hd = out_ref.shape[-1]                   # H

    whh = whh_ref[...]                       # (P, 3P) block-packed, loop-invariant

    # h carry: fwd hidden in lanes [0, H), bwd hidden in lanes [H, 2H),
    # constant-1 bias lane at 2H (feeds b_hh_n through whh), rest zero.
    lane_ids = lax.broadcasted_iota(jnp.int32, (B, P), 1)
    h0 = jnp.where(lane_ids == BIAS_LANE, 1.0, 0.0).astype(jnp.float32)

    def step(t, h):
        # x_in: precomputed input projections (+ folded biases + z-hold/-bias
        # saturation constants), layout [r | z | n] blocks of 128 lanes each;
        # fwd dir lanes 0:H, bwd lanes H:2H (bwd pre-time-reversed in wrapper).
        x_in = xin_ref[t]                                            # (B, 3P)
        # One (B,128)@(128,384) MXU push per step covers both dirs + 3 gates.
        g = jnp.dot(h, whh, preferred_element_type=jnp.float32)      # (B, 3P)
        r = jax.nn.sigmoid(x_in[:, 0:P] + g[:, 0:P])
        z = jax.nn.sigmoid(x_in[:, P:2 * P] + g[:, P:2 * P])
        n = jnp.tanh(x_in[:, 2 * P:3 * P] + r * g[:, 2 * P:3 * P])
        # Masked (t,b,dir) positions have z == 1.0 exactly -> h_new == h.
        return (1.0 - z) * n + z * h

    h = lax.fori_loop(0, T, step, h0, unroll=(True if T <= 32 else 8))

    e = h[:, 0:Hd] + h[:, Hd:2 * Hd]                  # hidden[0] + hidden[1]  (B, H)
    rows = lax.broadcasted_iota(jnp.int32, (B, Hd), 0)
    e = jnp.where(rows < nvalid_ref[0], e, -jnp.inf)  # drop padded batch rows
    out_ref[...] = jnp.max(e, axis=0, keepdims=True)


def bigru_encode(xin, whh, nvalid):
    vmem = pl.BlockSpec(memory_space=pltpu.MemorySpace.VMEM)
    smem = pl.BlockSpec(memory_space=pltpu.MemorySpace.SMEM)
    out = pl.pallas_call(
        bigru_kernel,
        out_shape=jax.ShapeDtypeStruct((1, H), jnp.float32),
        in_specs=[vmem, vmem, smem],
        out_specs=vmem,
    )(xin, whh, nvalid)
    return out[0]                                     # (H,)


# --------------------------------------------------------------------------- #
# Fused (jitted) prep + kernel call: one compile per (T_bucket, B_bucket).
# --------------------------------------------------------------------------- #
@jax.jit
def _encode(e_proj, whh, tokens, sizes, nvalid):
    B, T = tokens.shape
    P = LANE
    xp = jnp.take(e_proj, tokens, axis=0)             # (B, T, 3P) gather
    xp = jnp.transpose(xp, (1, 0, 2))                 # (T, B, 3P) time-major
    col = jnp.arange(WCOLS)
    lane = col % P
    # backward direction consumes x[T-1-t]: pre-reverse its lanes in time.
    bwd_lanes = (lane >= H) & (lane < 2 * H)
    xin = jnp.where(bwd_lanes[None, None, :], xp[::-1], xp)
    # pack_padded_sequence emulation: saturate the z gate (sigmoid -> 1) for
    # out-of-length steps so h is held exactly; no mask tensor in the kernel.
    t_idx = jnp.arange(T)[:, None]                                   # (T, 1)
    hold_fwd = (t_idx >= sizes[None, :]).astype(jnp.float32)         # (T, B)
    hold_bwd = ((T - 1 - t_idx) >= sizes[None, :]).astype(jnp.float32)
    z_fwd = ((col >= P) & (col < P + H)).astype(jnp.float32)
    z_bwd = ((col >= P + H) & (col < P + 2 * H)).astype(jnp.float32)
    xin = xin + BIG * (hold_fwd[:, :, None] * z_fwd[None, None, :]
                       + hold_bwd[:, :, None] * z_bwd[None, None, :])
    return bigru_encode(xin, whh, nvalid)


# --------------------------------------------------------------------------- #
# Module
# --------------------------------------------------------------------------- #
class RecurrentFeatureExtractorJAX:
    def __init__(self, lexicon, H=32, key=None):
        self.specialSymbols = ['STARTING', 'ENDING', 'STARTOFOUTPUT', 'ENDOFINPUT']
        lexicon = list(lexicon) + self.specialSymbols
        self.lexicon = lexicon
        self.H = H
        self.symbolToIndex = {s: i for i, s in enumerate(lexicon)}
        self.startingIndex = self.symbolToIndex['STARTING']
        self.endingIndex = self.symbolToIndex['ENDING']
        self.startOfOutputIndex = self.symbolToIndex['STARTOFOUTPUT']
        self.endOfInputIndex = self.symbolToIndex['ENDOFINPUT']

        keys = jax.random.split(key, 9)
        scale = 1.0 / float(np.sqrt(H))
        u = lambda k, shape: jax.random.uniform(k, shape, jnp.float32, -scale, scale)

        # nn.Embedding(len(lexicon), H)
        self.embedding = jax.random.normal(keys[0], (len(lexicon), H), jnp.float32)
        # nn.GRU(H, H, 1, bidirectional=True): per direction W_ih(3H,H), W_hh(3H,H),
        # b_ih(3H,), b_hh(3H,); gate order r,z,n.
        W_ih = [u(keys[1], (3 * H, H)), u(keys[5], (3 * H, H))]
        W_hh = [u(keys[2], (3 * H, H)), u(keys[6], (3 * H, H))]
        b_ih = [u(keys[3], (3 * H,)), u(keys[7], (3 * H,))]
        b_hh = [u(keys[4], (3 * H,)), u(keys[8], (3 * H,))]
        self._raw = (W_ih, W_hh, b_ih, b_hh)          # kept for the pure-JAX reference

        # --- pack weights into lane-padded blocks (host-side, numpy) ---------
        # columns: gate g occupies lanes [g*128, (g+1)*128); within a block,
        # fwd direction uses lanes [0, H), bwd uses [H, 2H); rest is zero.
        P = LANE
        Wih_packed = np.zeros((H, WCOLS), np.float32)
        Whh_packed = np.zeros((P, WCOLS), np.float32)
        bias_x = np.zeros((WCOLS,), np.float32)
        for d in range(2):
            Wi = np.asarray(W_ih[d]); Wh = np.asarray(W_hh[d])
            bi = np.asarray(b_ih[d]); bh = np.asarray(b_hh[d])
            for g in range(NGATE):
                colo = g * P + d * H
                Wih_packed[:, colo:colo + H] = Wi[g * H:(g + 1) * H, :].T
                Whh_packed[d * H:(d + 1) * H, colo:colo + H] = Wh[g * H:(g + 1) * H, :].T
                b = bi[g * H:(g + 1) * H]
                if g < 2:                              # fold b_hh for r and z gates
                    b = b + bh[g * H:(g + 1) * H]
                bias_x[colo:colo + H] = b
            # fold the n-gate hidden bias into the constant-1 bias lane of h
            Whh_packed[BIAS_LANE, 2 * P + d * H:2 * P + (d + 1) * H] = bh[2 * H:3 * H]

        # padding invariants: lanes above the bias lane never feed any gate, and
        # the bias lane only feeds the n-gate block (otherwise h padding lanes
        # would silently corrupt the recurrence).
        assert np.abs(Whh_packed[BIAS_LANE + 1:, :]).sum() == 0.0
        assert np.abs(Whh_packed[BIAS_LANE, :2 * P]).sum() == 0.0

        # Fold embedding lookup + input projection + biases into one table:
        # E_proj[tok] == embedding[tok] @ W_ih^T (+ b_ih, + b_hh for r/z), both dirs.
        E_proj = np.asarray(self.embedding) @ Wih_packed + bias_x[None, :]
        E_proj[:, P + BIAS_LANE] += BIG               # pin bias lane's z gate to 1
        self.E_proj = jnp.asarray(E_proj)
        self.whh = jnp.asarray(Whh_packed)

    def tokenize(self, x):
        return x

    def packExamples(self, examples):
        es, sizes = [], []
        for xs, y in examples:
            e = [self.startingIndex]
            for x in xs:
                for s in x:
                    e.append(self.symbolToIndex[s])
                e.append(self.endOfInputIndex)
            e.append(self.startOfOutputIndex)
            for s in y:
                e.append(self.symbolToIndex[s])
            e.append(self.endingIndex)
            if es:
                assert len(e) <= len(es[-1])
            es.append(e)
            sizes.append(len(e))
        m = max(sizes)
        es = [e + [self.endingIndex] * (m - len(e)) for e in es]
        return np.asarray(es, dtype=np.int32), sizes          # (B, T), python list

    def forward(self, examples):
        tokenized = self.tokenize(examples)
        if not tokenized:
            return None
        tokenized = sorted(
            tokenized,
            key=lambda xs_y: sum(len(z) + 1 for z in xs_y[0]) + len(xs_y[1]),
            reverse=True)
        tokens, sizes = self.packExamples(tokenized)
        B, T = tokens.shape

        # Bucket T / B so the jitted prep + unrolled kernel compile once per
        # bucket instead of once per distinct packed length / example count.
        T_pad = max(8, pl.next_power_of_2(int(T)))
        B_pad = max(8, -(-B // 8) * 8)
        tok_p = np.full((B_pad, T_pad), self.endingIndex, np.int32)
        tok_p[:B, :T] = tokens
        sz_p = np.zeros((B_pad,), np.int32)
        sz_p[:B] = np.asarray(sizes, np.int32)        # padded rows: size 0 -> held
        nvalid = np.array([B], np.int32)

        return _encode(self.E_proj, self.whh, tok_p, sz_p, nvalid)

    # Pure-JAX reference (straightforward PyTorch GRU math) for self-checking.
    def reference_forward(self, examples):
        tokenized = sorted(
            self.tokenize(examples),
            key=lambda xs_y: sum(len(z) + 1 for z in xs_y[0]) + len(xs_y[1]),
            reverse=True)
        tokens, sizes = self.packExamples(tokenized)
        emb = jnp.take(self.embedding, jnp.asarray(tokens), axis=0)   # (B, T, H)
        B, T, Hd = emb.shape
        sizes_a = jnp.asarray(sizes, jnp.int32)[:, None]
        W_ih, W_hh, b_ih, b_hh = self._raw
        finals = []
        for d in range(2):
            h = jnp.zeros((B, Hd), jnp.float32)
            order = range(T) if d == 0 else range(T - 1, -1, -1)
            for t in order:
                x_t = emb[:, t, :]
                gi = jnp.dot(x_t, W_ih[d].T, precision='highest') + b_ih[d]
                gh = jnp.dot(h, W_hh[d].T, precision='highest') + b_hh[d]
                r = jax.nn.sigmoid(gi[:, :Hd] + gh[:, :Hd])
                z = jax.nn.sigmoid(gi[:, Hd:2 * Hd] + gh[:, Hd:2 * Hd])
                n = jnp.tanh(gi[:, 2 * Hd:] + r * gh[:, 2 * Hd:])
                h_new = (1.0 - z) * n + z * h
                h = jnp.where(sizes_a > t, h_new, h)
            finals.append(h)
        return jnp.max(finals[0] + finals[1], axis=0)


if __name__ == "__main__":
    key = jax.random.PRNGKey(0)
    base_lexicon = ['a', 'b', 'c', 'd', 'e']
    fe = RecurrentFeatureExtractorJAX(base_lexicon, H=H, key=key)

    # Deterministic synthetic (inputs, output) examples built from PRNGKey(0).
    def rand_seq(k, n):
        idx = jax.random.randint(k, (n,), 0, len(base_lexicon))
        return [base_lexicon[int(i)] for i in idx]

    ks = jax.random.split(jax.random.PRNGKey(0), 8)
    examples = [
        ((rand_seq(ks[0], 3), rand_seq(ks[1], 2)), rand_seq(ks[2], 4)),  # packed len 14
        ((rand_seq(ks[3], 2), rand_seq(ks[4], 2)), rand_seq(ks[5], 3)),  # packed len 12
        ((rand_seq(ks[6], 1),), rand_seq(ks[7], 2)),                     # packed len 7
    ]

    e = fe.forward(examples)
    e = jax.block_until_ready(e)
    assert e.shape == (H,), e.shape
    assert bool(jnp.all(jnp.isfinite(e)))

    # numerical check against the plain-JAX bidirectional GRU reference
    e_ref = jax.block_until_ready(fe.reference_forward(examples))
    max_err = float(jnp.max(jnp.abs(e - e_ref)))
    assert max_err < 5e-2, f"kernel/reference mismatch, max abs err = {max_err}"

    # second call with a different example count / packed length in the same
    # (T, B) bucket: exercises padding + the jit cache (no recompile).
    e2 = jax.block_until_ready(fe.forward(examples[:2]))
    e2_ref = jax.block_until_ready(fe.reference_forward(examples[:2]))
    assert float(jnp.max(jnp.abs(e2 - e2_ref))) < 5e-2

    print("KERNEL_OK")
</pallas_src>

<mosaic_0001>
module attributes {stable_mosaic.version = 11 : i64} {
  func.func @bigru_kernel(%arg0: memref<16x8x384xf32, #tpu.memory_space<vmem>>, %arg1: memref<128x384xf32, #tpu.memory_space<vmem>>, %arg2: memref<1xi32, #tpu.memory_space<smem>>, %arg3: memref<1x32xf32, #tpu.memory_space<vmem>>) attributes {dimension_semantics = [], scalar_prefetch = 0 : i64, scratch_operands = 0 : i64, tpu.core_type = #tpu.core_type<tc>} {
    %c0 = arith.constant 0 : index
    %c0_0 = arith.constant 0 : index
    %0 = vector.load %arg1[%c0, %c0_0] : memref<128x384xf32, #tpu.memory_space<vmem>>, vector<128x384xf32>
    %1 = tpu.iota {dimensions = array<i32: 1>} : vector<8x128xi32>
    %c64_i32 = arith.constant 64 : i32
    %2 = vector.broadcast %c64_i32 : i32 to vector<8x128xi32>
    %3 = arith.cmpi eq, %1, %2 : vector<8x128xi32>
    %cst = arith.constant 1.000000e+00 : f32
    %cst_1 = arith.constant 0.000000e+00 : f32
    %4 = vector.broadcast %cst : f32 to vector<8x128xf32>
    %5 = vector.broadcast %cst_1 : f32 to vector<8x128xf32>
    %6 = arith.select %3, %4, %5 : vector<8x128xi1>, vector<8x128xf32>
    %c0_i32 = arith.constant 0 : i32
    %7 = arith.index_cast %c0_i32 : i32 to index
    %c0_2 = arith.constant 0 : index
    %c0_3 = arith.constant 0 : index
    %8 = vector.load %arg0[%7, %c0_2, %c0_3] : memref<16x8x384xf32, #tpu.memory_space<vmem>>, vector<1x8x384xf32>
    %9 = vector.shape_cast %8 : vector<1x8x384xf32> to vector<8x384xf32>
    %cst_4 = arith.constant dense<0.000000e+00> : vector<8x384xf32>
    %10 = tpu.matmul %6, %0, %cst_4 {dimension_numbers = #tpu.dot_dimension_numbers<[1], [0], [0], [1], [0, 0, 1, 1], [], []>} : vector<8x128xf32>, vector<128x384xf32>, vector<8x384xf32> -> vector<8x384xf32>
    %11 = vector.extract_strided_slice %9 {offsets = [0, 0], sizes = [8, 128], strides = [1, 1]} : vector<8x384xf32> to vector<8x128xf32>
    %12 = vector.extract_strided_slice %10 {offsets = [0, 0], sizes = [8, 128], strides = [1, 1]} : vector<8x384xf32> to vector<8x128xf32>
    %13 = arith.addf %11, %12 : vector<8x128xf32>
    %14 = arith.negf %13 : vector<8x128xf32>
    %15 = math.exp %14 : vector<8x128xf32>
    %cst_5 = arith.constant 1.000000e+00 : f32
    %16 = vector.broadcast %cst_5 : f32 to vector<8x128xf32>
    %17 = arith.addf %16, %15 : vector<8x128xf32>
    %18 = arith.divf %16, %17 : vector<8x128xf32>
    %19 = vector.extract_strided_slice %9 {offsets = [0, 128], sizes = [8, 128], strides = [1, 1]} : vector<8x384xf32> to vector<8x128xf32>
    %20 = vector.extract_strided_slice %10 {offsets = [0, 128], sizes = [8, 128], strides = [1, 1]} : vector<8x384xf32> to vector<8x128xf32>
    %21 = arith.addf %19, %20 : vector<8x128xf32>
    %22 = arith.negf %21 : vector<8x128xf32>
    %23 = math.exp %22 : vector<8x128xf32>
    %cst_6 = arith.constant 1.000000e+00 : f32
    %24 = vector.broadcast %cst_6 : f32 to vector<8x128xf32>
    %25 = arith.addf %24, %23 : vector<8x128xf32>
    %26 = arith.divf %24, %25 : vector<8x128xf32>
    %27 = vector.extract_strided_slice %9 {offsets = [0, 256], sizes = [8, 128], strides = [1, 1]} : vector<8x384xf32> to vector<8x128xf32>
    %28 = vector.extract_strided_slice %10 {offsets = [0, 256], sizes = [8, 128], strides = [1, 1]} : vector<8x384xf32> to vector<8x128xf32>
    %29 = arith.mulf %18, %28 : vector<8x128xf32>
    %30 = arith.addf %27, %29 : vector<8x128xf32>
    %31 = math.tanh %30 : vector<8x128xf32>
    %cst_7 = arith.constant 1.000000e+00 : f32
    %32 = vector.broadcast %cst_7 : f32 to vector<8x128xf32>
    %33 = arith.subf %32, %26 : vector<8x128xf32>
    %34 = arith.mulf %33, %31 : vector<8x128xf32>
    %35 = arith.mulf %26, %6 : vector<8x128xf32>
    %36 = arith.addf %34, %35 : vector<8x128xf32>
    %c1_i32 = arith.constant 1 : i32
    %37 = arith.index_cast %c1_i32 : i32 to index
    %c0_8 = arith.constant 0 : index
    %c0_9 = arith.constant 0 : index
    %38 = vector.load %arg0[%37, %c0_8, %c0_9] : memref<16x8x384xf32, #tpu.memory_space<vmem>>, vector<1x8x384xf32>
    %39 = vector.shape_cast %38 : vector<1x8x384xf32> to vector<8x384xf32>
    %cst_10 = arith.constant dense<0.000000e+00> : vector<8x384xf32>
    %40 = tpu.matmul %36, %0, %cst_10 {dimension_numbers = #tpu.dot_dimension_numbers<[1], [0], [0], [1], [0, 0, 1, 1], [], []>} : vector<8x128xf32>, vector<128x384xf32>, vector<8x384xf32> -> vector<8x384xf32>
    %41 = vector.extract_strided_slice %39 {offsets = [0, 0], sizes = [8, 128], strides = [1, 1]} : vector<8x384xf32> to vector<8x128xf32>
    %42 = vector.extract_strided_slice %40 {offsets = [0, 0], sizes = [8, 128], strides = [1, 1]} : vector<8x384xf32> to vector<8x128xf32>
    %43 = arith.addf %41, %42 : vector<8x128xf32>
    %44 = arith.negf %43 : vector<8x128xf32>
    %45 = math.exp %44 : vector<8x128xf32>
    %cst_11 = arith.constant 1.000000e+00 : f32
    %46 = vector.broadcast %cst_11 : f32 to vector<8x128xf32>
    %47 = arith.addf %46, %45 : vector<8x128xf32>
    %48 = arith.divf %46, %47 : vector<8x128xf32>
    %49 = vector.extract_strided_slice %39 {offsets = [0, 128], sizes = [8, 128], strides = [1, 1]} : vector<8x384xf32> to vector<8x128xf32>
    %50 = vector.extract_strided_slice %40 {offsets = [0, 128], sizes = [8, 128], strides = [1, 1]} : vector<8x384xf32> to vector<8x128xf32>
    %51 = arith.addf %49, %50 : vector<8x128xf32>
    %52 = arith.negf %51 : vector<8x128xf32>
    %53 = math.exp %52 : vector<8x128xf32>
    %cst_12 = arith.constant 1.000000e+00 : f32
    %54 = vector.broadcast %cst_12 : f32 to vector<8x128xf32>
    %55 = arith.addf %54, %53 : vector<8x128xf32>
    %56 = arith.divf %54, %55 : vector<8x128xf32>
    %57 = vector.extract_strided_slice %39 {offsets = [0, 256], sizes = [8, 128], strides = [1, 1]} : vector<8x384xf32> to vector<8x128xf32>
    %58 = vector.extract_strided_slice %40 {offsets = [0, 256], sizes = [8, 128], strides = [1, 1]} : vector<8x384xf32> to vector<8x128xf32>
    %59 = arith.mulf %48, %58 : vector<8x128xf32>
    %60 = arith.addf %57, %59 : vector<8x128xf32>
    %61 = math.tanh %60 : vector<8x128xf32>
    %cst_13 = arith.constant 1.000000e+00 : f32
    %62 = vector.broadcast %cst_13 : f32 to vector<8x128xf32>
    %63 = arith.subf %62, %56 : vector<8x128xf32>
    %64 = arith.mulf %63, %61 : vector<8x128xf32>
    %65 = arith.mulf %56, %36 : vector<8x128xf32>
    %66 = arith.addf %64, %65 : vector<8x128xf32>
    %c2_i32 = arith.constant 2 : i32
    %67 = arith.index_cast %c2_i32 : i32 to index
    %c0_14 = arith.constant 0 : index
    %c0_15 = arith.constant 0 : index
    %68 = vector.load %arg0[%67, %c0_14, %c0_15] : memref<16x8x384xf32, #tpu.memory_space<vmem>>, vector<1x8x384xf32>
    %69 = vector.shape_cast %68 : vector<1x8x384xf32> to vector<8x384xf32>
    %cst_16 = arith.constant dense<0.000000e+00> : vector<8x384xf32>
    %70 = tpu.matmul %66, %0, %cst_16 {dimension_numbers = #tpu.dot_dimension_numbers<[1], [0], [0], [1], [0, 0, 1, 1], [], []>} : vector<8x128xf32>, vector<128x384xf32>, vector<8x384xf32> -> vector<8x384xf32>
    %71 = vector.extract_strided_slice %69 {offsets = [0, 0], sizes = [8, 128], strides = [1, 1]} : vector<8x384xf32> to vector<8x128xf32>
    %72 = vector.extract_strided_slice %70 {offsets = [0, 0], sizes = [8, 128], strides = [1, 1]} : vector<8x384xf32> to vector<8x128xf32>
    %73 = arith.addf %71, %72 : vector<8x128xf32>
    %74 = arith.negf %73 : vector<8x128xf32>
    %75 = math.exp %74 : vector<8x128xf32>
    %cst_17 = arith.constant 1.000000e+00 : f32
    %76 = vector.broadcast %cst_17 : f32 to vector<8x128xf32>
    %77 = arith.addf %76, %75 : vector<8x128xf32>
    %78 = arith.divf %76, %77 : vector<8x128xf32>
    %79 = vector.extract_strided_slice %69 {offsets = [0, 128], sizes = [8, 128], strides = [1, 1]} : vector<8x384xf32> to vector<8x128xf32>
    %80 = vector.extract_strided_slice %70 {offsets = [0, 128], sizes = [8, 128], strides = [1, 1]} : vector<8x384xf32> to vector<8x128xf32>
    %81 = arith.addf %79, %80 : vector<8x128xf32>
    %82 = arith.negf %81 : vector<8x128xf32>
    %83 = math.exp %82 : vector<8x128xf32>
    %cst_18 = arith.constant 1.000000e+00 : f32
    %84 = vector.broadcast %cst_18 : f32 to vector<8x128xf32>
    %85 = arith.addf %84, %83 : vector<8x128xf32>
    %86 = arith.divf %84, %85 : vector<8x128xf32>
    %87 = vector.extract_strided_slice %69 {offsets = [0, 256], sizes = [8, 128], strides = [1, 1]} : vector<8x384xf32> to vector<8x128xf32>
    %88 = vector.extract_strided_slice %70 {offsets = [0, 256], sizes = [8, 128], strides = [1, 1]} : vector<8x384xf32> to vector<8x128xf32>
    %89 = arith.mulf %78, %88 : vector<8x128xf32>
    %90 = arith.addf %87, %89 : vector<8x128xf32>
    %91 = math.tanh %90 : vector<8x128xf32>
    %cst_19 = arith.constant 1.000000e+00 : f32
    %92 = vector.broadcast %cst_19 : f32 to vector<8x128xf32>
    %93 = arith.subf %92, %86 : vector<8x128xf32>
    %94 = arith.mulf %93, %91 : vector<8x128xf32>
    %95 = arith.mulf %86, %66 : vector<8x128xf32>
    %96 = arith.addf %94, %95 : vector<8x128xf32>
    %c3_i32 = arith.constant 3 : i32
    %97 = arith.index_cast %c3_i32 : i32 to index
    %c0_20 = arith.constant 0 : index
    %c0_21 = arith.constant 0 : index
    %98 = vector.load %arg0[%97, %c0_20, %c0_21] : memref<16x8x384xf32, #tpu.memory_space<vmem>>, vector<1x8x384xf32>
    %99 = vector.shape_cast %98 : vector<1x8x384xf32> to vector<8x384xf32>
    %cst_22 = arith.constant dense<0.000000e+00> : vector<8x384xf32>
    %100 = tpu.matmul %96, %0, %cst_22 {dimension_numbers = #tpu.dot_dimension_numbers<[1], [0], [0], [1], [0, 0, 1, 1], [], []>} : vector<8x128xf32>, vector<128x384xf32>, vector<8x384xf32> -> vector<8x384xf32>
    %101 = vector.extract_strided_slice %99 {offsets = [0, 0], sizes = [8, 128], strides = [1, 1]} : vector<8x384xf32> to vector<8x128xf32>
    %102 = vector.extract_strided_slice %100 {offsets = [0, 0], sizes = [8, 128], strides = [1, 1]} : vector<8x384xf32> to vector<8x128xf32>
    %103 = arith.addf %101, %102 : vector<8x128xf32>
    %104 = arith.negf %103 : vector<8x128xf32>
    %105 = math.exp %104 : vector<8x128xf32>
    %cst_23 = arith.constant 1.000000e+00 : f32
    %106 = vector.broadcast %cst_23 : f32 to vector<8x128xf32>
    %107 = arith.addf %106, %105 : vector<8x128xf32>
    %108 = arith.divf %106, %107 : vector<8x128xf32>
    %109 = vector.extract_strided_slice %99 {offsets = [0, 128], sizes = [8, 128], strides = [1, 1]} : vector<8x384xf32> to vector<8x128xf32>
    %110 = vector.extract_strided_slice %100 {offsets = [0, 128], sizes = [8, 128], strides = [1, 1]} : vector<8x384xf32> to vector<8x128xf32>
    %111 = arith.addf %109, %110 : vector<8x128xf32>
    %112 = arith.negf %111 : vector<8x128xf32>
    %113 = math.exp %112 : vector<8x128xf32>
    %cst_24 = arith.constant 1.000000e+00 : f32
    %114 = vector.broadcast %cst_24 : f32 to vector<8x128xf32>
    %115 = arith.addf %114, %113 : vector<8x128xf32>
    %116 = arith.divf %114, %115 : vector<8x128xf32>
    %117 = vector.extract_strided_slice %99 {offsets = [0, 256], sizes = [8, 128], strides = [1, 1]} : vector<8x384xf32> to vector<8x128xf32>
    %118 = vector.extract_strided_slice %100 {offsets = [0, 256], sizes = [8, 128], strides = [1, 1]} : vector<8x384xf32> to vector<8x128xf32>
    %119 = arith.mulf %108, %118 : vector<8x128xf32>
    %120 = arith.addf %117, %119 : vector<8x128xf32>
    %121 = math.tanh %120 : vector<8x128xf32>
    %cst_25 = arith.constant 1.000000e+00 : f32
    %122 = vector.broadcast %cst_25 : f32 to vector<8x128xf32>
    %123 = arith.subf %122, %116 : vector<8x128xf32>
    %124 = arith.mulf %123, %121 : vector<8x128xf32>
    %125 = arith.mulf %116, %96 : vector<8x128xf32>
    %126 = arith.addf %124, %125 : vector<8x128xf32>
    %c4_i32 = arith.constant 4 : i32
    %127 = arith.index_cast %c4_i32 : i32 to index
    %c0_26 = arith.constant 0 : index
    %c0_27 = arith.constant 0 : index
    %128 = vector.load %arg0[%127, %c0_26, %c0_27] : memref<16x8x384xf32, #tpu.memory_space<vmem>>, vector<1x8x384xf32>
    %129 = vector.shape_cast %128 : vector<1x8x384xf32> to vector<8x384xf32>
    %cst_28 = arith.constant dense<0.000000e+00> : vector<8x384xf32>
    %130 = tpu.matmul %126, %0, %cst_28 {dimension_numbers = #tpu.dot_dimension_numbers<[1], [0], [0], [1], [0, 0, 1, 1], [], []>} : vector<8x128xf32>, vector<128x384xf32>, vector<8x384xf32> -> vector<8x384xf32>
    %131 = vector.extract_strided_slice %129 {offsets = [0, 0], sizes = [8, 128], strides = [1, 1]} : vector<8x384xf32> to vector<8x128xf32>
    %132 = vector.extract_strided_slice %130 {offsets = [0, 0], sizes = [8, 128], strides = [1, 1]} : vector<8x384xf32> to vector<8x128xf32>
    %133 = arith.addf %131, %132 : vector<8x128xf32>
    %134 = arith.negf %133 : vector<8x128xf32>
    %135 = math.exp %134 : vector<8x128xf32>
    %cst_29 = arith.constant 1.000000e+00 : f32
    %136 = vector.broadcast %cst_29 : f32 to vector<8x128xf32>
    %137 = arith.addf %136, %135 : vector<8x128xf32>
    %138 = arith.divf %136, %137 : vector<8x128xf32>
    %139 = vector.extract_strided_slice %129 {offsets = [0, 128], sizes = [8, 128], strides = [1, 1]} : vector<8x384xf32> to vector<8x128xf32>
    %140 = vector.extract_strided_slice %130 {offsets = [0, 128], sizes = [8, 128], strides = [1, 1]} : vector<8x384xf32> to vector<8x128xf32>
    %141 = arith.addf %139, %140 : vector<8x128xf32>
    %142 = arith.negf %141 : vector<8x128xf32>
    %143 = math.exp %142 : vector<8x128xf32>
    %cst_30 = arith.constant 1.000000e+00 : f32
    %144 = vector.broadcast %cst_30 : f32 to vector<8x128xf32>
    %145 = arith.addf %144, %143 : vector<8x128xf32>
    %146 = arith.divf %144, %145 : vector<8x128xf32>
    %147 = vector.extract_strided_slice %129 {offsets = [0, 256], sizes = [8, 128], strides = [1, 1]} : vector<8x384xf32> to vector<8x128xf32>
    %148 = vector.extract_strided_slice %130 {offsets = [0, 256], sizes = [8, 128], strides = [1, 1]} : vector<8x384xf32> to vector<8x128xf32>
    %149 = arith.mulf %138, %148 : vector<8x128xf32>
    %150 = arith.addf %147, %149 : vector<8x128xf32>
    %151 = math.tanh %150 : vector<8x128xf32>
    %cst_31 = arith.constant 1.000000e+00 : f32
    %152 = vector.broadcast %cst_31 : f32 to vector<8x128xf32>
    %153 = arith.subf %152, %146 : vector<8x128xf32>
    %154 = arith.mulf %153, %151 : vector<8x128xf32>
    %155 = arith.mulf %146, %126 : vector<8x128xf32>
    %156 = arith.addf %154, %155 : vector<8x128xf32>
    %c5_i32 = arith.constant 5 : i32
    %157 = arith.index_cast %c5_i32 : i32 to index
    %c0_32 = arith.constant 0 : index
    %c0_33 = arith.constant 0 : index
    %158 = vector.load %arg0[%157, %c0_32, %c0_33] : memref<16x8x384xf32, #tpu.memory_space<vmem>>, vector<1x8x384xf32>
    %159 = vector.shape_cast %158 : vector<1x8x384xf32> to vector<8x384xf32>
    %cst_34 = arith.constant dense<0.000000e+00> : vector<8x384xf32>
    %160 = tpu.matmul %156, %0, %cst_34 {dimension_numbers = #tpu.dot_dimension_numbers<[1], [0], [0], [1], [0, 0, 1, 1], [], []>} : vector<8x128xf32>, vector<128x384xf32>, vector<8x384xf32> -> vector<8x384xf32>
    %161 = vector.extract_strided_slice %159 {offsets = [0, 0], sizes = [8, 128], strides = [1, 1]} : vector<8x384xf32> to vector<8x128xf32>
    %162 = vector.extract_strided_slice %160 {offsets = [0, 0], sizes = [8, 128], strides = [1, 1]} : vector<8x384xf32> to vector<8x128xf32>
    %163 = arith.addf %161, %162 : vector<8x128xf32>
    %164 = arith.negf %163 : vector<8x128xf32>
    %165 = math.exp %164 : vector<8x128xf32>
    %cst_35 = arith.constant 1.000000e+00 : f32
    %166 = vector.broadcast %cst_35 : f32 to vector<8x128xf32>
    %167 = arith.addf %166, %165 : vector<8x128xf32>
    %168 = arith.divf %166, %167 : vector<8x128xf32>
    %169 = vector.extract_strided_slice %159 {offsets = [0, 128], sizes = [8, 128], strides = [1, 1]} : vector<8x384xf32> to vector<8x128xf32>
    %170 = vector.extract_strided_slice %160 {offsets = [0, 128], sizes = [8, 128], strides = [1, 1]} : vector<8x384xf32> to vector<8x128xf32>
    %171 = arith.addf %169, %170 : vector<8x128xf32>
    %172 = arith.negf %171 : vector<8x128xf32>
    %173 = math.exp %172 : vector<8x128xf32>
    %cst_36 = arith.constant 1.000000e+00 : f32
    %174 = vector.broadcast %cst_36 : f32 to vector<8x128xf32>
    %175 = arith.addf %174, %173 : vector<8x128xf32>
    %176 = arith.divf %174, %175 : vector<8x128xf32>
    %177 = vector.extract_strided_slice %159 {offsets = [0, 256], sizes = [8, 128], strides = [1, 1]} : vector<8x384xf32> to vector<8x128xf32>
    %178 = vector.extract_strided_slice %160 {offsets = [0, 256], sizes = [8, 128], strides = [1, 1]} : vector<8x384xf32> to vector<8x128xf32>
    %179 = arith.mulf %168, %178 : vector<8x128xf32>
    %180 = arith.addf %177, %179 : vector<8x128xf32>
    %181 = math.tanh %180 : vector<8x128xf32>
    %cst_37 = arith.constant 1.000000e+00 : f32
    %182 = vector.broadcast %cst_37 : f32 to vector<8x128xf32>
    %183 = arith.subf %182, %176 : vector<8x128xf32>
    %184 = arith.mulf %183, %181 : vector<8x128xf32>
    %185 = arith.mulf %176, %156 : vector<8x128xf32>
    %186 = arith.addf %184, %185 : vector<8x128xf32>
    %c6_i32 = arith.constant 6 : i32
    %187 = arith.index_cast %c6_i32 : i32 to index
    %c0_38 = arith.constant 0 : index
    %c0_39 = arith.constant 0 : index
    %188 = vector.load %arg0[%187, %c0_38, %c0_39] : memref<16x8x384xf32, #tpu.memory_space<vmem>>, vector<1x8x384xf32>
    %189 = vector.shape_cast %188 : vector<1x8x384xf32> to vector<8x384xf32>
    %cst_40 = arith.constant dense<0.000000e+00> : vector<8x384xf32>
    %190 = tpu.matmul %186, %0, %cst_40 {dimension_numbers = #tpu.dot_dimension_numbers<[1], [0], [0], [1], [0, 0, 1, 1], [], []>} : vector<8x128xf32>, vector<128x384xf32>, vector<8x384xf32> -> vector<8x384xf32>
    %191 = vector.extract_strided_slice %189 {offsets = [0, 0], sizes = [8, 128], strides = [1, 1]} : vector<8x384xf32> to vector<8x128xf32>
    %192 = vector.extract_strided_slice %190 {offsets = [0, 0], sizes = [8, 128], strides = [1, 1]} : vector<8x384xf32> to vector<8x128xf32>
    %193 = arith.addf %191, %192 : vector<8x128xf32>
    %194 = arith.negf %193 : vector<8x128xf32>
    %195 = math.exp %194 : vector<8x128xf32>
    %cst_41 = arith.constant 1.000000e+00 : f32
    %196 = vector.broadcast %cst_41 : f32 to vector<8x128xf32>
    %197 = arith.addf %196, %195 : vector<8x128xf32>
    %198 = arith.divf %196, %197 : vector<8x128xf32>
    %199 = vector.extract_strided_slice %189 {offsets = [0, 128], sizes = [8, 128], strides = [1, 1]} : vector<8x384xf32> to vector<8x128xf32>
    %200 = vector.extract_strided_slice %190 {offsets = [0, 128], sizes = [8, 128], strides = [1, 1]} : vector<8x384xf32> to vector<8x128xf32>
    %201 = arith.addf %199, %200 : vector<8x128xf32>
    %202 = arith.negf %201 : vector<8x128xf32>
    %203 = math.exp %202 : vector<8x128xf32>
    %cst_42 = arith.constant 1.000000e+00 : f32
    %204 = vector.broadcast %cst_42 : f32 to vector<8x128xf32>
    %205 = arith.addf %204, %203 : vector<8x128xf32>
    %206 = arith.divf %204, %205 : vector<8x128xf32>
    %207 = vector.extract_strided_slice %189 {offsets = [0, 256], sizes = [8, 128], strides = [1, 1]} : vector<8x384xf32> to vector<8x128xf32>
    %208 = vector.extract_strided_slice %190 {offsets = [0, 256], sizes = [8, 128], strides = [1, 1]} : vector<8x384xf32> to vector<8x128xf32>
    %209 = arith.mulf %198, %208 : vector<8x128xf32>
    %210 = arith.addf %207, %209 : vector<8x128xf32>
    %211 = math.tanh %210 : vector<8x128xf32>
    %cst_43 = arith.constant 1.000000e+00 : f32
    %212 = vector.broadcast %cst_43 : f32 to vector<8x128xf32>
    %213 = arith.subf %212, %206 : vector<8x128xf32>
    %214 = arith.mulf %213, %211 : vector<8x128xf32>
    %215 = arith.mulf %206, %186 : vector<8x128xf32>
    %216 = arith.addf %214, %215 : vector<8x128xf32>
    %c7_i32 = arith.constant 7 : i32
    %217 = arith.index_cast %c7_i32 : i32 to index
    %c0_44 = arith.constant 0 : index
    %c0_45 = arith.constant 0 : index
    %218 = vector.load %arg0[%217, %c0_44, %c0_45] : memref<16x8x384xf32, #tpu.memory_space<vmem>>, vector<1x8x384xf32>
    %219 = vector.shape_cast %218 : vector<1x8x384xf32> to vector<8x384xf32>
    %cst_46 = arith.constant dense<0.000000e+00> : vector<8x384xf32>
    %220 = tpu.matmul %216, %0, %cst_46 {dimension_numbers = #tpu.dot_dimension_numbers<[1], [0], [0], [1], [0, 0, 1, 1], [], []>} : vector<8x128xf32>, vector<128x384xf32>, vector<8x384xf32> -> vector<8x384xf32>
    %221 = vector.extract_strided_slice %219 {offsets = [0, 0], sizes = [8, 128], strides = [1, 1]} : vector<8x384xf32> to vector<8x128xf32>
    %222 = vector.extract_strided_slice %220 {offsets = [0, 0], sizes = [8, 128], strides = [1, 1]} : vector<8x384xf32> to vector<8x128xf32>
    %223 = arith.addf %221, %222 : vector<8x128xf32>
    %224 = arith.negf %223 : vector<8x128xf32>
    %225 = math.exp %224 : vector<8x128xf32>
    %cst_47 = arith.constant 1.000000e+00 : f32
    %226 = vector.broadcast %cst_47 : f32 to vector<8x128xf32>
    %227 = arith.addf %226, %225 : vector<8x128xf32>
    %228 = arith.divf %226, %227 : vector<8x128xf32>
    %229 = vector.extract_strided_slice %219 {offsets = [0, 128], sizes = [8, 128], strides = [1, 1]} : vector<8x384xf32> to vector<8x128xf32>
    %230 = vector.extract_strided_slice %220 {offsets = [0, 128], sizes = [8, 128], strides = [1, 1]} : vector<8x384xf32> to vector<8x128xf32>
    %231 = arith.addf %229, %230 : vector<8x128xf32>
    %232 = arith.negf %231 : vector<8x128xf32>
    %233 = math.exp %232 : vector<8x128xf32>
    %cst_48 = arith.constant 1.000000e+00 : f32
    %234 = vector.broadcast %cst_48 : f32 to vector<8x128xf32>
    %235 = arith.addf %234, %233 : vector<8x128xf32>
    %236 = arith.divf %234, %235 : vector<8x128xf32>
    %237 = vector.extract_strided_slice %219 {offsets = [0, 256], sizes = [8, 128], strides = [1, 1]} : vector<8x384xf32> to vector<8x128xf32>
    %238 = vector.extract_strided_slice %220 {offsets = [0, 256], sizes = [8, 128], strides = [1, 1]} : vector<8x384xf32> to vector<8x128xf32>
    %239 = arith.mulf %228, %238 : vector<8x128xf32>
    %240 = arith.addf %237, %239 : vector<8x128xf32>
    %241 = math.tanh %240 : vector<8x128xf32>
    %cst_49 = arith.constant 1.000000e+00 : f32
    %242 = vector.broadcast %cst_49 : f32 to vector<8x128xf32>
    %243 = arith.subf %242, %236 : vector<8x128xf32>
    %244 = arith.mulf %243, %241 : vector<8x128xf32>
    %245 = arith.mulf %236, %216 : vector<8x128xf32>
    %246 = arith.addf %244, %245 : vector<8x128xf32>
    %c8_i32 = arith.constant 8 : i32
    %247 = arith.index_cast %c8_i32 : i32 to index
    %c0_50 = arith.constant 0 : index
    %c0_51 = arith.constant 0 : index
    %248 = vector.load %arg0[%247, %c0_50, %c0_51] : memref<16x8x384xf32, #tpu.memory_space<vmem>>, vector<1x8x384xf32>
    %249 = vector.shape_cast %248 : vector<1x8x384xf32> to vector<8x384xf32>
    %cst_52 = arith.constant dense<0.000000e+00> : vector<8x384xf32>
    %250 = tpu.matmul %246, %0, %cst_52 {dimension_numbers = #tpu.dot_dimension_numbers<[1], [0], [0], [1], [0, 0, 1, 1], [], []>} : vector<8x128xf32>, vector<128x384xf32>, vector<8x384xf32> -> vector<8x384xf32>
    %251 = vector.extract_strided_slice %249 {offsets = [0, 0], sizes = [8, 128], strides = [1, 1]} : vector<8x384xf32> to vector<8x128xf32>
    %252 = vector.extract_strided_slice %250 {offsets = [0, 0], sizes = [8, 128], strides = [1, 1]} : vector<8x384xf32> to vector<8x128xf32>
    %253 = arith.addf %251, %252 : vector<8x128xf32>
    %254 = arith.negf %253 : vector<8x128xf32>
    %255 = math.exp %254 : vector<8x128xf32>
    %cst_53 = arith.constant 1.000000e+00 : f32
    %256 = vector.broadcast %cst_53 : f32 to vector<8x128xf32>
    %257 = arith.addf %256, %255 : vector<8x128xf32>
    %258 = arith.divf %256, %257 : vector<8x128xf32>
    %259 = vector.extract_strided_slice %249 {offsets = [0, 128], sizes = [8, 128], strides = [1, 1]} : vector<8x384xf32> to vector<8x128xf32>
    %260 = vector.extract_strided_slice %250 {offsets = [0, 128], sizes = [8, 128], strides = [1, 1]} : vector<8x384xf32> to vector<8x128xf32>
    %261 = arith.addf %259, %260 : vector<8x128xf32>
    %262 = arith.negf %261 : vector<8x128xf32>
    %263 = math.exp %262 : vector<8x128xf32>
    %cst_54 = arith.constant 1.000000e+00 : f32
    %264 = vector.broadcast %cst_54 : f32 to vector<8x128xf32>
    %265 = arith.addf %264, %263 : vector<8x128xf32>
    %266 = arith.divf %264, %265 : vector<8x128xf32>
    %267 = vector.extract_strided_slice %249 {offsets = [0, 256], sizes = [8, 128], strides = [1, 1]} : vector<8x384xf32> to vector<8x128xf32>
    %268 = vector.extract_strided_slice %250 {offsets = [0, 256], sizes = [8, 128], strides = [1, 1]} : vector<8x384xf32> to vector<8x128xf32>
    %269 = arith.mulf %258, %268 : vector<8x128xf32>
    %270 = arith.addf %267, %269 : vector<8x128xf32>
    %271 = math.tanh %270 : vector<8x128xf32>
    %cst_55 = arith.constant 1.000000e+00 : f32
    %272 = vector.broadcast %cst_55 : f32 to vector<8x128xf32>
    %273 = arith.subf %272, %266 : vector<8x128xf32>
    %274 = arith.mulf %273, %271 : vector<8x128xf32>
    %275 = arith.mulf %266, %246 : vector<8x128xf32>
    %276 = arith.addf %274, %275 : vector<8x128xf32>
    %c9_i32 = arith.constant 9 : i32
    %277 = arith.index_cast %c9_i32 : i32 to index
    %c0_56 = arith.constant 0 : index
    %c0_57 = arith.constant 0 : index
    %278 = vector.load %arg0[%277, %c0_56, %c0_57] : memref<16x8x384xf32, #tpu.memory_space<vmem>>, vector<1x8x384xf32>
    %279 = vector.shape_cast %278 : vector<1x8x384xf32> to vector<8x384xf32>
    %cst_58 = arith.constant dense<0.000000e+00> : vector<8x384xf32>
    %280 = tpu.matmul %276, %0, %cst_58 {dimension_numbers = #tpu.dot_dimension_numbers<[1], [0], [0], [1], [0, 0, 1, 1], [], []>} : vector<8x128xf32>, vector<128x384xf32>, vector<8x384xf32> -> vector<8x384xf32>
    %281 = vector.extract_strided_slice %279 {offsets = [0, 0], sizes = [8, 128], strides = [1, 1]} : vector<8x384xf32> to vector<8x128xf32>
    %282 = vector.extract_strided_slice %280 {offsets = [0, 0], sizes = [8, 128], strides = [1, 1]} : vector<8x384xf32> to vector<8x128xf32>
    %283 = arith.addf %281, %282 : vector<8x128xf32>
    %284 = arith.negf %283 : vector<8x128xf32>
    %285 = math.exp %284 : vector<8x128xf32>
    %cst_59 = arith.constant 1.000000e+00 : f32
    %286 = vector.broadcast %cst_59 : f32 to vector<8x128xf32>
    %287 = arith.addf %286, %285 : vector<8x128xf32>
    %288 = arith.divf %286, %287 : vector<8x128xf32>
    %289 = vector.extract_strided_slice %279 {offsets = [0, 128], sizes = [8, 128], strides = [1, 1]} : vector<8x384xf32> to vector<8x128xf32>
    %290 = vector.extract_strided_slice %280 {offsets = [0, 128], sizes = [8, 128], strides = [1, 1]} : vector<8x384xf32> to vector<8x128xf32>
    %291 = arith.addf %289, %290 : vector<8x128xf32>
    %292 = arith.negf %291 : vector<8x128xf32>
    %293 = math.exp %292 : vector<8x128xf32>
    %cst_60 = arith.constant 1.000000e+00 : f32
    %294 = vector.broadcast %cst_60 : f32 to vector<8x128xf32>
    %295 = arith.addf %294, %293 : vector<8x128xf32>
    %296 = arith.divf %294, %295 : vector<8x128xf32>
    %297 = vector.extract_strided_slice %279 {offsets = [0, 256], sizes = [8, 128], strides = [1, 1]} : vector<8x384xf32> to vector<8x128xf32>
    %298 = vector.extract_strided_slice %280 {offsets = [0, 256], sizes = [8, 128], strides = [1, 1]} : vector<8x384xf32> to vector<8x128xf32>
    %299 = arith.mulf %288, %298 : vector<8x128xf32>
    %300 = arith.addf %297, %299 : vector<8x128xf32>
    %301 = math.tanh %300 : vector<8x128xf32>
    %cst_61 = arith.constant 1.000000e+00 : f32
    %302 = vector.broadcast %cst_61 : f32 to vector<8x128xf32>
    %303 = arith.subf %302, %296 : vector<8x128xf32>
    %304 = arith.mulf %303, %301 : vector<8x128xf32>
    %305 = arith.mulf %296, %276 : vector<8x128xf32>
    %306 = arith.addf %304, %305 : vector<8x128xf32>
    %c10_i32 = arith.constant 10 : i32
    %307 = arith.index_cast %c10_i32 : i32 to index
    %c0_62 = arith.constant 0 : index
    %c0_63 = arith.constant 0 : index
    %308 = vector.load %arg0[%307, %c0_62, %c0_63] : memref<16x8x384xf32, #tpu.memory_space<vmem>>, vector<1x8x384xf32>
    %309 = vector.shape_cast %308 : vector<1x8x384xf32> to vector<8x384xf32>
    %cst_64 = arith.constant dense<0.000000e+00> : vector<8x384xf32>
    %310 = tpu.matmul %306, %0, %cst_64 {dimension_numbers = #tpu.dot_dimension_numbers<[1], [0], [0], [1], [0, 0, 1, 1], [], []>} : vector<8x128xf32>, vector<128x384xf32>, vector<8x384xf32> -> vector<8x384xf32>
    %311 = vector.extract_strided_slice %309 {offsets = [0, 0], sizes = [8, 128], strides = [1, 1]} : vector<8x384xf32> to vector<8x128xf32>
    %312 = vector.extract_strided_slice %310 {offsets = [0, 0], sizes = [8, 128], strides = [1, 1]} : vector<8x384xf32> to vector<8x128xf32>
    %313 = arith.addf %311, %312 : vector<8x128xf32>
    %314 = arith.negf %313 : vector<8x128xf32>
    %315 = math.exp %314 : vector<8x128xf32>
    %cst_65 = arith.constant 1.000000e+00 : f32
    %316 = vector.broadcast %cst_65 : f32 to vector<8x128xf32>
    %317 = arith.addf %316, %315 : vector<8x128xf32>
    %318 = arith.divf %316, %317 : vector<8x128xf32>
    %319 = vector.extract_strided_slice %309 {offsets = [0, 128], sizes = [8, 128], strides = [1, 1]} : vector<8x384xf32> to vector<8x128xf32>
    %320 = vector.extract_strided_slice %310 {offsets = [0, 128], sizes = [8, 128], strides = [1, 1]} : vector<8x384xf32> to vector<8x128xf32>
    %321 = arith.addf %319, %320 : vector<8x128xf32>
    %322 = arith.negf %321 : vector<8x128xf32>
    %323 = math.exp %322 : vector<8x128xf32>
    %cst_66 = arith.constant 1.000000e+00 : f32
    %324 = vector.broadcast %cst_66 : f32 to vector<8x128xf32>
    %325 = arith.addf %324, %323 : vector<8x128xf32>
    %326 = arith.divf %324, %325 : vector<8x128xf32>
    %327 = vector.extract_strided_slice %309 {offsets = [0, 256], sizes = [8, 128], strides = [1, 1]} : vector<8x384xf32> to vector<8x128xf32>
    %328 = vector.extract_strided_slice %310 {offsets = [0, 256], sizes = [8, 128], strides = [1, 1]} : vector<8x384xf32> to vector<8x128xf32>
    %329 = arith.mulf %318, %328 : vector<8x128xf32>
    %330 = arith.addf %327, %329 : vector<8x128xf32>
    %331 = math.tanh %330 : vector<8x128xf32>
    %cst_67 = arith.constant 1.000000e+00 : f32
    %332 = vector.broadcast %cst_67 : f32 to vector<8x128xf32>
    %333 = arith.subf %332, %326 : vector<8x128xf32>
    %334 = arith.mulf %333, %331 : vector<8x128xf32>
    %335 = arith.mulf %326, %306 : vector<8x128xf32>
    %336 = arith.addf %334, %335 : vector<8x128xf32>
    %c11_i32 = arith.constant 11 : i32
    %337 = arith.index_cast %c11_i32 : i32 to index
    %c0_68 = arith.constant 0 : index
    %c0_69 = arith.constant 0 : index
    %338 = vector.load %arg0[%337, %c0_68, %c0_69] : memref<16x8x384xf32, #tpu.memory_space<vmem>>, vector<1x8x384xf32>
    %339 = vector.shape_cast %338 : vector<1x8x384xf32> to vector<8x384xf32>
    %cst_70 = arith.constant dense<0.000000e+00> : vector<8x384xf32>
    %340 = tpu.matmul %336, %0, %cst_70 {dimension_numbers = #tpu.dot_dimension_numbers<[1], [0], [0], [1], [0, 0, 1, 1], [], []>} : vector<8x128xf32>, vector<128x384xf32>, vector<8x384xf32> -> vector<8x384xf32>
    %341 = vector.extract_strided_slice %339 {offsets = [0, 0], sizes = [8, 128], strides = [1, 1]} : vector<8x384xf32> to vector<8x128xf32>
    %342 = vector.extract_strided_slice %340 {offsets = [0, 0], sizes = [8, 128], strides = [1, 1]} : vector<8x384xf32> to vector<8x128xf32>
    %343 = arith.addf %341, %342 : vector<8x128xf32>
    %344 = arith.negf %343 : vector<8x128xf32>
    %345 = math.exp %344 : vector<8x128xf32>
    %cst_71 = arith.constant 1.000000e+00 : f32
    %346 = vector.broadcast %cst_71 : f32 to vector<8x128xf32>
    %347 = arith.addf %346, %345 : vector<8x128xf32>
    %348 = arith.divf %346, %347 : vector<8x128xf32>
    %349 = vector.extract_strided_slice %339 {offsets = [0, 128], sizes = [8, 128], strides = [1, 1]} : vector<8x384xf32> to vector<8x128xf32>
    %350 = vector.extract_strided_slice %340 {offsets = [0, 128], sizes = [8, 128], strides = [1, 1]} : vector<8x384xf32> to vector<8x128xf32>
    %351 = arith.addf %349, %350 : vector<8x128xf32>
    %352 = arith.negf %351 : vector<8x128xf32>
    %353 = math.exp %352 : vector<8x128xf32>
    %cst_72 = arith.constant 1.000000e+00 : f32
    %354 = vector.broadcast %cst_72 : f32 to vector<8x128xf32>
    %355 = arith.addf %354, %353 : vector<8x128xf32>
    %356 = arith.divf %354, %355 : vector<8x128xf32>
    %357 = vector.extract_strided_slice %339 {offsets = [0, 256], sizes = [8, 128], strides = [1, 1]} : vector<8x384xf32> to vector<8x128xf32>
    %358 = vector.extract_strided_slice %340 {offsets = [0, 256], sizes = [8, 128], strides = [1, 1]} : vector<8x384xf32> to vector<8x128xf32>
    %359 = arith.mulf %348, %358 : vector<8x128xf32>
    %360 = arith.addf %357, %359 : vector<8x128xf32>
    %361 = math.tanh %360 : vector<8x128xf32>
    %cst_73 = arith.constant 1.000000e+00 : f32
    %362 = vector.broadcast %cst_73 : f32 to vector<8x128xf32>
    %363 = arith.subf %362, %356 : vector<8x128xf32>
    %364 = arith.mulf %363, %361 : vector<8x128xf32>
    %365 = arith.mulf %356, %336 : vector<8x128xf32>
    %366 = arith.addf %364, %365 : vector<8x128xf32>
    %c12_i32 = arith.constant 12 : i32
    %367 = arith.index_cast %c12_i32 : i32 to index
    %c0_74 = arith.constant 0 : index
    %c0_75 = arith.constant 0 : index
    %368 = vector.load %arg0[%367, %c0_74, %c0_75] : memref<16x8x384xf32, #tpu.memory_space<vmem>>, vector<1x8x384xf32>
    %369 = vector.shape_cast %368 : vector<1x8x384xf32> to vector<8x384xf32>
    %cst_76 = arith.constant dense<0.000000e+00> : vector<8x384xf32>
    %370 = tpu.matmul %366, %0, %cst_76 {dimension_numbers = #tpu.dot_dimension_numbers<[1], [0], [0], [1], [0, 0, 1, 1], [], []>} : vector<8x128xf32>, vector<128x384xf32>, vector<8x384xf32> -> vector<8x384xf32>
    %371 = vector.extract_strided_slice %369 {offsets = [0, 0], sizes = [8, 128], strides = [1, 1]} : vector<8x384xf32> to vector<8x128xf32>
    %372 = vector.extract_strided_slice %370 {offsets = [0, 0], sizes = [8, 128], strides = [1, 1]} : vector<8x384xf32> to vector<8x128xf32>
    %373 = arith.addf %371, %372 : vector<8x128xf32>
    %374 = arith.negf %373 : vector<8x128xf32>
    %375 = math.exp %374 : vector<8x128xf32>
    %cst_77 = arith.constant 1.000000e+00 : f32
    %376 = vector.broadcast %cst_77 : f32 to vector<8x128xf32>
    %377 = arith.addf %376, %375 : vector<8x128xf32>
    %378 = arith.divf %376, %377 : vector<8x128xf32>
    %379 = vector.extract_strided_slice %369 {offsets = [0, 128], sizes = [8, 128], strides = [1, 1]} : vector<8x384xf32> to vector<8x128xf32>
    %380 = vector.extract_strided_slice %370 {offsets = [0, 128], sizes = [8, 128], strides = [1, 1]} : vector<8x384xf32> to vector<8x128xf32>
    %381 = arith.addf %379, %380 : vector<8x128xf32>
    %382 = arith.negf %381 : vector<8x128xf32>
    %383 = math.exp %382 : vector<8x128xf32>
    %cst_78 = arith.constant 1.000000e+00 : f32
    %384 = vector.broadcast %cst_78 : f32 to vector<8x128xf32>
    %385 = arith.addf %384, %383 : vector<8x128xf32>
    %386 = arith.divf %384, %385 : vector<8x128xf32>
    %387 = vector.extract_strided_slice %369 {offsets = [0, 256], sizes = [8, 128], strides = [1, 1]} : vector<8x384xf32> to vector<8x128xf32>
    %388 = vector.extract_strided_slice %370 {offsets = [0, 256], sizes = [8, 128], strides = [1, 1]} : vector<8x384xf32> to vector<8x128xf32>
    %389 = arith.mulf %378, %388 : vector<8x128xf32>
    %390 = arith.addf %387, %389 : vector<8x128xf32>
    %391 = math.tanh %390 : vector<8x128xf32>
    %cst_79 = arith.constant 1.000000e+00 : f32
    %392 = vector.broadcast %cst_79 : f32 to vector<8x128xf32>
    %393 = arith.subf %392, %386 : vector<8x128xf32>
    %394 = arith.mulf %393, %391 : vector<8x128xf32>
    %395 = arith.mulf %386, %366 : vector<8x128xf32>
    %396 = arith.addf %394, %395 : vector<8x128xf32>
    %c13_i32 = arith.constant 13 : i32
    %397 = arith.index_cast %c13_i32 : i32 to index
    %c0_80 = arith.constant 0 : index
    %c0_81 = arith.constant 0 : index
    %398 = vector.load %arg0[%397, %c0_80, %c0_81] : memref<16x8x384xf32, #tpu.memory_space<vmem>>, vector<1x8x384xf32>
    %399 = vector.shape_cast %398 : vector<1x8x384xf32> to vector<8x384xf32>
    %cst_82 = arith.constant dense<0.000000e+00> : vector<8x384xf32>
    %400 = tpu.matmul %396, %0, %cst_82 {dimension_numbers = #tpu.dot_dimension_numbers<[1], [0], [0], [1], [0, 0, 1, 1], [], []>} : vector<8x128xf32>, vector<128x384xf32>, vector<8x384xf32> -> vector<8x384xf32>
    %401 = vector.extract_strided_slice %399 {offsets = [0, 0], sizes = [8, 128], strides = [1, 1]} : vector<8x384xf32> to vector<8x128xf32>
    %402 = vector.extract_strided_slice %400 {offsets = [0, 0], sizes = [8, 128], strides = [1, 1]} : vector<8x384xf32> to vector<8x128xf32>
    %403 = arith.addf %401, %402 : vector<8x128xf32>
    %404 = arith.negf %403 : vector<8x128xf32>
    %405 = math.exp %404 : vector<8x128xf32>
    %cst_83 = arith.constant 1.000000e+00 : f32
    %406 = vector.broadcast %cst_83 : f32 to vector<8x128xf32>
    %407 = arith.addf %406, %405 : vector<8x128xf32>
    %408 = arith.divf %406, %407 : vector<8x128xf32>
    %409 = vector.extract_strided_slice %399 {offsets = [0, 128], sizes = [8, 128], strides = [1, 1]} : vector<8x384xf32> to vector<8x128xf32>
    %410 = vector.extract_strided_slice %400 {offsets = [0, 128], sizes = [8, 128], strides = [1, 1]} : vector<8x384xf32> to vector<8x128xf32>
    %411 = arith.addf %409, %410 : vector<8x128xf32>
    %412 = arith.negf %411 : vector<8x128xf32>
    %413 = math.exp %412 : vector<8x128xf32>
    %cst_84 = arith.constant 1.000000e+00 : f32
    %414 = vector.broadcast %cst_84 : f32 to vector<8x128xf32>
    %415 = arith.addf %414, %413 : vector<8x128xf32>
    %416 = arith.divf %414, %415 : vector<8x128xf32>
    %417 = vector.extract_strided_slice %399 {offsets = [0, 256], sizes = [8, 128], strides = [1, 1]} : vector<8x384xf32> to vector<8x128xf32>
    %418 = vector.extract_strided_slice %400 {offsets = [0, 256], sizes = [8, 128], strides = [1, 1]} : vector<8x384xf32> to vector<8x128xf32>
    %419 = arith.mulf %408, %418 : vector<8x128xf32>
    %420 = arith.addf %417, %419 : vector<8x128xf32>
    %421 = math.tanh %420 : vector<8x128xf32>
    %cst_85 = arith.constant 1.000000e+00 : f32
    %422 = vector.broadcast %cst_85 : f32 to vector<8x128xf32>
    %423 = arith.subf %422, %416 : vector<8x128xf32>
    %424 = arith.mulf %423, %421 : vector<8x128xf32>
    %425 = arith.mulf %416, %396 : vector<8x128xf32>
    %426 = arith.addf %424, %425 : vector<8x128xf32>
    %c14_i32 = arith.constant 14 : i32
    %427 = arith.index_cast %c14_i32 : i32 to index
    %c0_86 = arith.constant 0 : index
    %c0_87 = arith.constant 0 : index
    %428 = vector.load %arg0[%427, %c0_86, %c0_87] : memref<16x8x384xf32, #tpu.memory_space<vmem>>, vector<1x8x384xf32>
    %429 = vector.shape_cast %428 : vector<1x8x384xf32> to vector<8x384xf32>
    %cst_88 = arith.constant dense<0.000000e+00> : vector<8x384xf32>
    %430 = tpu.matmul %426, %0, %cst_88 {dimension_numbers = #tpu.dot_dimension_numbers<[1], [0], [0], [1], [0, 0, 1, 1], [], []>} : vector<8x128xf32>, vector<128x384xf32>, vector<8x384xf32> -> vector<8x384xf32>
    %431 = vector.extract_strided_slice %429 {offsets = [0, 0], sizes = [8, 128], strides = [1, 1]} : vector<8x384xf32> to vector<8x128xf32>
    %432 = vector.extract_strided_slice %430 {offsets = [0, 0], sizes = [8, 128], strides = [1, 1]} : vector<8x384xf32> to vector<8x128xf32>
    %433 = arith.addf %431, %432 : vector<8x128xf32>
    %434 = arith.negf %433 : vector<8x128xf32>
    %435 = math.exp %434 : vector<8x128xf32>
    %cst_89 = arith.constant 1.000000e+00 : f32
    %436 = vector.broadcast %cst_89 : f32 to vector<8x128xf32>
    %437 = arith.addf %436, %435 : vector<8x128xf32>
    %438 = arith.divf %436, %437 : vector<8x128xf32>
    %439 = vector.extract_strided_slice %429 {offsets = [0, 128], sizes = [8, 128], strides = [1, 1]} : vector<8x384xf32> to vector<8x128xf32>
    %440 = vector.extract_strided_slice %430 {offsets = [0, 128], sizes = [8, 128], strides = [1, 1]} : vector<8x384xf32> to vector<8x128xf32>
    %441 = arith.addf %439, %440 : vector<8x128xf32>
    %442 = arith.negf %441 : vector<8x128xf32>
    %443 = math.exp %442 : vector<8x128xf32>
    %cst_90 = arith.constant 1.000000e+00 : f32
    %444 = vector.broadcast %cst_90 : f32 to vector<8x128xf32>
    %445 = arith.addf %444, %443 : vector<8x128xf32>
    %446 = arith.divf %444, %445 : vector<8x128xf32>
    %447 = vector.extract_strided_slice %429 {offsets = [0, 256], sizes = [8, 128], strides = [1, 1]} : vector<8x384xf32> to vector<8x128xf32>
    %448 = vector.extract_strided_slice %430 {offsets = [0, 256], sizes = [8, 128], strides = [1, 1]} : vector<8x384xf32> to vector<8x128xf32>
    %449 = arith.mulf %438, %448 : vector<8x128xf32>
    %450 = arith.addf %447, %449 : vector<8x128xf32>
    %451 = math.tanh %450 : vector<8x128xf32>
    %cst_91 = arith.constant 1.000000e+00 : f32
    %452 = vector.broadcast %cst_91 : f32 to vector<8x128xf32>
    %453 = arith.subf %452, %446 : vector<8x128xf32>
    %454 = arith.mulf %453, %451 : vector<8x128xf32>
    %455 = arith.mulf %446, %426 : vector<8x128xf32>
    %456 = arith.addf %454, %455 : vector<8x128xf32>
    %c15_i32 = arith.constant 15 : i32
    %457 = arith.index_cast %c15_i32 : i32 to index
    %c0_92 = arith.constant 0 : index
    %c0_93 = arith.constant 0 : index
    %458 = vector.load %arg0[%457, %c0_92, %c0_93] : memref<16x8x384xf32, #tpu.memory_space<vmem>>, vector<1x8x384xf32>
    %459 = vector.shape_cast %458 : vector<1x8x384xf32> to vector<8x384xf32>
    %cst_94 = arith.constant dense<0.000000e+00> : vector<8x384xf32>
    %460 = tpu.matmul %456, %0, %cst_94 {dimension_numbers = #tpu.dot_dimension_numbers<[1], [0], [0], [1], [0, 0, 1, 1], [], []>} : vector<8x128xf32>, vector<128x384xf32>, vector<8x384xf32> -> vector<8x384xf32>
    %461 = vector.extract_strided_slice %459 {offsets = [0, 0], sizes = [8, 128], strides = [1, 1]} : vector<8x384xf32> to vector<8x128xf32>
    %462 = vector.extract_strided_slice %460 {offsets = [0, 0], sizes = [8, 128], strides = [1, 1]} : vector<8x384xf32> to vector<8x128xf32>
    %463 = arith.addf %461, %462 : vector<8x128xf32>
    %464 = arith.negf %463 : vector<8x128xf32>
    %465 = math.exp %464 : vector<8x128xf32>
    %cst_95 = arith.constant 1.000000e+00 : f32
    %466 = vector.broadcast %cst_95 : f32 to vector<8x128xf32>
    %467 = arith.addf %466, %465 : vector<8x128xf32>
    %468 = arith.divf %466, %467 : vector<8x128xf32>
    %469 = vector.extract_strided_slice %459 {offsets = [0, 128], sizes = [8, 128], strides = [1, 1]} : vector<8x384xf32> to vector<8x128xf32>
    %470 = vector.extract_strided_slice %460 {offsets = [0, 128], sizes = [8, 128], strides = [1, 1]} : vector<8x384xf32> to vector<8x128xf32>
    %471 = arith.addf %469, %470 : vector<8x128xf32>
    %472 = arith.negf %471 : vector<8x128xf32>
    %473 = math.exp %472 : vector<8x128xf32>
    %cst_96 = arith.constant 1.000000e+00 : f32
    %474 = vector.broadcast %cst_96 : f32 to vector<8x128xf32>
    %475 = arith.addf %474, %473 : vector<8x128xf32>
    %476 = arith.divf %474, %475 : vector<8x128xf32>
    %477 = vector.extract_strided_slice %459 {offsets = [0, 256], sizes = [8, 128], strides = [1, 1]} : vector<8x384xf32> to vector<8x128xf32>
    %478 = vector.extract_strided_slice %460 {offsets = [0, 256], sizes = [8, 128], strides = [1, 1]} : vector<8x384xf32> to vector<8x128xf32>
    %479 = arith.mulf %468, %478 : vector<8x128xf32>
    %480 = arith.addf %477, %479 : vector<8x128xf32>
    %481 = math.tanh %480 : vector<8x128xf32>
    %cst_97 = arith.constant 1.000000e+00 : f32
    %482 = vector.broadcast %cst_97 : f32 to vector<8x128xf32>
    %483 = arith.subf %482, %476 : vector<8x128xf32>
    %484 = arith.mulf %483, %481 : vector<8x128xf32>
    %485 = arith.mulf %476, %456 : vector<8x128xf32>
    %486 = arith.addf %484, %485 : vector<8x128xf32>
    %c16_i32 = arith.constant 16 : i32
    %487 = vector.extract_strided_slice %486 {offsets = [0, 0], sizes = [8, 32], strides = [1, 1]} : vector<8x128xf32> to vector<8x32xf32>
    %488 = vector.extract_strided_slice %486 {offsets = [0, 32], sizes = [8, 32], strides = [1, 1]} : vector<8x128xf32> to vector<8x32xf32>
    %489 = arith.addf %487, %488 : vector<8x32xf32>
    %490 = tpu.iota {dimensions = array<i32: 0>} : vector<8x32xi32>
    %c0_98 = arith.constant 0 : index
    %491 = memref.load %arg2[%c0_98] : memref<1xi32, #tpu.memory_space<smem>>
    %492 = vector.broadcast %491 : i32 to vector<8x32xi32>
    %493 = arith.cmpi slt, %490, %492 : vector<8x32xi32>
    %cst_99 = arith.constant 0xFF800000 : f32
    %494 = vector.broadcast %cst_99 : f32 to vector<8x32xf32>
    %495 = arith.select %493, %489, %494 : vector<8x32xi1>, vector<8x32xf32>
    %cst_100 = arith.constant dense<0xFF800000> : vector<32xf32>
    %496 = vector.multi_reduction <maximumf>, %495, %cst_100 [0] : vector<8x32xf32> to vector<32xf32>
    %497 = vector.shape_cast %496 : vector<32xf32> to vector<1x32xf32>
    %c0_101 = arith.constant 0 : index
    %c0_102 = arith.constant 0 : index
    %498 = vector.load %arg3[%c0_101, %c0_102] : memref<1x32xf32, #tpu.memory_space<vmem>>, vector<1x32xf32>
    tpu.vector_store %arg3[%c0_101, %c0_102], %497 {strides = array<i32>} : memref<1x32xf32, #tpu.memory_space<vmem>>, vector<1x32xf32>,
    return
  }
}

</mosaic_0001>

<llo_original>
// kernel: _encode.1
$region0: #{_encode.1}
  #allocation0 [shape = 'u32[]', space=smem, size = 0x4, offset = 0x4, fixed_abs, tag = 'smem constant byte address 0x4 - core index']
  #allocation1 [shape = 'u32[144,128]{1,0:T(1,128)}', space=vmem, size = 0x12000, scoped, tag = 'internal scratch']
  #allocation2 [shape = 's32[1]{0:T(128)S(6)}', space=smem, size = 0x200, scoped, tag = 'scoped memory for _encode.1']
  %s0 = inlined_call_operand.vmem [shape: f32[16,8,384], index: 0, kind: input, shape index: {}]
  %s1 = inlined_call_operand.vmem [shape: f32[128,384], index: 1, kind: input, shape index: {}]
  %s2 = inlined_call_operand.<no memory space> [shape: s32[1], index: 2, kind: input, shape index: {}]
  %s3 = inlined_call_operand.hbm [shape: f32[1,32], index: 3, kind: output, shape index: {}]
  %s4 = sld [smem:[#allocation0]]
  $region22: #{_encode.1} parent=0
    _
  %s6 = ssub.s32 1, %s4
  %s7 = scalar_select 0, %s6, %s4
  %8 = sst [smem:[#allocation2]] %s2
  $region1: #{_encode.1} parent=0
    #allocation3 [shape = 'u8[512]{0}', space=vmem, size = 0x400, scoped, tag = 'output window, operand 0, single buffered']
    #allocation4 [shape = 's32[1]{0}', space=sflag, size = 0x4, scoped, tag = 'scoped memory for _encode.1']
    %9 = vsyncpa [#allocation4], 0
    // Predicated region
    $region2: #{_encode.1} parent=1 // pred_check
      _
    $region3: #{_encode.1} parent=1 // pred_check_branch
      %11 = sbr.rel (0) target = $region5
    $region4: #{_encode.1} parent=1 // pred_region
      _
    $region5: #{_encode.1} parent=1 // pred_fallthru
      _
    // Predicated region
    $region6: #{_encode.1} parent=1 // pred_check
      _
    $region7: #{_encode.1} parent=1 // pred_check_branch
      %13 = sbr.rel (0) target = $region9
    $region8: #{_encode.1} parent=1 // pred_region
      _
    $region9: #{_encode.1} parent=1 // pred_fallthru
      _
    // Predicated region
    $region10: #{_encode.1} parent=1 // pred_check
      _
    $region11: #{_encode.1} parent=1 // pred_check_branch
      %15 = sbr.rel (0) target = $region13
    $region12: #{_encode.1} parent=1 // pred_region
      _
    $region13: #{_encode.1} parent=1 // pred_fallthru
      _
    %v16 = vld [vmem:[%s1] sm:$0xff]
    %v17 = vld [vmem:[%s1 + $0x8] sm:$0xff]
    %v18 = vld [vmem:[%s1 + $0x10] sm:$0xff]
    %v19 = vld [vmem:[%s1 + $0x18] sm:$0xff]
    %v20 = vld [vmem:[%s1 + $0x20] sm:$0xff]
    %v21 = vld [vmem:[%s1 + $0x28] sm:$0xff]
    %v22 = vld [vmem:[%s1 + $0x30] sm:$0xff]
    %v23 = vld [vmem:[%s1 + $0x38] sm:$0xff]
    %v24 = vld [vmem:[%s1 + $0x40] sm:$0xff]
    %v25 = vld [vmem:[%s1 + $0x48] sm:$0xff]
    %v26 = vld [vmem:[%s1 + $0x50] sm:$0xff]
    %v27 = vld [vmem:[%s1 + $0x58] sm:$0xff]
    %v28 = vld [vmem:[%s1 + $0x60] sm:$0xff]
    %v29 = vld [vmem:[%s1 + $0x68] sm:$0xff]
    %v30 = vld [vmem:[%s1 + $0x70] sm:$0xff]
    %v31 = vld [vmem:[%s1 + $0x78] sm:$0xff]
    %v32 = vld [vmem:[%s1 + $0x80] sm:$0xff]
    %v33 = vld [vmem:[%s1 + $0x88] sm:$0xff]
    %v34 = vld [vmem:[%s1 + $0x90] sm:$0xff]
    %v35 = vld [vmem:[%s1 + $0x98] sm:$0xff]
    %v36 = vld [vmem:[%s1 + $0xa0] sm:$0xff]
    %v37 = vld [vmem:[%s1 + $0xa8] sm:$0xff]
    %v38 = vld [vmem:[%s1 + $0xb0] sm:$0xff]
    %v39 = vld [vmem:[%s1 + $0xb8] sm:$0xff]
    %v40 = vld [vmem:[%s1 + $0xc0] sm:$0xff]
    %v41 = vld [vmem:[%s1 + $0xc8] sm:$0xff]
    %v42 = vld [vmem:[%s1 + $0xd0] sm:$0xff]
    %v43 = vld [vmem:[%s1 + $0xd8] sm:$0xff]
    %v44 = vld [vmem:[%s1 + $0xe0] sm:$0xff]
    %v45 = vld [vmem:[%s1 + $0xe8] sm:$0xff]
    %v46 = vld [vmem:[%s1 + $0xf0] sm:$0xff]
    %v47 = vld [vmem:[%s1 + $0xf8] sm:$0xff]
    %v48 = vld [vmem:[%s1 + $0x100] sm:$0xff]
    %v49 = vld [vmem:[%s1 + $0x108] sm:$0xff]
    %v50 = vld [vmem:[%s1 + $0x110] sm:$0xff]
    %v51 = vld [vmem:[%s1 + $0x118] sm:$0xff]
    %v52 = vld [vmem:[%s1 + $0x120] sm:$0xff]
    %v53 = vld [vmem:[%s1 + $0x128] sm:$0xff]
    %v54 = vld [vmem:[%s1 + $0x130] sm:$0xff]
    %v55 = vld [vmem:[%s1 + $0x138] sm:$0xff]
    %v56 = vld [vmem:[%s1 + $0x140] sm:$0xff]
    %v57 = vld [vmem:[%s1 + $0x148] sm:$0xff]
    %v58 = vld [vmem:[%s1 + $0x150] sm:$0xff]
    %v59 = vld [vmem:[%s1 + $0x158] sm:$0xff]
    %v60 = vld [vmem:[%s1 + $0x160] sm:$0xff]
    %v61 = vld [vmem:[%s1 + $0x168] sm:$0xff]
    %v62 = vld [vmem:[%s1 + $0x170] sm:$0xff]
    %v63 = vld [vmem:[%s1 + $0x178] sm:$0xff]
    %v64 = vlaneseq
    %v65 = vand.u32 %v64, 127
    %vm66 = vcmp.eq.s32.totalorder %v65, 64
    %v67 = vsel %vm66, 1.0, 0.0
    %v68 = vld [vmem:[%s0] sm:$0xff]
    %v69 = vld [vmem:[%s0 + $0x8] sm:$0xff]
    %v70 = vld [vmem:[%s0 + $0x10] sm:$0xff]
    %71 = vmatprep.subr.mxu0 %v17
    %72 = vmatpush1.msra.mxu0 %v16
    %73 = vmatprep.subr.mxu0 %v20
    %74 = vmatpush1.msra.mxu0 %v19
    %75 = vmatprep.subr.mxu0 %v23
    %76 = vmatpush1.msra.mxu0 %v22
    %77 = vmatprep.subr.mxu0 %v26
    %78 = vmatpush1.msra.mxu0 %v25
    %79 = vmatprep.subr.mxu0 %v29
    %80 = vmatpush1.msra.mxu0 %v28
    %81 = vmatprep.subr.mxu0 %v32
    %82 = vmatpush1.msra.mxu0 %v31
    %83 = vmatprep.subr.mxu0 %v35
    %84 = vmatpush1.msra.mxu0 %v34
    %85 = vmatprep.subr.mxu0 %v38
    %86 = vmatpush1.msra.mxu0 %v37
    %87 = vmatprep.subr.mxu0 %v41
    %88 = vmatpush1.msra.mxu0 %v40
    %89 = vmatprep.subr.mxu0 %v44
    %90 = vmatpush1.msra.mxu0 %v43
    %91 = vmatprep.subr.mxu0 %v47
    %92 = vmatpush1.msra.mxu0 %v46
    %93 = vmatprep.subr.mxu0 %v50
    %94 = vmatpush1.msra.mxu0 %v49
    %95 = vmatprep.subr.mxu0 %v53
    %96 = vmatpush1.msra.mxu0 %v52
    %97 = vmatprep.subr.mxu0 %v56
    %98 = vmatpush1.msra.mxu0 %v55
    %99 = vmatprep.subr.mxu0 %v59
    %100 = vmatpush1.msra.mxu0 %v58
    %101 = vmatprep.subr.mxu0 %v62
    %102 = vmatpush1.msra.mxu0 %v61
    %103 = vmatprep.subr.mxu0 0.0
    %104 = vmatpush1.msra.mxu0 0.0
    %105 = vmatprep.subr.mxu0 0.0
    %106 = vmatpush1.msra.mxu0 0.0
    %107 = vmatprep.subr.mxu0 0.0
    %108 = vmatpush1.msra.mxu0 0.0
    %109 = vmatprep.subr.mxu0 0.0
    %110 = vmatpush1.msra.mxu0 0.0
    %111 = vmatprep.subr.mxu0 0.0
    %112 = vmatpush1.msra.mxu0 0.0
    %113 = vmatprep.subr.mxu0 0.0
    %114 = vmatpush1.msra.mxu0 0.0
    %115 = vmatprep.subr.mxu0 0.0
    %116 = vmatpush1.msra.mxu0 0.0
    %117 = vmatprep.subr.mxu0 0.0
    %118 = vmatpush1.msra.mxu0 0.0
    %119 = vmatprep.subr.mxu0 0.0
    %120 = vmatpush1.msra.mxu0 0.0
    %121 = vmatprep.subr.mxu0 0.0
    %122 = vmatpush1.msra.mxu0 0.0
    %123 = vmatprep.subr.mxu0 0.0
    %124 = vmatpush1.msra.mxu0 0.0
    %125 = vmatprep.subr.mxu0 0.0
    %126 = vmatpush1.msra.mxu0 0.0
    %127 = vmatprep.subr.mxu0 0.0
    %128 = vmatpush1.msra.mxu0 0.0
    %129 = vmatprep.subr.mxu0 0.0
    %130 = vmatpush1.msra.mxu0 0.0
    %131 = vmatprep.subr.mxu0 0.0
    %132 = vmatpush1.msra.mxu0 0.0
    %133 = vmatprep.subr.mxu0 0.0
    %134 = vmatpush1.msra.mxu0 0.0
    %135 = vmatprep.mubr.f32.mxu0 0.0
    %136 = vmatmul.mubr.f32.gmra.mrb[0].mxu0 %v67
    %v137 = vpop.f32.mrb[0].mxu0
    %v138 = vadd.f32 0.0, %v137
    %v139 = vpop.f32.mrb[0].mxu0
    %v140 = vadd.f32 0.0, %v139
    %141 = vdwg.mxu0
    %142 = vmatprep.subr.mxu0 0.0
    %143 = vmatpush1.msra.mxu0 %v18
    %144 = vmatprep.subr.mxu0 0.0
    %145 = vmatpush1.msra.mxu0 %v21
    %146 = vmatprep.subr.mxu0 0.0
    %147 = vmatpush1.msra.mxu0 %v24
    %148 = vmatprep.subr.mxu0 0.0
    %149 = vmatpush1.msra.mxu0 %v27
    %150 = vmatprep.subr.mxu0 0.0
    %151 = vmatpush1.msra.mxu0 %v30
    %152 = vmatprep.subr.mxu0 0.0
    %153 = vmatpush1.msra.mxu0 %v33
    %154 = vmatprep.subr.mxu0 0.0
    %155 = vmatpush1.msra.mxu0 %v36
    %156 = vmatprep.subr.mxu0 0.0
    %157 = vmatpush1.msra.mxu0 %v39
    %158 = vmatprep.subr.mxu0 0.0
    %159 = vmatpush1.msra.mxu0 %v42
    %160 = vmatprep.subr.mxu0 0.0
    %161 = vmatpush1.msra.mxu0 %v45
    %162 = vmatprep.subr.mxu0 0.0
    %163 = vmatpush1.msra.mxu0 %v48
    %164 = vmatprep.subr.mxu0 0.0
    %165 = vmatpush1.msra.mxu0 %v51
    %166 = vmatprep.subr.mxu0 0.0
    %167 = vmatpush1.msra.mxu0 %v54
    %168 = vmatprep.subr.mxu0 0.0
    %169 = vmatpush1.msra.mxu0 %v57
    %170 = vmatprep.subr.mxu0 0.0
    %171 = vmatpush1.msra.mxu0 %v60
    %172 = vmatprep.subr.mxu0 0.0
    %173 = vmatpush1.msra.mxu0 %v63
    %174 = vmatprep.subr.mxu0 0.0
    %175 = vmatpush1.msra.mxu0 0.0
    %176 = vmatprep.subr.mxu0 0.0
    %177 = vmatpush1.msra.mxu0 0.0
    %178 = vmatprep.subr.mxu0 0.0
    %179 = vmatpush1.msra.mxu0 0.0
    %180 = vmatprep.subr.mxu0 0.0
    %181 = vmatpush1.msra.mxu0 0.0
    %182 = vmatprep.subr.mxu0 0.0
    %183 = vmatpush1.msra.mxu0 0.0
    %184 = vmatprep.subr.mxu0 0.0
    %185 = vmatpush1.msra.mxu0 0.0
    %186 = vmatprep.subr.mxu0 0.0
    %187 = vmatpush1.msra.mxu0 0.0
    %188 = vmatprep.subr.mxu0 0.0
    %189 = vmatpush1.msra.mxu0 0.0
    %190 = vmatprep.subr.mxu0 0.0
    %191 = vmatpush1.msra.mxu0 0.0
    %192 = vmatprep.subr.mxu0 0.0
    %193 = vmatpush1.msra.mxu0 0.0
    %194 = vmatprep.subr.mxu0 0.0
    %195 = vmatpush1.msra.mxu0 0.0
    %196 = vmatprep.subr.mxu0 0.0
    %197 = vmatpush1.msra.mxu0 0.0
    %198 = vmatprep.subr.mxu0 0.0
    %199 = vmatpush1.msra.mxu0 0.0
    %200 = vmatprep.subr.mxu0 0.0
    %201 = vmatpush1.msra.mxu0 0.0
    %202 = vmatprep.subr.mxu0 0.0
    %203 = vmatpush1.msra.mxu0 0.0
    %204 = vmatprep.subr.mxu0 0.0
    %205 = vmatpush1.msra.mxu0 0.0
    %206 = vmatprep.mubr.f32.mxu0 0.0
    %207 = vmatmul.mubr.f32.gmra.mrb[0].mxu0 %v67
    %v208 = vpop.f32.mrb[0].mxu0
    %v209 = vadd.f32 0.0, %v208
    %v210 = vpop.f32.mrb[0].mxu0
    %211 = vdwg.mxu0
    %v212 = vadd.f32 %v68, %v138
    %v213 = vxor.u32 %v212, 2147483648
    %v214 = vmul.f32 %v213, 1.442695
    %v215 = vpow.pop %v214
    %v216 = vadd.f32 %v215, 1.0
    %v217 = vrcp.pop %v216
    %v218 = vmul.f32 1.0, %v217
    %v219 = vadd.f32 %v69, %v140
    %v220 = vxor.u32 %v219, 2147483648
    %v221 = vmul.f32 %v220, 1.442695
    %v222 = vpow.pop %v221
    %v223 = vadd.f32 %v222, 1.0
    %v224 = vrcp.pop %v223
    %v225 = vmul.f32 1.0, %v224
    %v226 = vmul.f32 %v218, %v209
    %v227 = vadd.f32 %v70, %v226
    %v228 = vtanh.pop %v227
    %v229 = vsub.f32 1.0, %v225
    %v230 = vmul.f32 %v229, %v228
    %v231 = vmul.f32 %v225, %v67
    %v232 = vadd.f32 %v230, %v231
    %s233 = scalar_lea.vmem %s0, 24
    %v234 = vld [vmem:[%s233] sm:$0xff]
    %v235 = vld [vmem:[%s233 + $0x8] sm:$0xff]
    %v236 = vld [vmem:[%s233 + $0x10] sm:$0xff]
    %237 = vmatprep.subr.mxu0 %v17
    %238 = vmatpush1.msra.mxu0 %v16
    %239 = vmatprep.subr.mxu0 %v20
    %240 = vmatpush1.msra.mxu0 %v19
    %241 = vmatprep.subr.mxu0 %v23
    %242 = vmatpush1.msra.mxu0 %v22
    %243 = vmatprep.subr.mxu0 %v26
    %244 = vmatpush1.msra.mxu0 %v25
    %245 = vmatprep.subr.mxu0 %v29
    %246 = vmatpush1.msra.mxu0 %v28
    %247 = vmatprep.subr.mxu0 %v32
    %248 = vmatpush1.msra.mxu0 %v31
    %249 = vmatprep.subr.mxu0 %v35
    %250 = vmatpush1.msra.mxu0 %v34
    %251 = vmatprep.subr.mxu0 %v38
    %252 = vmatpush1.msra.mxu0 %v37
    %253 = vmatprep.subr.mxu0 %v41
    %254 = vmatpush1.msra.mxu0 %v40
    %255 = vmatprep.subr.mxu0 %v44
    %256 = vmatpush1.msra.mxu0 %v43
    %257 = vmatprep.subr.mxu0 %v47
    %258 = vmatpush1.msra.mxu0 %v46
    %259 = vmatprep.subr.mxu0 %v50
    %260 = vmatpush1.msra.mxu0 %v49
    %261 = vmatprep.subr.mxu0 %v53
    %262 = vmatpush1.msra.mxu0 %v52
    %263 = vmatprep.subr.mxu0 %v56
    %264 = vmatpush1.msra.mxu0 %v55
    %265 = vmatprep.subr.mxu0 %v59
    %266 = vmatpush1.msra.mxu0 %v58
    %267 = vmatprep.subr.mxu0 %v62
    %268 = vmatpush1.msra.mxu0 %v61
    %269 = vmatprep.subr.mxu0 0.0
    %270 = vmatpush1.msra.mxu0 0.0
    %271 = vmatprep.subr.mxu0 0.0
    %272 = vmatpush1.msra.mxu0 0.0
    %273 = vmatprep.subr.mxu0 0.0
    %274 = vmatpush1.msra.mxu0 0.0
    %275 = vmatprep.subr.mxu0 0.0
    %276 = vmatpush1.msra.mxu0 0.0
    %277 = vmatprep.subr.mxu0 0.0
    %278 = vmatpush1.msra.mxu0 0.0
    %279 = vmatprep.subr.mxu0 0.0
    %280 = vmatpush1.msra.mxu0 0.0
    %281 = vmatprep.subr.mxu0 0.0
    %282 = vmatpush1.msra.mxu0 0.0
    %283 = vmatprep.subr.mxu0 0.0
    %284 = vmatpush1.msra.mxu0 0.0
    %285 = vmatprep.subr.mxu0 0.0
    %286 = vmatpush1.msra.mxu0 0.0
    %287 = vmatprep.subr.mxu0 0.0
    %288 = vmatpush1.msra.mxu0 0.0
    %289 = vmatprep.subr.mxu0 0.0
    %290 = vmatpush1.msra.mxu0 0.0
    %291 = vmatprep.subr.mxu0 0.0
    %292 = vmatpush1.msra.mxu0 0.0
    %293 = vmatprep.subr.mxu0 0.0
    %294 = vmatpush1.msra.mxu0 0.0
    %295 = vmatprep.subr.mxu0 0.0
    %296 = vmatpush1.msra.mxu0 0.0
    %297 = vmatprep.subr.mxu0 0.0
    %298 = vmatpush1.msra.mxu0 0.0
    %299 = vmatprep.subr.mxu0 0.0
    %300 = vmatpush1.msra.mxu0 0.0
    %301 = vmatprep.mubr.f32.mxu0 0.0
    %302 = vmatmul.mubr.f32.gmra.mrb[0].mxu0 %v232
    %v303 = vpop.f32.mrb[0].mxu0
    %v304 = vadd.f32 0.0, %v303
    %v305 = vpop.f32.mrb[0].mxu0
    %v306 = vadd.f32 0.0, %v305
    %307 = vdwg.mxu0
    %308 = vmatprep.subr.mxu0 0.0
    %309 = vmatpush1.msra.mxu0 %v18
    %310 = vmatprep.subr.mxu0 0.0
    %311 = vmatpush1.msra.mxu0 %v21
    %312 = vmatprep.subr.mxu0 0.0
    %313 = vmatpush1.msra.mxu0 %v24
    %314 = vmatprep.subr.mxu0 0.0
    %315 = vmatpush1.msra.mxu0 %v27
    %316 = vmatprep.subr.mxu0 0.0
    %317 = vmatpush1.msra.mxu0 %v30
    %318 = vmatprep.subr.mxu0 0.0
    %319 = vmatpush1.msra.mxu0 %v33
    %320 = vmatprep.subr.mxu0 0.0
    %321 = vmatpush1.msra.mxu0 %v36
    %322 = vmatprep.subr.mxu0 0.0
    %323 = vmatpush1.msra.mxu0 %v39
    %324 = vmatprep.subr.mxu0 0.0
    %325 = vmatpush1.msra.mxu0 %v42
    %326 = vmatprep.subr.mxu0 0.0
    %327 = vmatpush1.msra.mxu0 %v45
    %328 = vmatprep.subr.mxu0 0.0
    %329 = vmatpush1.msra.mxu0 %v48
    %330 = vmatprep.subr.mxu0 0.0
    %331 = vmatpush1.msra.mxu0 %v51
    %332 = vmatprep.subr.mxu0 0.0
    %333 = vmatpush1.msra.mxu0 %v54
    %334 = vmatprep.subr.mxu0 0.0
    %335 = vmatpush1.msra.mxu0 %v57
    %336 = vmatprep.subr.mxu0 0.0
    %337 = vmatpush1.msra.mxu0 %v60
    %338 = vmatprep.subr.mxu0 0.0
    %339 = vmatpush1.msra.mxu0 %v63
    %340 = vmatprep.subr.mxu0 0.0
    %341 = vmatpush1.msra.mxu0 0.0
    %342 = vmatprep.subr.mxu0 0.0
    %343 = vmatpush1.msra.mxu0 0.0
    %344 = vmatprep.subr.mxu0 0.0
    %345 = vmatpush1.msra.mxu0 0.0
    %346 = vmatprep.subr.mxu0 0.0
    %347 = vmatpush1.msra.mxu0 0.0
    %348 = vmatprep.subr.mxu0 0.0
    %349 = vmatpush1.msra.mxu0 0.0
    %350 = vmatprep.subr.mxu0 0.0
    %351 = vmatpush1.msra.mxu0 0.0
    %352 = vmatprep.subr.mxu0 0.0
    %353 = vmatpush1.msra.mxu0 0.0
    %354 = vmatprep.subr.mxu0 0.0
    %355 = vmatpush1.msra.mxu0 0.0
    %356 = vmatprep.subr.mxu0 0.0
    %357 = vmatpush1.msra.mxu0 0.0
    %358 = vmatprep.subr.mxu0 0.0
    %359 = vmatpush1.msra.mxu0 0.0
    %360 = vmatprep.subr.mxu0 0.0
    %361 = vmatpush1.msra.mxu0 0.0
    %362 = vmatprep.subr.mxu0 0.0
    %363 = vmatpush1.msra.mxu0 0.0
    %364 = vmatprep.subr.mxu0 0.0
    %365 = vmatpush1.msra.mxu0 0.0
    %366 = vmatprep.subr.mxu0 0.0
    %367 = vmatpush1.msra.mxu0 0.0
    %368 = vmatprep.subr.mxu0 0.0
    %369 = vmatpush1.msra.mxu0 0.0
    %370 = vmatprep.subr.mxu0 0.0
    %371 = vmatpush1.msra.mxu0 0.0
    %372 = vmatprep.mubr.f32.mxu0 0.0
    %373 = vmatmul.mubr.f32.gmra.mrb[0].mxu0 %v232
    %v374 = vpop.f32.mrb[0].mxu0
    %v375 = vadd.f32 0.0, %v374
    %v376 = vpop.f32.mrb[0].mxu0
    %377 = vdwg.mxu0
    %v378 = vadd.f32 %v234, %v304
    %v379 = vxor.u32 %v378, 2147483648
    %v380 = vmul.f32 %v379, 1.442695
    %v381 = vpow.pop %v380
    %v382 = vadd.f32 %v381, 1.0
    %v383 = vrcp.pop %v382
    %v384 = vmul.f32 1.0, %v383
    %v385 = vadd.f32 %v235, %v306
    %v386 = vxor.u32 %v385, 2147483648
    %v387 = vmul.f32 %v386, 1.442695
    %v388 = vpow.pop %v387
    %v389 = vadd.f32 %v388, 1.0
    %v390 = vrcp.pop %v389
    %v391 = vmul.f32 1.0, %v390
    %v392 = vmul.f32 %v384, %v375
    %v393 = vadd.f32 %v236, %v392
    %v394 = vtanh.pop %v393
    %v395 = vsub.f32 1.0, %v391
    %v396 = vmul.f32 %v395, %v394
    %v397 = vmul.f32 %v391, %v232
    %v398 = vadd.f32 %v396, %v397
    %s399 = scalar_lea.vmem %s0, 48
    %v400 = vld [vmem:[%s399] sm:$0xff]
    %v401 = vld [vmem:[%s399 + $0x8] sm:$0xff]
    %v402 = vld [vmem:[%s399 + $0x10] sm:$0xff]
    %403 = vmatprep.subr.mxu0 %v17
    %404 = vmatpush1.msra.mxu0 %v16
    %405 = vmatprep.subr.mxu0 %v20
    %406 = vmatpush1.msra.mxu0 %v19
    %407 = vmatprep.subr.mxu0 %v23
    %408 = vmatpush1.msra.mxu0 %v22
    %409 = vmatprep.subr.mxu0 %v26
    %410 = vmatpush1.msra.mxu0 %v25
    %411 = vmatprep.subr.mxu0 %v29
    %412 = vmatpush1.msra.mxu0 %v28
    %413 = vmatprep.subr.mxu0 %v32
    %414 = vmatpush1.msra.mxu0 %v31
    %415 = vmatprep.subr.mxu0 %v35
    %416 = vmatpush1.msra.mxu0 %v34
    %417 = vmatprep.subr.mxu0 %v38
    %418 = vmatpush1.msra.mxu0 %v37
    %419 = vmatprep.subr.mxu0 %v41
    %420 = vmatpush1.msra.mxu0 %v40
    %421 = vmatprep.subr.mxu0 %v44
    %422 = vmatpush1.msra.mxu0 %v43
    %423 = vmatprep.subr.mxu0 %v47
    %424 = vmatpush1.msra.mxu0 %v46
    %425 = vmatprep.subr.mxu0 %v50
    %426 = vmatpush1.msra.mxu0 %v49
    %427 = vmatprep.subr.mxu0 %v53
    %428 = vmatpush1.msra.mxu0 %v52
    %429 = vmatprep.subr.mxu0 %v56
    %430 = vmatpush1.msra.mxu0 %v55
    %431 = vmatprep.subr.mxu0 %v59
    %432 = vmatpush1.msra.mxu0 %v58
    %433 = vmatprep.subr.mxu0 %v62
    %434 = vmatpush1.msra.mxu0 %v61
    %435 = vmatprep.subr.mxu0 0.0
    %436 = vmatpush1.msra.mxu0 0.0
    %437 = vmatprep.subr.mxu0 0.0
    %438 = vmatpush1.msra.mxu0 0.0
    %439 = vmatprep.subr.mxu0 0.0
    %440 = vmatpush1.msra.mxu0 0.0
    %441 = vmatprep.subr.mxu0 0.0
    %442 = vmatpush1.msra.mxu0 0.0
    %443 = vmatprep.subr.mxu0 0.0
    %444 = vmatpush1.msra.mxu0 0.0
    %445 = vmatprep.subr.mxu0 0.0
    %446 = vmatpush1.msra.mxu0 0.0
    %447 = vmatprep.subr.mxu0 0.0
    %448 = vmatpush1.msra.mxu0 0.0
    %449 = vmatprep.subr.mxu0 0.0
    %450 = vmatpush1.msra.mxu0 0.0
    %451 = vmatprep.subr.mxu0 0.0
    %452 = vmatpush1.msra.mxu0 0.0
    %453 = vmatprep.subr.mxu0 0.0
    %454 = vmatpush1.msra.mxu0 0.0
    %455 = vmatprep.subr.mxu0 0.0
    %456 = vmatpush1.msra.mxu0 0.0
    %457 = vmatprep.subr.mxu0 0.0
    %458 = vmatpush1.msra.mxu0 0.0
    %459 = vmatprep.subr.mxu0 0.0
    %460 = vmatpush1.msra.mxu0 0.0
    %461 = vmatprep.subr.mxu0 0.0
    %462 = vmatpush1.msra.mxu0 0.0
    %463 = vmatprep.subr.mxu0 0.0
    %464 = vmatpush1.msra.mxu0 0.0
    %465 = vmatprep.subr.mxu0 0.0
    %466 = vmatpush1.msra.mxu0 0.0
    %467 = vmatprep.mubr.f32.mxu0 0.0
    %468 = vmatmul.mubr.f32.gmra.mrb[0].mxu0 %v398
    %v469 = vpop.f32.mrb[0].mxu0
    %v470 = vadd.f32 0.0, %v469
    %v471 = vpop.f32.mrb[0].mxu0
    %v472 = vadd.f32 0.0, %v471
    %473 = vdwg.mxu0
    %474 = vmatprep.subr.mxu0 0.0
    %475 = vmatpush1.msra.mxu0 %v18
    %476 = vmatprep.subr.mxu0 0.0
    %477 = vmatpush1.msra.mxu0 %v21
    %478 = vmatprep.subr.mxu0 0.0
    %479 = vmatpush1.msra.mxu0 %v24
    %480 = vmatprep.subr.mxu0 0.0
    %481 = vmatpush1.msra.mxu0 %v27
    %482 = vmatprep.subr.mxu0 0.0
    %483 = vmatpush1.msra.mxu0 %v30
    %484 = vmatprep.subr.mxu0 0.0
    %485 = vmatpush1.msra.mxu0 %v33
    %486 = vmatprep.subr.mxu0 0.0
    %487 = vmatpush1.msra.mxu0 %v36
    %488 = vmatprep.subr.mxu0 0.0
    %489 = vmatpush1.msra.mxu0 %v39
    %490 = vmatprep.subr.mxu0 0.0
    %491 = vmatpush1.msra.mxu0 %v42
    %492 = vmatprep.subr.mxu0 0.0
    %493 = vmatpush1.msra.mxu0 %v45
    %494 = vmatprep.subr.mxu0 0.0
    %495 = vmatpush1.msra.mxu0 %v48
    %496 = vmatprep.subr.mxu0 0.0
    %497 = vmatpush1.msra.mxu0 %v51
    %498 = vmatprep.subr.mxu0 0.0
    %499 = vmatpush1.msra.mxu0 %v54
    %500 = vmatprep.subr.mxu0 0.0
    %501 = vmatpush1.msra.mxu0 %v57
    %502 = vmatprep.subr.mxu0 0.0
    %503 = vmatpush1.msra.mxu0 %v60
    %504 = vmatprep.subr.mxu0 0.0
    %505 = vmatpush1.msra.mxu0 %v63
    %506 = vmatprep.subr.mxu0 0.0
    %507 = vmatpush1.msra.mxu0 0.0
    %508 = vmatprep.subr.mxu0 0.0
    %509 = vmatpush1.msra.mxu0 0.0
    %510 = vmatprep.subr.mxu0 0.0
    %511 = vmatpush1.msra.mxu0 0.0
    %512 = vmatprep.subr.mxu0 0.0
    %513 = vmatpush1.msra.mxu0 0.0
    %514 = vmatprep.subr.mxu0 0.0
    %515 = vmatpush1.msra.mxu0 0.0
    %516 = vmatprep.subr.mxu0 0.0
    %517 = vmatpush1.msra.mxu0 0.0
    %518 = vmatprep.subr.mxu0 0.0
    %519 = vmatpush1.msra.mxu0 0.0
    %520 = vmatprep.subr.mxu0 0.0
    %521 = vmatpush1.msra.mxu0 0.0
    %522 = vmatprep.subr.mxu0 0.0
    %523 = vmatpush1.msra.mxu0 0.0
    %524 = vmatprep.subr.mxu0 0.0
    %525 = vmatpush1.msra.mxu0 0.0
    %526 = vmatprep.subr.mxu0 0.0
    %527 = vmatpush1.msra.mxu0 0.0
    %528 = vmatprep.subr.mxu0 0.0
    %529 = vmatpush1.msra.mxu0 0.0
    %530 = vmatprep.subr.mxu0 0.0
    %531 = vmatpush1.msra.mxu0 0.0
    %532 = vmatprep.subr.mxu0 0.0
    %533 = vmatpush1.msra.mxu0 0.0
    %534 = vmatprep.subr.mxu0 0.0
    %535 = vmatpush1.msra.mxu0 0.0
    %536 = vmatprep.subr.mxu0 0.0
    %537 = vmatpush1.msra.mxu0 0.0
    %538 = vmatprep.mubr.f32.mxu0 0.0
    %539 = vmatmul.mubr.f32.gmra.mrb[0].mxu0 %v398
    %v540 = vpop.f32.mrb[0].mxu0
    %v541 = vadd.f32 0.0, %v540
    %v542 = vpop.f32.mrb[0].mxu0
    %543 = vdwg.mxu0
    %v544 = vadd.f32 %v400, %v470
    %v545 = vxor.u32 %v544, 2147483648
    %v546 = vmul.f32 %v545, 1.442695
    %v547 = vpow.pop %v546
    %v548 = vadd.f32 %v547, 1.0
    %v549 = vrcp.pop %v548
    %v550 = vmul.f32 1.0, %v549
    %v551 = vadd.f32 %v401, %v472
    %v552 = vxor.u32 %v551, 2147483648
    %v553 = vmul.f32 %v552, 1.442695
    %v554 = vpow.pop %v553
    %v555 = vadd.f32 %v554, 1.0
    %v556 = vrcp.pop %v555
    %v557 = vmul.f32 1.0, %v556
    %v558 = vmul.f32 %v550, %v541
    %v559 = vadd.f32 %v402, %v558
    %v560 = vtanh.pop %v559
    %v561 = vsub.f32 1.0, %v557
    %v562 = vmul.f32 %v561, %v560
    %v563 = vmul.f32 %v557, %v398
    %v564 = vadd.f32 %v562, %v563
    %s565 = scalar_lea.vmem %s0, 72
    %v566 = vld [vmem:[%s565] sm:$0xff]
    %v567 = vld [vmem:[%s565 + $0x8] sm:$0xff]
    %v568 = vld [vmem:[%s565 + $0x10] sm:$0xff]
    %569 = vmatprep.subr.mxu0 %v17
    %570 = vmatpush1.msra.mxu0 %v16
    %571 = vmatprep.subr.mxu0 %v20
    %572 = vmatpush1.msra.mxu0 %v19
    %573 = vmatprep.subr.mxu0 %v23
    %574 = vmatpush1.msra.mxu0 %v22
    %575 = vmatprep.subr.mxu0 %v26
    %576 = vmatpush1.msra.mxu0 %v25
    %577 = vmatprep.subr.mxu0 %v29
    %578 = vmatpush1.msra.mxu0 %v28
    %579 = vmatprep.subr.mxu0 %v32
    %580 = vmatpush1.msra.mxu0 %v31
    %581 = vmatprep.subr.mxu0 %v35
    %582 = vmatpush1.msra.mxu0 %v34
    %583 = vmatprep.subr.mxu0 %v38
    %584 = vmatpush1.msra.mxu0 %v37
    %585 = vmatprep.subr.mxu0 %v41
    %586 = vmatpush1.msra.mxu0 %v40
    %587 = vmatprep.subr.mxu0 %v44
    %588 = vmatpush1.msra.mxu0 %v43
    %589 = vmatprep.subr.mxu0 %v47
    %590 = vmatpush1.msra.mxu0 %v46
    %591 = vmatprep.subr.mxu0 %v50
    %592 = vmatpush1.msra.mxu0 %v49
    %593 = vmatprep.subr.mxu0 %v53
    %594 = vmatpush1.msra.mxu0 %v52
    %595 = vmatprep.subr.mxu0 %v56
    %596 = vmatpush1.msra.mxu0 %v55
    %597 = vmatprep.subr.mxu0 %v59
    %598 = vmatpush1.msra.mxu0 %v58
    %599 = vmatprep.subr.mxu0 %v62
    %600 = vmatpush1.msra.mxu0 %v61
    %601 = vmatprep.subr.mxu0 0.0
    %602 = vmatpush1.msra.mxu0 0.0
    %603 = vmatprep.subr.mxu0 0.0
    %604 = vmatpush1.msra.mxu0 0.0
    %605 = vmatprep.subr.mxu0 0.0
    %606 = vmatpush1.msra.mxu0 0.0
    %607 = vmatprep.subr.mxu0 0.0
    %608 = vmatpush1.msra.mxu0 0.0
    %609 = vmatprep.subr.mxu0 0.0
    %610 = vmatpush1.msra.mxu0 0.0
    %611 = vmatprep.subr.mxu0 0.0
    %612 = vmatpush1.msra.mxu0 0.0
    %613 = vmatprep.subr.mxu0 0.0
    %614 = vmatpush1.msra.mxu0 0.0
    %615 = vmatprep.subr.mxu0 0.0
    %616 = vmatpush1.msra.mxu0 0.0
    %617 = vmatprep.subr.mxu0 0.0
    %618 = vmatpush1.msra.mxu0 0.0
    %619 = vmatprep.subr.mxu0 0.0
    %620 = vmatpush1.msra.mxu0 0.0
    %621 = vmatprep.subr.mxu0 0.0
    %622 = vmatpush1.msra.mxu0 0.0
    %623 = vmatprep.subr.mxu0 0.0
    %624 = vmatpush1.msra.mxu0 0.0
    %625 = vmatprep.subr.mxu0 0.0
    %626 = vmatpush1.msra.mxu0 0.0
    %627 = vmatprep.subr.mxu0 0.0
    %628 = vmatpush1.msra.mxu0 0.0
    %629 = vmatprep.subr.mxu0 0.0
    %630 = vmatpush1.msra.mxu0 0.0
    %631 = vmatprep.subr.mxu0 0.0
    %632 = vmatpush1.msra.mxu0 0.0
    %633 = vmatprep.mubr.f32.mxu0 0.0
    %634 = vmatmul.mubr.f32.gmra.mrb[0].mxu0 %v564
    %v635 = vpop.f32.mrb[0].mxu0
    %v636 = vadd.f32 0.0, %v635
    %v637 = vpop.f32.mrb[0].mxu0
    %v638 = vadd.f32 0.0, %v637
    %639 = vdwg.mxu0
    %640 = vmatprep.subr.mxu0 0.0
    %641 = vmatpush1.msra.mxu0 %v18
    %642 = vmatprep.subr.mxu0 0.0
    %643 = vmatpush1.msra.mxu0 %v21
    %644 = vmatprep.subr.mxu0 0.0
    %645 = vmatpush1.msra.mxu0 %v24
    %646 = vmatprep.subr.mxu0 0.0
    %647 = vmatpush1.msra.mxu0 %v27
    %648 = vmatprep.subr.mxu0 0.0
    %649 = vmatpush1.msra.mxu0 %v30
    %650 = vmatprep.subr.mxu0 0.0
    %651 = vmatpush1.msra.mxu0 %v33
    %652 = vmatprep.subr.mxu0 0.0
    %653 = vmatpush1.msra.mxu0 %v36
    %654 = vmatprep.subr.mxu0 0.0
    %655 = vmatpush1.msra.mxu0 %v39
    %656 = vmatprep.subr.mxu0 0.0
    %657 = vmatpush1.msra.mxu0 %v42
    %658 = vmatprep.subr.mxu0 0.0
    %659 = vmatpush1.msra.mxu0 %v45
    %660 = vmatprep.subr.mxu0 0.0
    %661 = vmatpush1.msra.mxu0 %v48
    %662 = vmatprep.subr.mxu0 0.0
    %663 = vmatpush1.msra.mxu0 %v51
    %664 = vmatprep.subr.mxu0 0.0
    %665 = vmatpush1.msra.mxu0 %v54
    %666 = vmatprep.subr.mxu0 0.0
    %667 = vmatpush1.msra.mxu0 %v57
    %668 = vmatprep.subr.mxu0 0.0
    %669 = vmatpush1.msra.mxu0 %v60
    %670 = vmatprep.subr.mxu0 0.0
    %671 = vmatpush1.msra.mxu0 %v63
    %672 = vmatprep.subr.mxu0 0.0
    %673 = vmatpush1.msra.mxu0 0.0
    %674 = vmatprep.subr.mxu0 0.0
    %675 = vmatpush1.msra.mxu0 0.0
    %676 = vmatprep.subr.mxu0 0.0
    %677 = vmatpush1.msra.mxu0 0.0
    %678 = vmatprep.subr.mxu0 0.0
    %679 = vmatpush1.msra.mxu0 0.0
    %680 = vmatprep.subr.mxu0 0.0
    %681 = vmatpush1.msra.mxu0 0.0
    %682 = vmatprep.subr.mxu0 0.0
    %683 = vmatpush1.msra.mxu0 0.0
    %684 = vmatprep.subr.mxu0 0.0
    %685 = vmatpush1.msra.mxu0 0.0
    %686 = vmatprep.subr.mxu0 0.0
    %687 = vmatpush1.msra.mxu0 0.0
    %688 = vmatprep.subr.mxu0 0.0
    %689 = vmatpush1.msra.mxu0 0.0
    %690 = vmatprep.subr.mxu0 0.0
    %691 = vmatpush1.msra.mxu0 0.0
    %692 = vmatprep.subr.mxu0 0.0
    %693 = vmatpush1.msra.mxu0 0.0
    %694 = vmatprep.subr.mxu0 0.0
    %695 = vmatpush1.msra.mxu0 0.0
    %696 = vmatprep.subr.mxu0 0.0
    %697 = vmatpush1.msra.mxu0 0.0
    %698 = vmatprep.subr.mxu0 0.0
    %699 = vmatpush1.msra.mxu0 0.0
    %700 = vmatprep.subr.mxu0 0.0
    %701 = vmatpush1.msra.mxu0 0.0
    %702 = vmatprep.subr.mxu0 0.0
    %703 = vmatpush1.msra.mxu0 0.0
    %704 = vmatprep.mubr.f32.mxu0 0.0
    %705 = vmatmul.mubr.f32.gmra.mrb[0].mxu0 %v564
    %v706 = vpop.f32.mrb[0].mxu0
    %v707 = vadd.f32 0.0, %v706
    %v708 = vpop.f32.mrb[0].mxu0
    %709 = vdwg.mxu0
    %v710 = vadd.f32 %v566, %v636
    %v711 = vxor.u32 %v710, 2147483648
    %v712 = vmul.f32 %v711, 1.442695
    %v713 = vpow.pop %v712
    %v714 = vadd.f32 %v713, 1.0
    %v715 = vrcp.pop %v714
    %v716 = vmul.f32 1.0, %v715
    %v717 = vadd.f32 %v567, %v638
    %v718 = vxor.u32 %v717, 2147483648
    %v719 = vmul.f32 %v718, 1.442695
    %v720 = vpow.pop %v719
    %v721 = vadd.f32 %v720, 1.0
    %v722 = vrcp.pop %v721
    %v723 = vmul.f32 1.0, %v722
    %v724 = vmul.f32 %v716, %v707
    %v725 = vadd.f32 %v568, %v724
    %v726 = vtanh.pop %v725
    %v727 = vsub.f32 1.0, %v723
    %v728 = vmul.f32 %v727, %v726
    %v729 = vmul.f32 %v723, %v564
    %v730 = vadd.f32 %v728, %v729
    %s731 = scalar_lea.vmem %s0, 96
    %v732 = vld [vmem:[%s731] sm:$0xff]
    %v733 = vld [vmem:[%s731 + $0x8] sm:$0xff]
    %v734 = vld [vmem:[%s731 + $0x10] sm:$0xff]
    %735 = vmatprep.subr.mxu0 %v17
    %736 = vmatpush1.msra.mxu0 %v16
    %737 = vmatprep.subr.mxu0 %v20
    %738 = vmatpush1.msra.mxu0 %v19
    %739 = vmatprep.subr.mxu0 %v23
    %740 = vmatpush1.msra.mxu0 %v22
    %741 = vmatprep.subr.mxu0 %v26
    %742 = vmatpush1.msra.mxu0 %v25
    %743 = vmatprep.subr.mxu0 %v29
    %744 = vmatpush1.msra.mxu0 %v28
    %745 = vmatprep.subr.mxu0 %v32
    %746 = vmatpush1.msra.mxu0 %v31
    %747 = vmatprep.subr.mxu0 %v35
    %748 = vmatpush1.msra.mxu0 %v34
    %749 = vmatprep.subr.mxu0 %v38
    %750 = vmatpush1.msra.mxu0 %v37
    %751 = vmatprep.subr.mxu0 %v41
    %752 = vmatpush1.msra.mxu0 %v40
    %753 = vmatprep.subr.mxu0 %v44
    %754 = vmatpush1.msra.mxu0 %v43
    %755 = vmatprep.subr.mxu0 %v47
    %756 = vmatpush1.msra.mxu0 %v46
    %757 = vmatprep.subr.mxu0 %v50
    %758 = vmatpush1.msra.mxu0 %v49
    %759 = vmatprep.subr.mxu0 %v53
    %760 = vmatpush1.msra.mxu0 %v52
    %761 = vmatprep.subr.mxu0 %v56
    %762 = vmatpush1.msra.mxu0 %v55
    %763 = vmatprep.subr.mxu0 %v59
    %764 = vmatpush1.msra.mxu0 %v58
    %765 = vmatprep.subr.mxu0 %v62
    %766 = vmatpush1.msra.mxu0 %v61
    %767 = vmatprep.subr.mxu0 0.0
    %768 = vmatpush1.msra.mxu0 0.0
    %769 = vmatprep.subr.mxu0 0.0
    %770 = vmatpush1.msra.mxu0 0.0
    %771 = vmatprep.subr.mxu0 0.0
    %772 = vmatpush1.msra.mxu0 0.0
    %773 = vmatprep.subr.mxu0 0.0
    %774 = vmatpush1.msra.mxu0 0.0
    %775 = vmatprep.subr.mxu0 0.0
    %776 = vmatpush1.msra.mxu0 0.0
    %777 = vmatprep.subr.mxu0 0.0
    %778 = vmatpush1.msra.mxu0 0.0
    %779 = vmatprep.subr.mxu0 0.0
    %780 = vmatpush1.msra.mxu0 0.0
    %781 = vmatprep.subr.mxu0 0.0
    %782 = vmatpush1.msra.mxu0 0.0
    %783 = vmatprep.subr.mxu0 0.0
    %784 = vmatpush1.msra.mxu0 0.0
    %785 = vmatprep.subr.mxu0 0.0
    %786 = vmatpush1.msra.mxu0 0.0
    %787 = vmatprep.subr.mxu0 0.0
    %788 = vmatpush1.msra.mxu0 0.0
    %789 = vmatprep.subr.mxu0 0.0
    %790 = vmatpush1.msra.mxu0 0.0
    %791 = vmatprep.subr.mxu0 0.0
    %792 = vmatpush1.msra.mxu0 0.0
    %793 = vmatprep.subr.mxu0 0.0
    %794 = vmatpush1.msra.mxu0 0.0
    %795 = vmatprep.subr.mxu0 0.0
    %796 = vmatpush1.msra.mxu0 0.0
    %797 = vmatprep.subr.mxu0 0.0
    %798 = vmatpush1.msra.mxu0 0.0
    %799 = vmatprep.mubr.f32.mxu0 0.0
    %800 = vmatmul.mubr.f32.gmra.mrb[0].mxu0 %v730
    %v801 = vpop.f32.mrb[0].mxu0
    %v802 = vadd.f32 0.0, %v801
    %v803 = vpop.f32.mrb[0].mxu0
    %v804 = vadd.f32 0.0, %v803
    %805 = vdwg.mxu0
    %806 = vmatprep.subr.mxu0 0.0
    %807 = vmatpush1.msra.mxu0 %v18
    %808 = vmatprep.subr.mxu0 0.0
    %809 = vmatpush1.msra.mxu0 %v21
    %810 = vmatprep.subr.mxu0 0.0
    %811 = vmatpush1.msra.mxu0 %v24
    %812 = vmatprep.subr.mxu0 0.0
    %813 = vmatpush1.msra.mxu0 %v27
    %814 = vmatprep.subr.mxu0 0.0
    %815 = vmatpush1.msra.mxu0 %v30
    %816 = vmatprep.subr.mxu0 0.0
    %817 = vmatpush1.msra.mxu0 %v33
    %818 = vmatprep.subr.mxu0 0.0
    %819 = vmatpush1.msra.mxu0 %v36
    %820 = vmatprep.subr.mxu0 0.0
    %821 = vmatpush1.msra.mxu0 %v39
    %822 = vmatprep.subr.mxu0 0.0
    %823 = vmatpush1.msra.mxu0 %v42
    %824 = vmatprep.subr.mxu0 0.0
    %825 = vmatpush1.msra.mxu0 %v45
    %826 = vmatprep.subr.mxu0 0.0
    %827 = vmatpush1.msra.mxu0 %v48
    %828 = vmatprep.subr.mxu0 0.0
    %829 = vmatpush1.msra.mxu0 %v51
    %830 = vmatprep.subr.mxu0 0.0
    %831 = vmatpush1.msra.mxu0 %v54
    %832 = vmatprep.subr.mxu0 0.0
    %833 = vmatpush1.msra.mxu0 %v57
    %834 = vmatprep.subr.mxu0 0.0
    %835 = vmatpush1.msra.mxu0 %v60
    %836 = vmatprep.subr.mxu0 0.0
    %837 = vmatpush1.msra.mxu0 %v63
    %838 = vmatprep.subr.mxu0 0.0
    %839 = vmatpush1.msra.mxu0 0.0
    %840 = vmatprep.subr.mxu0 0.0
    %841 = vmatpush1.msra.mxu0 0.0
    %842 = vmatprep.subr.mxu0 0.0
    %843 = vmatpush1.msra.mxu0 0.0
    %844 = vmatprep.subr.mxu0 0.0
    %845 = vmatpush1.msra.mxu0 0.0
    %846 = vmatprep.subr.mxu0 0.0
    %847 = vmatpush1.msra.mxu0 0.0
    %848 = vmatprep.subr.mxu0 0.0
    %849 = vmatpush1.msra.mxu0 0.0
    %850 = vmatprep.subr.mxu0 0.0
    %851 = vmatpush1.msra.mxu0 0.0
    %852 = vmatprep.subr.mxu0 0.0
    %853 = vmatpush1.msra.mxu0 0.0
    %854 = vmatprep.subr.mxu0 0.0
    %855 = vmatpush1.msra.mxu0 0.0
    %856 = vmatprep.subr.mxu0 0.0
    %857 = vmatpush1.msra.mxu0 0.0
    %858 = vmatprep.subr.mxu0 0.0
    %859 = vmatpush1.msra.mxu0 0.0
    %860 = vmatprep.subr.mxu0 0.0
    %861 = vmatpush1.msra.mxu0 0.0
    %862 = vmatprep.subr.mxu0 0.0
    %863 = vmatpush1.msra.mxu0 0.0
    %864 = vmatprep.subr.mxu0 0.0
    %865 = vmatpush1.msra.mxu0 0.0
    %866 = vmatprep.subr.mxu0 0.0
    %867 = vmatpush1.msra.mxu0 0.0
    %868 = vmatprep.subr.mxu0 0.0
    %869 = vmatpush1.msra.mxu0 0.0
    %870 = vmatprep.mubr.f32.mxu0 0.0
    %871 = vmatmul.mubr.f32.gmra.mrb[0].mxu0 %v730
    %v872 = vpop.f32.mrb[0].mxu0
    %v873 = vadd.f32 0.0, %v872
    %v874 = vpop.f32.mrb[0].mxu0
    %875 = vdwg.mxu0
    %v876 = vadd.f32 %v732, %v802
    %v877 = vxor.u32 %v876, 2147483648
    %v878 = vmul.f32 %v877, 1.442695
    %v879 = vpow.pop %v878
    %v880 = vadd.f32 %v879, 1.0
    %v881 = vrcp.pop %v880
    %v882 = vmul.f32 1.0, %v881
    %v883 = vadd.f32 %v733, %v804
    %v884 = vxor.u32 %v883, 2147483648
    %v885 = vmul.f32 %v884, 1.442695
    %v886 = vpow.pop %v885
    %v887 = vadd.f32 %v886, 1.0
    %v888 = vrcp.pop %v887
    %v889 = vmul.f32 1.0, %v888
    %v890 = vmul.f32 %v882, %v873
    %v891 = vadd.f32 %v734, %v890
    %v892 = vtanh.pop %v891
    %v893 = vsub.f32 1.0, %v889
    %v894 = vmul.f32 %v893, %v892
    %v895 = vmul.f32 %v889, %v730
    %v896 = vadd.f32 %v894, %v895
    %s897 = scalar_lea.vmem %s0, 120
    %v898 = vld [vmem:[%s897] sm:$0xff]
    %v899 = vld [vmem:[%s897 + $0x8] sm:$0xff]
    %v900 = vld [vmem:[%s897 + $0x10] sm:$0xff]
    %901 = vmatprep.subr.mxu0 %v17
    %902 = vmatpush1.msra.mxu0 %v16
    %903 = vmatprep.subr.mxu0 %v20
    %904 = vmatpush1.msra.mxu0 %v19
    %905 = vmatprep.subr.mxu0 %v23
    %906 = vmatpush1.msra.mxu0 %v22
    %907 = vmatprep.subr.mxu0 %v26
    %908 = vmatpush1.msra.mxu0 %v25
    %909 = vmatprep.subr.mxu0 %v29
    %910 = vmatpush1.msra.mxu0 %v28
    %911 = vmatprep.subr.mxu0 %v32
    %912 = vmatpush1.msra.mxu0 %v31
    %913 = vmatprep.subr.mxu0 %v35
    %914 = vmatpush1.msra.mxu0 %v34
    %915 = vmatprep.subr.mxu0 %v38
    %916 = vmatpush1.msra.mxu0 %v37
    %917 = vmatprep.subr.mxu0 %v41
    %918 = vmatpush1.msra.mxu0 %v40
    %919 = vmatprep.subr.mxu0 %v44
    %920 = vmatpush1.msra.mxu0 %v43
    %921 = vmatprep.subr.mxu0 %v47
    %922 = vmatpush1.msra.mxu0 %v46
    %923 = vmatprep.subr.mxu0 %v50
    %924 = vmatpush1.msra.mxu0 %v49
    %925 = vmatprep.subr.mxu0 %v53
    %926 = vmatpush1.msra.mxu0 %v52
    %927 = vmatprep.subr.mxu0 %v56
    %928 = vmatpush1.msra.mxu0 %v55
    %929 = vmatprep.subr.mxu0 %v59
    %930 = vmatpush1.msra.mxu0 %v58
    %931 = vmatprep.subr.mxu0 %v62
    %932 = vmatpush1.msra.mxu0 %v61
    %933 = vmatprep.subr.mxu0 0.0
    %934 = vmatpush1.msra.mxu0 0.0
    %935 = vmatprep.subr.mxu0 0.0
    %936 = vmatpush1.msra.mxu0 0.0
    %937 = vmatprep.subr.mxu0 0.0
    %938 = vmatpush1.msra.mxu0 0.0
    %939 = vmatprep.subr.mxu0 0.0
    %940 = vmatpush1.msra.mxu0 0.0
    %941 = vmatprep.subr.mxu0 0.0
    %942 = vmatpush1.msra.mxu0 0.0
    %943 = vmatprep.subr.mxu0 0.0
    %944 = vmatpush1.msra.mxu0 0.0
    %945 = vmatprep.subr.mxu0 0.0
    %946 = vmatpush1.msra.mxu0 0.0
    %947 = vmatprep.subr.mxu0 0.0
    %948 = vmatpush1.msra.mxu0 0.0
    %949 = vmatprep.subr.mxu0 0.0
    %950 = vmatpush1.msra.mxu0 0.0
    %951 = vmatprep.subr.mxu0 0.0
    %952 = vmatpush1.msra.mxu0 0.0
    %953 = vmatprep.subr.mxu0 0.0
    %954 = vmatpush1.msra.mxu0 0.0
    %955 = vmatprep.subr.mxu0 0.0
    %956 = vmatpush1.msra.mxu0 0.0
    %957 = vmatprep.subr.mxu0 0.0
    %958 = vmatpush1.msra.mxu0 0.0
    %959 = vmatprep.subr.mxu0 0.0
    %960 = vmatpush1.msra.mxu0 0.0
    %961 = vmatprep.subr.mxu0 0.0
    %962 = vmatpush1.msra.mxu0 0.0
    %963 = vmatprep.subr.mxu0 0.0
    %964 = vmatpush1.msra.mxu0 0.0
    %965 = vmatprep.mubr.f32.mxu0 0.0
    %966 = vmatmul.mubr.f32.gmra.mrb[0].mxu0 %v896
    %v967 = vpop.f32.mrb[0].mxu0
    %v968 = vadd.f32 0.0, %v967
    %v969 = vpop.f32.mrb[0].mxu0
    %v970 = vadd.f32 0.0, %v969
    %971 = vdwg.mxu0
    %972 = vmatprep.subr.mxu0 0.0
    %973 = vmatpush1.msra.mxu0 %v18
    %974 = vmatprep.subr.mxu0 0.0
    %975 = vmatpush1.msra.mxu0 %v21
    %976 = vmatprep.subr.mxu0 0.0
    %977 = vmatpush1.msra.mxu0 %v24
    %978 = vmatprep.subr.mxu0 0.0
    %979 = vmatpush1.msra.mxu0 %v27
    %980 = vmatprep.subr.mxu0 0.0
    %981 = vmatpush1.msra.mxu0 %v30
    %982 = vmatprep.subr.mxu0 0.0
    %983 = vmatpush1.msra.mxu0 %v33
    %984 = vmatprep.subr.mxu0 0.0
    %985 = vmatpush1.msra.mxu0 %v36
    %986 = vmatprep.subr.mxu0 0.0
    %987 = vmatpush1.msra.mxu0 %v39
    %988 = vmatprep.subr.mxu0 0.0
    %989 = vmatpush1.msra.mxu0 %v42
    %990 = vmatprep.subr.mxu0 0.0
    %991 = vmatpush1.msra.mxu0 %v45
    %992 = vmatprep.subr.mxu0 0.0
    %993 = vmatpush1.msra.mxu0 %v48
    %994 = vmatprep.subr.mxu0 0.0
    %995 = vmatpush1.msra.mxu0 %v51
    %996 = vmatprep.subr.mxu0 0.0
    %997 = vmatpush1.msra.mxu0 %v54
    %998 = vmatprep.subr.mxu0 0.0
    %999 = vmatpush1.msra.mxu0 %v57
    %1000 = vmatprep.subr.mxu0 0.0
    %1001 = vmatpush1.msra.mxu0 %v60
    %1002 = vmatprep.subr.mxu0 0.0
    %1003 = vmatpush1.msra.mxu0 %v63
    %1004 = vmatprep.subr.mxu0 0.0
    %1005 = vmatpush1.msra.mxu0 0.0
    %1006 = vmatprep.subr.mxu0 0.0
    %1007 = vmatpush1.msra.mxu0 0.0
    %1008 = vmatprep.subr.mxu0 0.0
    %1009 = vmatpush1.msra.mxu0 0.0
    %1010 = vmatprep.subr.mxu0 0.0
    %1011 = vmatpush1.msra.mxu0 0.0
    %1012 = vmatprep.subr.mxu0 0.0
    %1013 = vmatpush1.msra.mxu0 0.0
    %1014 = vmatprep.subr.mxu0 0.0
    %1015 = vmatpush1.msra.mxu0 0.0
    %1016 = vmatprep.subr.mxu0 0.0
    %1017 = vmatpush1.msra.mxu0 0.0
    %1018 = vmatprep.subr.mxu0 0.0
    %1019 = vmatpush1.msra.mxu0 0.0
    %1020 = vmatprep.subr.mxu0 0.0
    %1021 = vmatpush1.msra.mxu0 0.0
    %1022 = vmatprep.subr.mxu0 0.0
    %1023 = vmatpush1.msra.mxu0 0.0
    %1024 = vmatprep.subr.mxu0 0.0
    %1025 = vmatpush1.msra.mxu0 0.0
    %1026 = vmatprep.subr.mxu0 0.0
    %1027 = vmatpush1.msra.mxu0 0.0
    %1028 = vmatprep.subr.mxu0 0.0
    %1029 = vmatpush1.msra.mxu0 0.0
    %1030 = vmatprep.subr.mxu0 0.0
    %1031 = vmatpush1.msra.mxu0 0.0
    %1032 = vmatprep.subr.mxu0 0.0
    %1033 = vmatpush1.msra.mxu0 0.0
    %1034 = vmatprep.subr.mxu0 0.0
    %1035 = vmatpush1.msra.mxu0 0.0
    %1036 = vmatprep.mubr.f32.mxu0 0.0
    %1037 = vmatmul.mubr.f32.gmra.mrb[0].mxu0 %v896
    %v1038 = vpop.f32.mrb[0].mxu0
    %v1039 = vadd.f32 0.0, %v1038
    %v1040 = vpop.f32.mrb[0].mxu0
    %1041 = vdwg.mxu0
    %v1042 = vadd.f32 %v898, %v968
    %v1043 = vxor.u32 %v1042, 2147483648
    %v1044 = vmul.f32 %v1043, 1.442695
    %v1045 = vpow.pop %v1044
    %v1046 = vadd.f32 %v1045, 1.0
    %v1047 = vrcp.pop %v1046
    %v1048 = vmul.f32 1.0, %v1047
    %v1049 = vadd.f32 %v899, %v970
    %v1050 = vxor.u32 %v1049, 2147483648
    %v1051 = vmul.f32 %v1050, 1.442695
    %v1052 = vpow.pop %v1051
    %v1053 = vadd.f32 %v1052, 1.0
    %v1054 = vrcp.pop %v1053
    %v1055 = vmul.f32 1.0, %v1054
    %v1056 = vmul.f32 %v1048, %v1039
    %v1057 = vadd.f32 %v900, %v1056
    %v1058 = vtanh.pop %v1057
    %v1059 = vsub.f32 1.0, %v1055
    %v1060 = vmul.f32 %v1059, %v1058
    %v1061 = vmul.f32 %v1055, %v896
    %v1062 = vadd.f32 %v1060, %v1061
    %s1063 = scalar_lea.vmem %s0, 144
    %v1064 = vld [vmem:[%s1063] sm:$0xff]
    %v1065 = vld [vmem:[%s1063 + $0x8] sm:$0xff]
    %v1066 = vld [vmem:[%s1063 + $0x10] sm:$0xff]
    %1067 = vmatprep.subr.mxu0 %v17
    %1068 = vmatpush1.msra.mxu0 %v16
    %1069 = vmatprep.subr.mxu0 %v20
    %1070 = vmatpush1.msra.mxu0 %v19
    %1071 = vmatprep.subr.mxu0 %v23
    %1072 = vmatpush1.msra.mxu0 %v22
    %1073 = vmatprep.subr.mxu0 %v26
    %1074 = vmatpush1.msra.mxu0 %v25
    %1075 = vmatprep.subr.mxu0 %v29
    %1076 = vmatpush1.msra.mxu0 %v28
    %1077 = vmatprep.subr.mxu0 %v32
    %1078 = vmatpush1.msra.mxu0 %v31
    %1079 = vmatprep.subr.mxu0 %v35
    %1080 = vmatpush1.msra.mxu0 %v34
    %1081 = vmatprep.subr.mxu0 %v38
    %1082 = vmatpush1.msra.mxu0 %v37
    %1083 = vmatprep.subr.mxu0 %v41
    %1084 = vmatpush1.msra.mxu0 %v40
    %1085 = vmatprep.subr.mxu0 %v44
    %1086 = vmatpush1.msra.mxu0 %v43
    %1087 = vmatprep.subr.mxu0 %v47
    %1088 = vmatpush1.msra.mxu0 %v46
    %1089 = vmatprep.subr.mxu0 %v50
    %1090 = vmatpush1.msra.mxu0 %v49
    %1091 = vmatprep.subr.mxu0 %v53
    %1092 = vmatpush1.msra.mxu0 %v52
    %1093 = vmatprep.subr.mxu0 %v56
    %1094 = vmatpush1.msra.mxu0 %v55
    %1095 = vmatprep.subr.mxu0 %v59
    %1096 = vmatpush1.msra.mxu0 %v58
    %1097 = vmatprep.subr.mxu0 %v62
    %1098 = vmatpush1.msra.mxu0 %v61
    %1099 = vmatprep.subr.mxu0 0.0
    %1100 = vmatpush1.msra.mxu0 0.0
    %1101 = vmatprep.subr.mxu0 0.0
    %1102 = vmatpush1.msra.mxu0 0.0
    %1103 = vmatprep.subr.mxu0 0.0
    %1104 = vmatpush1.msra.mxu0 0.0
    %1105 = vmatprep.subr.mxu0 0.0
    %1106 = vmatpush1.msra.mxu0 0.0
    %1107 = vmatprep.subr.mxu0 0.0
    %1108 = vmatpush1.msra.mxu0 0.0
    %1109 = vmatprep.subr.mxu0 0.0
    %1110 = vmatpush1.msra.mxu0 0.0
    %1111 = vmatprep.subr.mxu0 0.0
    %1112 = vmatpush1.msra.mxu0 0.0
    %1113 = vmatprep.subr.mxu0 0.0
    %1114 = vmatpush1.msra.mxu0 0.0
    %1115 = vmatprep.subr.mxu0 0.0
    %1116 = vmatpush1.msra.mxu0 0.0
    %1117 = vmatprep.subr.mxu0 0.0
    %1118 = vmatpush1.msra.mxu0 0.0
    %1119 = vmatprep.subr.mxu0 0.0
    %1120 = vmatpush1.msra.mxu0 0.0
    %1121 = vmatprep.subr.mxu0 0.0
    %1122 = vmatpush1.msra.mxu0 0.0
    %1123 = vmatprep.subr.mxu0 0.0
    %1124 = vmatpush1.msra.mxu0 0.0
    %1125 = vmatprep.subr.mxu0 0.0
    %1126 = vmatpush1.msra.mxu0 0.0
    %1127 = vmatprep.subr.mxu0 0.0
    %1128 = vmatpush1.msra.mxu0 0.0
    %1129 = vmatprep.subr.mxu0 0.0
    %1130 = vmatpush1.msra.mxu0 0.0
    %1131 = vmatprep.mubr.f32.mxu0 0.0
    %1132 = vmatmul.mubr.f32.gmra.mrb[0].mxu0 %v1062
    %v1133 = vpop.f32.mrb[0].mxu0
    %v1134 = vadd.f32 0.0, %v1133
    %v1135 = vpop.f32.mrb[0].mxu0
    %v1136 = vadd.f32 0.0, %v1135
    %1137 = vdwg.mxu0
    %1138 = vmatprep.subr.mxu0 0.0
    %1139 = vmatpush1.msra.mxu0 %v18
    %1140 = vmatprep.subr.mxu0 0.0
    %1141 = vmatpush1.msra.mxu0 %v21
    %1142 = vmatprep.subr.mxu0 0.0
    %1143 = vmatpush1.msra.mxu0 %v24
    %1144 = vmatprep.subr.mxu0 0.0
    %1145 = vmatpush1.msra.mxu0 %v27
    %1146 = vmatprep.subr.mxu0 0.0
    %1147 = vmatpush1.msra.mxu0 %v30
    %1148 = vmatprep.subr.mxu0 0.0
    %1149 = vmatpush1.msra.mxu0 %v33
    %1150 = vmatprep.subr.mxu0 0.0
    %1151 = vmatpush1.msra.mxu0 %v36
    %1152 = vmatprep.subr.mxu0 0.0
    %1153 = vmatpush1.msra.mxu0 %v39
    %1154 = vmatprep.subr.mxu0 0.0
    %1155 = vmatpush1.msra.mxu0 %v42
    %1156 = vmatprep.subr.mxu0 0.0
    %1157 = vmatpush1.msra.mxu0 %v45
    %1158 = vmatprep.subr.mxu0 0.0
    %1159 = vmatpush1.msra.mxu0 %v48
    %1160 = vmatprep.subr.mxu0 0.0
    %1161 = vmatpush1.msra.mxu0 %v51
    %1162 = vmatprep.subr.mxu0 0.0
    %1163 = vmatpush1.msra.mxu0 %v54
    %1164 = vmatprep.subr.mxu0 0.0
    %1165 = vmatpush1.msra.mxu0 %v57
    %1166 = vmatprep.subr.mxu0 0.0
    %1167 = vmatpush1.msra.mxu0 %v60
    %1168 = vmatprep.subr.mxu0 0.0
    %1169 = vmatpush1.msra.mxu0 %v63
    %1170 = vmatprep.subr.mxu0 0.0
    %1171 = vmatpush1.msra.mxu0 0.0
    %1172 = vmatprep.subr.mxu0 0.0
    %1173 = vmatpush1.msra.mxu0 0.0
    %1174 = vmatprep.subr.mxu0 0.0
    %1175 = vmatpush1.msra.mxu0 0.0
    %1176 = vmatprep.subr.mxu0 0.0
    %1177 = vmatpush1.msra.mxu0 0.0
    %1178 = vmatprep.subr.mxu0 0.0
    %1179 = vmatpush1.msra.mxu0 0.0
    %1180 = vmatprep.subr.mxu0 0.0
    %1181 = vmatpush1.msra.mxu0 0.0
    %1182 = vmatprep.subr.mxu0 0.0
    %1183 = vmatpush1.msra.mxu0 0.0
    %1184 = vmatprep.subr.mxu0 0.0
    %1185 = vmatpush1.msra.mxu0 0.0
    %1186 = vmatprep.subr.mxu0 0.0
    %1187 = vmatpush1.msra.mxu0 0.0
    %1188 = vmatprep.subr.mxu0 0.0
    %1189 = vmatpush1.msra.mxu0 0.0
    %1190 = vmatprep.subr.mxu0 0.0
    %1191 = vmatpush1.msra.mxu0 0.0
    %1192 = vmatprep.subr.mxu0 0.0
    %1193 = vmatpush1.msra.mxu0 0.0
    %1194 = vmatprep.subr.mxu0 0.0
    %1195 = vmatpush1.msra.mxu0 0.0
    %1196 = vmatprep.subr.mxu0 0.0
    %1197 = vmatpush1.msra.mxu0 0.0
    %1198 = vmatprep.subr.mxu0 0.0
    %1199 = vmatpush1.msra.mxu0 0.0
    %1200 = vmatprep.subr.mxu0 0.0
    %1201 = vmatpush1.msra.mxu0 0.0
    %1202 = vmatprep.mubr.f32.mxu0 0.0
    %1203 = vmatmul.mubr.f32.gmra.mrb[0].mxu0 %v1062
    %v1204 = vpop.f32.mrb[0].mxu0
    %v1205 = vadd.f32 0.0, %v1204
    %v1206 = vpop.f32.mrb[0].mxu0
    %1207 = vdwg.mxu0
    %v1208 = vadd.f32 %v1064, %v1134
    %v1209 = vxor.u32 %v1208, 2147483648
    %v1210 = vmul.f32 %v1209, 1.442695
    %v1211 = vpow.pop %v1210
    %v1212 = vadd.f32 %v1211, 1.0
    %v1213 = vrcp.pop %v1212
    %v1214 = vmul.f32 1.0, %v1213
    %v1215 = vadd.f32 %v1065, %v1136
    %v1216 = vxor.u32 %v1215, 2147483648
    %v1217 = vmul.f32 %v1216, 1.442695
    %v1218 = vpow.pop %v1217
    %v1219 = vadd.f32 %v1218, 1.0
    %v1220 = vrcp.pop %v1219
    %v1221 = vmul.f32 1.0, %v1220
    %v1222 = vmul.f32 %v1214, %v1205
    %v1223 = vadd.f32 %v1066, %v1222
    %v1224 = vtanh.pop %v1223
    %v1225 = vsub.f32 1.0, %v1221
    %v1226 = vmul.f32 %v1225, %v1224
    %v1227 = vmul.f32 %v1221, %v1062
    %v1228 = vadd.f32 %v1226, %v1227
    %s1229 = scalar_lea.vmem %s0, 168
    %v1230 = vld [vmem:[%s1229] sm:$0xff]
    %v1231 = vld [vmem:[%s1229 + $0x8] sm:$0xff]
    %v1232 = vld [vmem:[%s1229 + $0x10] sm:$0xff]
    %1233 = vmatprep.subr.mxu0 %v17
    %1234 = vmatpush1.msra.mxu0 %v16
    %1235 = vmatprep.subr.mxu0 %v20
    %1236 = vmatpush1.msra.mxu0 %v19
    %1237 = vmatprep.subr.mxu0 %v23
    %1238 = vmatpush1.msra.mxu0 %v22
    %1239 = vmatprep.subr.mxu0 %v26
    %1240 = vmatpush1.msra.mxu0 %v25
    %1241 = vmatprep.subr.mxu0 %v29
    %1242 = vmatpush1.msra.mxu0 %v28
    %1243 = vmatprep.subr.mxu0 %v32
    %1244 = vmatpush1.msra.mxu0 %v31
    %1245 = vmatprep.subr.mxu0 %v35
    %1246 = vmatpush1.msra.mxu0 %v34
    %1247 = vmatprep.subr.mxu0 %v38
    %1248 = vmatpush1.msra.mxu0 %v37
    %1249 = vmatprep.subr.mxu0 %v41
    %1250 = vmatpush1.msra.mxu0 %v40
    %1251 = vmatprep.subr.mxu0 %v44
    %1252 = vmatpush1.msra.mxu0 %v43
    %1253 = vmatprep.subr.mxu0 %v47
    %1254 = vmatpush1.msra.mxu0 %v46
    %1255 = vmatprep.subr.mxu0 %v50
    %1256 = vmatpush1.msra.mxu0 %v49
    %1257 = vmatprep.subr.mxu0 %v53
    %1258 = vmatpush1.msra.mxu0 %v52
    %1259 = vmatprep.subr.mxu0 %v56
    %1260 = vmatpush1.msra.mxu0 %v55
    %1261 = vmatprep.subr.mxu0 %v59
    %1262 = vmatpush1.msra.mxu0 %v58
    %1263 = vmatprep.subr.mxu0 %v62
    %1264 = vmatpush1.msra.mxu0 %v61
    %1265 = vmatprep.subr.mxu0 0.0
    %1266 = vmatpush1.msra.mxu0 0.0
    %1267 = vmatprep.subr.mxu0 0.0
    %1268 = vmatpush1.msra.mxu0 0.0
    %1269 = vmatprep.subr.mxu0 0.0
    %1270 = vmatpush1.msra.mxu0 0.0
    %1271 = vmatprep.subr.mxu0 0.0
    %1272 = vmatpush1.msra.mxu0 0.0
    %1273 = vmatprep.subr.mxu0 0.0
    %1274 = vmatpush1.msra.mxu0 0.0
    %1275 = vmatprep.subr.mxu0 0.0
    %1276 = vmatpush1.msra.mxu0 0.0
    %1277 = vmatprep.subr.mxu0 0.0
    %1278 = vmatpush1.msra.mxu0 0.0
    %1279 = vmatprep.subr.mxu0 0.0
    %1280 = vmatpush1.msra.mxu0 0.0
    %1281 = vmatprep.subr.mxu0 0.0
    %1282 = vmatpush1.msra.mxu0 0.0
    %1283 = vmatprep.subr.mxu0 0.0
    %1284 = vmatpush1.msra.mxu0 0.0
    %1285 = vmatprep.subr.mxu0 0.0
    %1286 = vmatpush1.msra.mxu0 0.0
    %1287 = vmatprep.subr.mxu0 0.0
    %1288 = vmatpush1.msra.mxu0 0.0
    %1289 = vmatprep.subr.mxu0 0.0
    %1290 = vmatpush1.msra.mxu0 0.0
    %1291 = vmatprep.subr.mxu0 0.0
    %1292 = vmatpush1.msra.mxu0 0.0
    %1293 = vmatprep.subr.mxu0 0.0
    %1294 = vmatpush1.msra.mxu0 0.0
    %1295 = vmatprep.subr.mxu0 0.0
    %1296 = vmatpush1.msra.mxu0 0.0
    %1297 = vmatprep.mubr.f32.mxu0 0.0
    %1298 = vmatmul.mubr.f32.gmra.mrb[0].mxu0 %v1228
    %v1299 = vpop.f32.mrb[0].mxu0
    %v1300 = vadd.f32 0.0, %v1299
    %v1301 = vpop.f32.mrb[0].mxu0
    %v1302 = vadd.f32 0.0, %v1301
    %1303 = vdwg.mxu0
    %1304 = vmatprep.subr.mxu0 0.0
    %1305 = vmatpush1.msra.mxu0 %v18
    %1306 = vmatprep.subr.mxu0 0.0
    %1307 = vmatpush1.msra.mxu0 %v21
    %1308 = vmatprep.subr.mxu0 0.0
    %1309 = vmatpush1.msra.mxu0 %v24
    %1310 = vmatprep.subr.mxu0 0.0
    %1311 = vmatpush1.msra.mxu0 %v27
    %1312 = vmatprep.subr.mxu0 0.0
    %1313 = vmatpush1.msra.mxu0 %v30
    %1314 = vmatprep.subr.mxu0 0.0
    %1315 = vmatpush1.msra.mxu0 %v33
    %1316 = vmatprep.subr.mxu0 0.0
    %1317 = vmatpush1.msra.mxu0 %v36
    %1318 = vmatprep.subr.mxu0 0.0
    %1319 = vmatpush1.msra.mxu0 %v39
    %1320 = vmatprep.subr.mxu0 0.0
    %1321 = vmatpush1.msra.mxu0 %v42
    %1322 = vmatprep.subr.mxu0 0.0
    %1323 = vmatpush1.msra.mxu0 %v45
    %1324 = vmatprep.subr.mxu0 0.0
    %1325 = vmatpush1.msra.mxu0 %v48
    %1326 = vmatprep.subr.mxu0 0.0
    %1327 = vmatpush1.msra.mxu0 %v51
    %1328 = vmatprep.subr.mxu0 0.0
    %1329 = vmatpush1.msra.mxu0 %v54
    %1330 = vmatprep.subr.mxu0 0.0
    %1331 = vmatpush1.msra.mxu0 %v57
    %1332 = vmatprep.subr.mxu0 0.0
    %1333 = vmatpush1.msra.mxu0 %v60
    %1334 = vmatprep.subr.mxu0 0.0
    %1335 = vmatpush1.msra.mxu0 %v63
    %1336 = vmatprep.subr.mxu0 0.0
    %1337 = vmatpush1.msra.mxu0 0.0
    %1338 = vmatprep.subr.mxu0 0.0
    %1339 = vmatpush1.msra.mxu0 0.0
    %1340 = vmatprep.subr.mxu0 0.0
    %1341 = vmatpush1.msra.mxu0 0.0
    %1342 = vmatprep.subr.mxu0 0.0
    %1343 = vmatpush1.msra.mxu0 0.0
    %1344 = vmatprep.subr.mxu0 0.0
    %1345 = vmatpush1.msra.mxu0 0.0
    %1346 = vmatprep.subr.mxu0 0.0
    %1347 = vmatpush1.msra.mxu0 0.0
    %1348 = vmatprep.subr.mxu0 0.0
    %1349 = vmatpush1.msra.mxu0 0.0
    %1350 = vmatprep.subr.mxu0 0.0
    %1351 = vmatpush1.msra.mxu0 0.0
    %1352 = vmatprep.subr.mxu0 0.0
    %1353 = vmatpush1.msra.mxu0 0.0
    %1354 = vmatprep.subr.mxu0 0.0
    %1355 = vmatpush1.msra.mxu0 0.0
    %1356 = vmatprep.subr.mxu0 0.0
    %1357 = vmatpush1.msra.mxu0 0.0
    %1358 = vmatprep.subr.mxu0 0.0
    %1359 = vmatpush1.msra.mxu0 0.0
    %1360 = vmatprep.subr.mxu0 0.0
    %1361 = vmatpush1.msra.mxu0 0.0
    %1362 = vmatprep.subr.mxu0 0.0
    %1363 = vmatpush1.msra.mxu0 0.0
    %1364 = vmatprep.subr.mxu0 0.0
    %1365 = vmatpush1.msra.mxu0 0.0
    %1366 = vmatprep.subr.mxu0 0.0
    %1367 = vmatpush1.msra.mxu0 0.0
    %1368 = vmatprep.mubr.f32.mxu0 0.0
    %1369 = vmatmul.mubr.f32.gmra.mrb[0].mxu0 %v1228
    %v1370 = vpop.f32.mrb[0].mxu0
    %v1371 = vadd.f32 0.0, %v1370
    %v1372 = vpop.f32.mrb[0].mxu0
    %1373 = vdwg.mxu0
    %v1374 = vadd.f32 %v1230, %v1300
    %v1375 = vxor.u32 %v1374, 2147483648
    %v1376 = vmul.f32 %v1375, 1.442695
    %v1377 = vpow.pop %v1376
    %v1378 = vadd.f32 %v1377, 1.0
    %v1379 = vrcp.pop %v1378
    %v1380 = vmul.f32 1.0, %v1379
    %v1381 = vadd.f32 %v1231, %v1302
    %v1382 = vxor.u32 %v1381, 2147483648
    %v1383 = vmul.f32 %v1382, 1.442695
    %v1384 = vpow.pop %v1383
    %v1385 = vadd.f32 %v1384, 1.0
    %v1386 = vrcp.pop %v1385
    %v1387 = vmul.f32 1.0, %v1386
    %v1388 = vmul.f32 %v1380, %v1371
    %v1389 = vadd.f32 %v1232, %v1388
    %v1390 = vtanh.pop %v1389
    %v1391 = vsub.f32 1.0, %v1387
    %v1392 = vmul.f32 %v1391, %v1390
    %v1393 = vmul.f32 %v1387, %v1228
    %v1394 = vadd.f32 %v1392, %v1393
    %s1395 = scalar_lea.vmem %s0, 192
    %v1396 = vld [vmem:[%s1395] sm:$0xff]
    %v1397 = vld [vmem:[%s1395 + $0x8] sm:$0xff]
    %v1398 = vld [vmem:[%s1395 + $0x10] sm:$0xff]
    %1399 = vmatprep.subr.mxu0 %v17
    %1400 = vmatpush1.msra.mxu0 %v16
    %1401 = vmatprep.subr.mxu0 %v20
    %1402 = vmatpush1.msra.mxu0 %v19
    %1403 = vmatprep.subr.mxu0 %v23
    %1404 = vmatpush1.msra.mxu0 %v22
    %1405 = vmatprep.subr.mxu0 %v26
    %1406 = vmatpush1.msra.mxu0 %v25
    %1407 = vmatprep.subr.mxu0 %v29
    %1408 = vmatpush1.msra.mxu0 %v28
    %1409 = vmatprep.subr.mxu0 %v32
    %1410 = vmatpush1.msra.mxu0 %v31
    %1411 = vmatprep.subr.mxu0 %v35
    %1412 = vmatpush1.msra.mxu0 %v34
    %1413 = vmatprep.subr.mxu0 %v38
    %1414 = vmatpush1.msra.mxu0 %v37
    %1415 = vmatprep.subr.mxu0 %v41
    %1416 = vmatpush1.msra.mxu0 %v40
    %1417 = vmatprep.subr.mxu0 %v44
    %1418 = vmatpush1.msra.mxu0 %v43
    %1419 = vmatprep.subr.mxu0 %v47
    %1420 = vmatpush1.msra.mxu0 %v46
    %1421 = vmatprep.subr.mxu0 %v50
    %1422 = vmatpush1.msra.mxu0 %v49
    %1423 = vmatprep.subr.mxu0 %v53
    %1424 = vmatpush1.msra.mxu0 %v52
    %1425 = vmatprep.subr.mxu0 %v56
    %1426 = vmatpush1.msra.mxu0 %v55
    %1427 = vmatprep.subr.mxu0 %v59
    %1428 = vmatpush1.msra.mxu0 %v58
    %1429 = vmatprep.subr.mxu0 %v62
    %1430 = vmatpush1.msra.mxu0 %v61
    %1431 = vmatprep.subr.mxu0 0.0
    %1432 = vmatpush1.msra.mxu0 0.0
    %1433 = vmatprep.subr.mxu0 0.0
    %1434 = vmatpush1.msra.mxu0 0.0
    %1435 = vmatprep.subr.mxu0 0.0
    %1436 = vmatpush1.msra.mxu0 0.0
    %1437 = vmatprep.subr.mxu0 0.0
    %1438 = vmatpush1.msra.mxu0 0.0
    %1439 = vmatprep.subr.mxu0 0.0
    %1440 = vmatpush1.msra.mxu0 0.0
    %1441 = vmatprep.subr.mxu0 0.0
    %1442 = vmatpush1.msra.mxu0 0.0
    %1443 = vmatprep.subr.mxu0 0.0
    %1444 = vmatpush1.msra.mxu0 0.0
    %1445 = vmatprep.subr.mxu0 0.0
    %1446 = vmatpush1.msra.mxu0 0.0
    %1447 = vmatprep.subr.mxu0 0.0
    %1448 = vmatpush1.msra.mxu0 0.0
    %1449 = vmatprep.subr.mxu0 0.0
    %1450 = vmatpush1.msra.mxu0 0.0
    %1451 = vmatprep.subr.mxu0 0.0
    %1452 = vmatpush1.msra.mxu0 0.0
    %1453 = vmatprep.subr.mxu0 0.0
    %1454 = vmatpush1.msra.mxu0 0.0
    %1455 = vmatprep.subr.mxu0 0.0
    %1456 = vmatpush1.msra.mxu0 0.0
    %1457 = vmatprep.subr.mxu0 0.0
    %1458 = vmatpush1.msra.mxu0 0.0
    %1459 = vmatprep.subr.mxu0 0.0
    %1460 = vmatpush1.msra.mxu0 0.0
    %1461 = vmatprep.subr.mxu0 0.0
    %1462 = vmatpush1.msra.mxu0 0.0
    %1463 = vmatprep.mubr.f32.mxu0 0.0
    %1464 = vmatmul.mubr.f32.gmra.mrb[0].mxu0 %v1394
    %v1465 = vpop.f32.mrb[0].mxu0
    %v1466 = vadd.f32 0.0, %v1465
    %v1467 = vpop.f32.mrb[0].mxu0
    %v1468 = vadd.f32 0.0, %v1467
    %1469 = vdwg.mxu0
    %1470 = vmatprep.subr.mxu0 0.0
    %1471 = vmatpush1.msra.mxu0 %v18
    %1472 = vmatprep.subr.mxu0 0.0
    %1473 = vmatpush1.msra.mxu0 %v21
    %1474 = vmatprep.subr.mxu0 0.0
    %1475 = vmatpush1.msra.mxu0 %v24
    %1476 = vmatprep.subr.mxu0 0.0
    %1477 = vmatpush1.msra.mxu0 %v27
    %1478 = vmatprep.subr.mxu0 0.0
    %1479 = vmatpush1.msra.mxu0 %v30
    %1480 = vmatprep.subr.mxu0 0.0
    %1481 = vmatpush1.msra.mxu0 %v33
    %1482 = vmatprep.subr.mxu0 0.0
    %1483 = vmatpush1.msra.mxu0 %v36
    %1484 = vmatprep.subr.mxu0 0.0
    %1485 = vmatpush1.msra.mxu0 %v39
    %1486 = vmatprep.subr.mxu0 0.0
    %1487 = vmatpush1.msra.mxu0 %v42
    %1488 = vmatprep.subr.mxu0 0.0
    %1489 = vmatpush1.msra.mxu0 %v45
    %1490 = vmatprep.subr.mxu0 0.0
    %1491 = vmatpush1.msra.mxu0 %v48
    %1492 = vmatprep.subr.mxu0 0.0
    %1493 = vmatpush1.msra.mxu0 %v51
    %1494 = vmatprep.subr.mxu0 0.0
    %1495 = vmatpush1.msra.mxu0 %v54
    %1496 = vmatprep.subr.mxu0 0.0
    %1497 = vmatpush1.msra.mxu0 %v57
    %1498 = vmatprep.subr.mxu0 0.0
    %1499 = vmatpush1.msra.mxu0 %v60
    %1500 = vmatprep.subr.mxu0 0.0
    %1501 = vmatpush1.msra.mxu0 %v63
    %1502 = vmatprep.subr.mxu0 0.0
    %1503 = vmatpush1.msra.mxu0 0.0
    %1504 = vmatprep.subr.mxu0 0.0
    %1505 = vmatpush1.msra.mxu0 0.0
    %1506 = vmatprep.subr.mxu0 0.0
    %1507 = vmatpush1.msra.mxu0 0.0
    %1508 = vmatprep.subr.mxu0 0.0
    %1509 = vmatpush1.msra.mxu0 0.0
    %1510 = vmatprep.subr.mxu0 0.0
    %1511 = vmatpush1.msra.mxu0 0.0
    %1512 = vmatprep.subr.mxu0 0.0
    %1513 = vmatpush1.msra.mxu0 0.0
    %1514 = vmatprep.subr.mxu0 0.0
    %1515 = vmatpush1.msra.mxu0 0.0
    %1516 = vmatprep.subr.mxu0 0.0
    %1517 = vmatpush1.msra.mxu0 0.0
    %1518 = vmatprep.subr.mxu0 0.0
    %1519 = vmatpush1.msra.mxu0 0.0
    %1520 = vmatprep.subr.mxu0 0.0
    %1521 = vmatpush1.msra.mxu0 0.0
    %1522 = vmatprep.subr.mxu0 0.0
    %1523 = vmatpush1.msra.mxu0 0.0
    %1524 = vmatprep.subr.mxu0 0.0
    %1525 = vmatpush1.msra.mxu0 0.0
    %1526 = vmatprep.subr.mxu0 0.0
    %1527 = vmatpush1.msra.mxu0 0.0
    %1528 = vmatprep.subr.mxu0 0.0
    %1529 = vmatpush1.msra.mxu0 0.0
    %1530 = vmatprep.subr.mxu0 0.0
    %1531 = vmatpush1.msra.mxu0 0.0
    %1532 = vmatprep.subr.mxu0 0.0
    %1533 = vmatpush1.msra.mxu0 0.0
    %1534 = vmatprep.mubr.f32.mxu0 0.0
    %1535 = vmatmul.mubr.f32.gmra.mrb[0].mxu0 %v1394
    %v1536 = vpop.f32.mrb[0].mxu0
    %v1537 = vadd.f32 0.0, %v1536
    %v1538 = vpop.f32.mrb[0].mxu0
    %1539 = vdwg.mxu0
    %v1540 = vadd.f32 %v1396, %v1466
    %v1541 = vxor.u32 %v1540, 2147483648
    %v1542 = vmul.f32 %v1541, 1.442695
    %v1543 = vpow.pop %v1542
    %v1544 = vadd.f32 %v1543, 1.0
    %v1545 = vrcp.pop %v1544
    %v1546 = vmul.f32 1.0, %v1545
    %v1547 = vadd.f32 %v1397, %v1468
    %v1548 = vxor.u32 %v1547, 2147483648
    %v1549 = vmul.f32 %v1548, 1.442695
    %v1550 = vpow.pop %v1549
    %v1551 = vadd.f32 %v1550, 1.0
    %v1552 = vrcp.pop %v1551
    %v1553 = vmul.f32 1.0, %v1552
    %v1554 = vmul.f32 %v1546, %v1537
    %v1555 = vadd.f32 %v1398, %v1554
    %v1556 = vtanh.pop %v1555
    %v1557 = vsub.f32 1.0, %v1553
    %v1558 = vmul.f32 %v1557, %v1556
    %v1559 = vmul.f32 %v1553, %v1394
    %v1560 = vadd.f32 %v1558, %v1559
    %s1561 = scalar_lea.vmem %s0, 216
    %v1562 = vld [vmem:[%s1561] sm:$0xff]
    %v1563 = vld [vmem:[%s1561 + $0x8] sm:$0xff]
    %v1564 = vld [vmem:[%s1561 + $0x10] sm:$0xff]
    %1565 = vmatprep.subr.mxu0 %v17
    %1566 = vmatpush1.msra.mxu0 %v16
    %1567 = vmatprep.subr.mxu0 %v20
    %1568 = vmatpush1.msra.mxu0 %v19
    %1569 = vmatprep.subr.mxu0 %v23
    %1570 = vmatpush1.msra.mxu0 %v22
    %1571 = vmatprep.subr.mxu0 %v26
    %1572 = vmatpush1.msra.mxu0 %v25
    %1573 = vmatprep.subr.mxu0 %v29
    %1574 = vmatpush1.msra.mxu0 %v28
    %1575 = vmatprep.subr.mxu0 %v32
    %1576 = vmatpush1.msra.mxu0 %v31
    %1577 = vmatprep.subr.mxu0 %v35
    %1578 = vmatpush1.msra.mxu0 %v34
    %1579 = vmatprep.subr.mxu0 %v38
    %1580 = vmatpush1.msra.mxu0 %v37
    %1581 = vmatprep.subr.mxu0 %v41
    %1582 = vmatpush1.msra.mxu0 %v40
    %1583 = vmatprep.subr.mxu0 %v44
    %1584 = vmatpush1.msra.mxu0 %v43
    %1585 = vmatprep.subr.mxu0 %v47
    %1586 = vmatpush1.msra.mxu0 %v46
    %1587 = vmatprep.subr.mxu0 %v50
    %1588 = vmatpush1.msra.mxu0 %v49
    %1589 = vmatprep.subr.mxu0 %v53
    %1590 = vmatpush1.msra.mxu0 %v52
    %1591 = vmatprep.subr.mxu0 %v56
    %1592 = vmatpush1.msra.mxu0 %v55
    %1593 = vmatprep.subr.mxu0 %v59
    %1594 = vmatpush1.msra.mxu0 %v58
    %1595 = vmatprep.subr.mxu0 %v62
    %1596 = vmatpush1.msra.mxu0 %v61
    %1597 = vmatprep.subr.mxu0 0.0
    %1598 = vmatpush1.msra.mxu0 0.0
    %1599 = vmatprep.subr.mxu0 0.0
    %1600 = vmatpush1.msra.mxu0 0.0
    %1601 = vmatprep.subr.mxu0 0.0
    %1602 = vmatpush1.msra.mxu0 0.0
    %1603 = vmatprep.subr.mxu0 0.0
    %1604 = vmatpush1.msra.mxu0 0.0
    %1605 = vmatprep.subr.mxu0 0.0
    %1606 = vmatpush1.msra.mxu0 0.0
    %1607 = vmatprep.subr.mxu0 0.0
    %1608 = vmatpush1.msra.mxu0 0.0
    %1609 = vmatprep.subr.mxu0 0.0
    %1610 = vmatpush1.msra.mxu0 0.0
    %1611 = vmatprep.subr.mxu0 0.0
    %1612 = vmatpush1.msra.mxu0 0.0
    %1613 = vmatprep.subr.mxu0 0.0
    %1614 = vmatpush1.msra.mxu0 0.0
    %1615 = vmatprep.subr.mxu0 0.0
    %1616 = vmatpush1.msra.mxu0 0.0
    %1617 = vmatprep.subr.mxu0 0.0
    %1618 = vmatpush1.msra.mxu0 0.0
    %1619 = vmatprep.subr.mxu0 0.0
    %1620 = vmatpush1.msra.mxu0 0.0
    %1621 = vmatprep.subr.mxu0 0.0
    %1622 = vmatpush1.msra.mxu0 0.0
    %1623 = vmatprep.subr.mxu0 0.0
    %1624 = vmatpush1.msra.mxu0 0.0
    %1625 = vmatprep.subr.mxu0 0.0
    %1626 = vmatpush1.msra.mxu0 0.0
    %1627 = vmatprep.subr.mxu0 0.0
    %1628 = vmatpush1.msra.mxu0 0.0
    %1629 = vmatprep.mubr.f32.mxu0 0.0
    %1630 = vmatmul.mubr.f32.gmra.mrb[0].mxu0 %v1560
    %v1631 = vpop.f32.mrb[0].mxu0
    %v1632 = vadd.f32 0.0, %v1631
    %v1633 = vpop.f32.mrb[0].mxu0
    %v1634 = vadd.f32 0.0, %v1633
    %1635 = vdwg.mxu0
    %1636 = vmatprep.subr.mxu0 0.0
    %1637 = vmatpush1.msra.mxu0 %v18
    %1638 = vmatprep.subr.mxu0 0.0
    %1639 = vmatpush1.msra.mxu0 %v21
    %1640 = vmatprep.subr.mxu0 0.0
    %1641 = vmatpush1.msra.mxu0 %v24
    %1642 = vmatprep.subr.mxu0 0.0
    %1643 = vmatpush1.msra.mxu0 %v27
    %1644 = vmatprep.subr.mxu0 0.0
    %1645 = vmatpush1.msra.mxu0 %v30
    %1646 = vmatprep.subr.mxu0 0.0
    %1647 = vmatpush1.msra.mxu0 %v33
    %1648 = vmatprep.subr.mxu0 0.0
    %1649 = vmatpush1.msra.mxu0 %v36
    %1650 = vmatprep.subr.mxu0 0.0
    %1651 = vmatpush1.msra.mxu0 %v39
    %1652 = vmatprep.subr.mxu0 0.0
    %1653 = vmatpush1.msra.mxu0 %v42
    %1654 = vmatprep.subr.mxu0 0.0
    %1655 = vmatpush1.msra.mxu0 %v45
    %1656 = vmatprep.subr.mxu0 0.0
    %1657 = vmatpush1.msra.mxu0 %v48
    %1658 = vmatprep.subr.mxu0 0.0
    %1659 = vmatpush1.msra.mxu0 %v51
    %1660 = vmatprep.subr.mxu0 0.0
    %1661 = vmatpush1.msra.mxu0 %v54
    %1662 = vmatprep.subr.mxu0 0.0
    %1663 = vmatpush1.msra.mxu0 %v57
    %1664 = vmatprep.subr.mxu0 0.0
    %1665 = vmatpush1.msra.mxu0 %v60
    %1666 = vmatprep.subr.mxu0 0.0
    %1667 = vmatpush1.msra.mxu0 %v63
    %1668 = vmatprep.subr.mxu0 0.0
    %1669 = vmatpush1.msra.mxu0 0.0
    %1670 = vmatprep.subr.mxu0 0.0
    %1671 = vmatpush1.msra.mxu0 0.0
    %1672 = vmatprep.subr.mxu0 0.0
    %1673 = vmatpush1.msra.mxu0 0.0
    %1674 = vmatprep.subr.mxu0 0.0
    %1675 = vmatpush1.msra.mxu0 0.0
    %1676 = vmatprep.subr.mxu0 0.0
    %1677 = vmatpush1.msra.mxu0 0.0
    %1678 = vmatprep.subr.mxu0 0.0
    %1679 = vmatpush1.msra.mxu0 0.0
    %1680 = vmatprep.subr.mxu0 0.0
    %1681 = vmatpush1.msra.mxu0 0.0
    %1682 = vmatprep.subr.mxu0 0.0
    %1683 = vmatpush1.msra.mxu0 0.0
    %1684 = vmatprep.subr.mxu0 0.0
    %1685 = vmatpush1.msra.mxu0 0.0
    %1686 = vmatprep.subr.mxu0 0.0
    %1687 = vmatpush1.msra.mxu0 0.0
    %1688 = vmatprep.subr.mxu0 0.0
    %1689 = vmatpush1.msra.mxu0 0.0
    %1690 = vmatprep.subr.mxu0 0.0
    %1691 = vmatpush1.msra.mxu0 0.0
    %1692 = vmatprep.subr.mxu0 0.0
    %1693 = vmatpush1.msra.mxu0 0.0
    %1694 = vmatprep.subr.mxu0 0.0
    %1695 = vmatpush1.msra.mxu0 0.0
    %1696 = vmatprep.subr.mxu0 0.0
    %1697 = vmatpush1.msra.mxu0 0.0
    %1698 = vmatprep.subr.mxu0 0.0
    %1699 = vmatpush1.msra.mxu0 0.0
    %1700 = vmatprep.mubr.f32.mxu0 0.0
    %1701 = vmatmul.mubr.f32.gmra.mrb[0].mxu0 %v1560
    %v1702 = vpop.f32.mrb[0].mxu0
    %v1703 = vadd.f32 0.0, %v1702
    %v1704 = vpop.f32.mrb[0].mxu0
    %1705 = vdwg.mxu0
    %v1706 = vadd.f32 %v1562, %v1632
    %v1707 = vxor.u32 %v1706, 2147483648
    %v1708 = vmul.f32 %v1707, 1.442695
    %v1709 = vpow.pop %v1708
    %v1710 = vadd.f32 %v1709, 1.0
    %v1711 = vrcp.pop %v1710
    %v1712 = vmul.f32 1.0, %v1711
    %v1713 = vadd.f32 %v1563, %v1634
    %v1714 = vxor.u32 %v1713, 2147483648
    %v1715 = vmul.f32 %v1714, 1.442695
    %v1716 = vpow.pop %v1715
    %v1717 = vadd.f32 %v1716, 1.0
    %v1718 = vrcp.pop %v1717
    %v1719 = vmul.f32 1.0, %v1718
    %v1720 = vmul.f32 %v1712, %v1703
    %v1721 = vadd.f32 %v1564, %v1720
    %v1722 = vtanh.pop %v1721
    %v1723 = vsub.f32 1.0, %v1719
    %v1724 = vmul.f32 %v1723, %v1722
    %v1725 = vmul.f32 %v1719, %v1560
    %v1726 = vadd.f32 %v1724, %v1725
    %s1727 = scalar_lea.vmem %s0, 240
    %v1728 = vld [vmem:[%s1727] sm:$0xff]
    %v1729 = vld [vmem:[%s1727 + $0x8] sm:$0xff]
    %v1730 = vld [vmem:[%s1727 + $0x10] sm:$0xff]
    %1731 = vmatprep.subr.mxu0 %v17
    %1732 = vmatpush1.msra.mxu0 %v16
    %1733 = vmatprep.subr.mxu0 %v20
    %1734 = vmatpush1.msra.mxu0 %v19
    %1735 = vmatprep.subr.mxu0 %v23
    %1736 = vmatpush1.msra.mxu0 %v22
    %1737 = vmatprep.subr.mxu0 %v26
    %1738 = vmatpush1.msra.mxu0 %v25
    %1739 = vmatprep.subr.mxu0 %v29
    %1740 = vmatpush1.msra.mxu0 %v28
    %1741 = vmatprep.subr.mxu0 %v32
    %1742 = vmatpush1.msra.mxu0 %v31
    %1743 = vmatprep.subr.mxu0 %v35
    %1744 = vmatpush1.msra.mxu0 %v34
    %1745 = vmatprep.subr.mxu0 %v38
    %1746 = vmatpush1.msra.mxu0 %v37
    %1747 = vmatprep.subr.mxu0 %v41
    %1748 = vmatpush1.msra.mxu0 %v40
    %1749 = vmatprep.subr.mxu0 %v44
    %1750 = vmatpush1.msra.mxu0 %v43
    %1751 = vmatprep.subr.mxu0 %v47
    %1752 = vmatpush1.msra.mxu0 %v46
    %1753 = vmatprep.subr.mxu0 %v50
    %1754 = vmatpush1.msra.mxu0 %v49
    %1755 = vmatprep.subr.mxu0 %v53
    %1756 = vmatpush1.msra.mxu0 %v52
    %1757 = vmatprep.subr.mxu0 %v56
    %1758 = vmatpush1.msra.mxu0 %v55
    %1759 = vmatprep.subr.mxu0 %v59
    %1760 = vmatpush1.msra.mxu0 %v58
    %1761 = vmatprep.subr.mxu0 %v62
    %1762 = vmatpush1.msra.mxu0 %v61
    %1763 = vmatprep.subr.mxu0 0.0
    %1764 = vmatpush1.msra.mxu0 0.0
    %1765 = vmatprep.subr.mxu0 0.0
    %1766 = vmatpush1.msra.mxu0 0.0
    %1767 = vmatprep.subr.mxu0 0.0
    %1768 = vmatpush1.msra.mxu0 0.0
    %1769 = vmatprep.subr.mxu0 0.0
    %1770 = vmatpush1.msra.mxu0 0.0
    %1771 = vmatprep.subr.mxu0 0.0
    %1772 = vmatpush1.msra.mxu0 0.0
    %1773 = vmatprep.subr.mxu0 0.0
    %1774 = vmatpush1.msra.mxu0 0.0
    %1775 = vmatprep.subr.mxu0 0.0
    %1776 = vmatpush1.msra.mxu0 0.0
    %1777 = vmatprep.subr.mxu0 0.0
    %1778 = vmatpush1.msra.mxu0 0.0
    %1779 = vmatprep.subr.mxu0 0.0
    %1780 = vmatpush1.msra.mxu0 0.0
    %1781 = vmatprep.subr.mxu0 0.0
    %1782 = vmatpush1.msra.mxu0 0.0
    %1783 = vmatprep.subr.mxu0 0.0
    %1784 = vmatpush1.msra.mxu0 0.0
    %1785 = vmatprep.subr.mxu0 0.0
    %1786 = vmatpush1.msra.mxu0 0.0
    %1787 = vmatprep.subr.mxu0 0.0
    %1788 = vmatpush1.msra.mxu0 0.0
    %1789 = vmatprep.subr.mxu0 0.0
    %1790 = vmatpush1.msra.mxu0 0.0
    %1791 = vmatprep.subr.mxu0 0.0
    %1792 = vmatpush1.msra.mxu0 0.0
    %1793 = vmatprep.subr.mxu0 0.0
    %1794 = vmatpush1.msra.mxu0 0.0
    %1795 = vmatprep.mubr.f32.mxu0 0.0
    %1796 = vmatmul.mubr.f32.gmra.mrb[0].mxu0 %v1726
    %v1797 = vpop.f32.mrb[0].mxu0
    %v1798 = vadd.f32 0.0, %v1797
    %v1799 = vpop.f32.mrb[0].mxu0
    %v1800 = vadd.f32 0.0, %v1799
    %1801 = vdwg.mxu0
    %1802 = vmatprep.subr.mxu0 0.0
    %1803 = vmatpush1.msra.mxu0 %v18
    %1804 = vmatprep.subr.mxu0 0.0
    %1805 = vmatpush1.msra.mxu0 %v21
    %1806 = vmatprep.subr.mxu0 0.0
    %1807 = vmatpush1.msra.mxu0 %v24
    %1808 = vmatprep.subr.mxu0 0.0
    %1809 = vmatpush1.msra.mxu0 %v27
    %1810 = vmatprep.subr.mxu0 0.0
    %1811 = vmatpush1.msra.mxu0 %v30
    %1812 = vmatprep.subr.mxu0 0.0
    %1813 = vmatpush1.msra.mxu0 %v33
    %1814 = vmatprep.subr.mxu0 0.0
    %1815 = vmatpush1.msra.mxu0 %v36
    %1816 = vmatprep.subr.mxu0 0.0
    %1817 = vmatpush1.msra.mxu0 %v39
    %1818 = vmatprep.subr.mxu0 0.0
    %1819 = vmatpush1.msra.mxu0 %v42
    %1820 = vmatprep.subr.mxu0 0.0
    %1821 = vmatpush1.msra.mxu0 %v45
    %1822 = vmatprep.subr.mxu0 0.0
    %1823 = vmatpush1.msra.mxu0 %v48
    %1824 = vmatprep.subr.mxu0 0.0
    %1825 = vmatpush1.msra.mxu0 %v51
    %1826 = vmatprep.subr.mxu0 0.0
    %1827 = vmatpush1.msra.mxu0 %v54
    %1828 = vmatprep.subr.mxu0 0.0
    %1829 = vmatpush1.msra.mxu0 %v57
    %1830 = vmatprep.subr.mxu0 0.0
    %1831 = vmatpush1.msra.mxu0 %v60
    %1832 = vmatprep.subr.mxu0 0.0
    %1833 = vmatpush1.msra.mxu0 %v63
    %1834 = vmatprep.subr.mxu0 0.0
    %1835 = vmatpush1.msra.mxu0 0.0
    %1836 = vmatprep.subr.mxu0 0.0
    %1837 = vmatpush1.msra.mxu0 0.0
    %1838 = vmatprep.subr.mxu0 0.0
    %1839 = vmatpush1.msra.mxu0 0.0
    %1840 = vmatprep.subr.mxu0 0.0
    %1841 = vmatpush1.msra.mxu0 0.0
    %1842 = vmatprep.subr.mxu0 0.0
    %1843 = vmatpush1.msra.mxu0 0.0
    %1844 = vmatprep.subr.mxu0 0.0
    %1845 = vmatpush1.msra.mxu0 0.0
    %1846 = vmatprep.subr.mxu0 0.0
    %1847 = vmatpush1.msra.mxu0 0.0
    %1848 = vmatprep.subr.mxu0 0.0
    %1849 = vmatpush1.msra.mxu0 0.0
    %1850 = vmatprep.subr.mxu0 0.0
    %1851 = vmatpush1.msra.mxu0 0.0
    %1852 = vmatprep.subr.mxu0 0.0
    %1853 = vmatpush1.msra.mxu0 0.0
    %1854 = vmatprep.subr.mxu0 0.0
    %1855 = vmatpush1.msra.mxu0 0.0
    %1856 = vmatprep.subr.mxu0 0.0
    %1857 = vmatpush1.msra.mxu0 0.0
    %1858 = vmatprep.subr.mxu0 0.0
    %1859 = vmatpush1.msra.mxu0 0.0
    %1860 = vmatprep.subr.mxu0 0.0
    %1861 = vmatpush1.msra.mxu0 0.0
    %1862 = vmatprep.subr.mxu0 0.0
    %1863 = vmatpush1.msra.mxu0 0.0
    %1864 = vmatprep.subr.mxu0 0.0
    %1865 = vmatpush1.msra.mxu0 0.0
    %1866 = vmatprep.mubr.f32.mxu0 0.0
    %1867 = vmatmul.mubr.f32.gmra.mrb[0].mxu0 %v1726
    %v1868 = vpop.f32.mrb[0].mxu0
    %v1869 = vadd.f32 0.0, %v1868
    %v1870 = vpop.f32.mrb[0].mxu0
    %1871 = vdwg.mxu0
    %v1872 = vadd.f32 %v1728, %v1798
    %v1873 = vxor.u32 %v1872, 2147483648
    %v1874 = vmul.f32 %v1873, 1.442695
    %v1875 = vpow.pop %v1874
    %v1876 = vadd.f32 %v1875, 1.0
    %v1877 = vrcp.pop %v1876
    %v1878 = vmul.f32 1.0, %v1877
    %v1879 = vadd.f32 %v1729, %v1800
    %v1880 = vxor.u32 %v1879, 2147483648
    %v1881 = vmul.f32 %v1880, 1.442695
    %v1882 = vpow.pop %v1881
    %v1883 = vadd.f32 %v1882, 1.0
    %v1884 = vrcp.pop %v1883
    %v1885 = vmul.f32 1.0, %v1884
    %v1886 = vmul.f32 %v1878, %v1869
    %v1887 = vadd.f32 %v1730, %v1886
    %v1888 = vtanh.pop %v1887
    %v1889 = vsub.f32 1.0, %v1885
    %v1890 = vmul.f32 %v1889, %v1888
    %v1891 = vmul.f32 %v1885, %v1726
    %v1892 = vadd.f32 %v1890, %v1891
    %s1893 = scalar_lea.vmem %s0, 264
    %v1894 = vld [vmem:[%s1893] sm:$0xff]
    %v1895 = vld [vmem:[%s1893 + $0x8] sm:$0xff]
    %v1896 = vld [vmem:[%s1893 + $0x10] sm:$0xff]
    %1897 = vmatprep.subr.mxu0 %v17
    %1898 = vmatpush1.msra.mxu0 %v16
    %1899 = vmatprep.subr.mxu0 %v20
    %1900 = vmatpush1.msra.mxu0 %v19
    %1901 = vmatprep.subr.mxu0 %v23
    %1902 = vmatpush1.msra.mxu0 %v22
    %1903 = vmatprep.subr.mxu0 %v26
    %1904 = vmatpush1.msra.mxu0 %v25
    %1905 = vmatprep.subr.mxu0 %v29
    %1906 = vmatpush1.msra.mxu0 %v28
    %1907 = vmatprep.subr.mxu0 %v32
    %1908 = vmatpush1.msra.mxu0 %v31
    %1909 = vmatprep.subr.mxu0 %v35
    %1910 = vmatpush1.msra.mxu0 %v34
    %1911 = vmatprep.subr.mxu0 %v38
    %1912 = vmatpush1.msra.mxu0 %v37
    %1913 = vmatprep.subr.mxu0 %v41
    %1914 = vmatpush1.msra.mxu0 %v40
    %1915 = vmatprep.subr.mxu0 %v44
    %1916 = vmatpush1.msra.mxu0 %v43
    %1917 = vmatprep.subr.mxu0 %v47
    %1918 = vmatpush1.msra.mxu0 %v46
    %1919 = vmatprep.subr.mxu0 %v50
    %1920 = vmatpush1.msra.mxu0 %v49
    %1921 = vmatprep.subr.mxu0 %v53
    %1922 = vmatpush1.msra.mxu0 %v52
    %1923 = vmatprep.subr.mxu0 %v56
    %1924 = vmatpush1.msra.mxu0 %v55
    %1925 = vmatprep.subr.mxu0 %v59
    %1926 = vmatpush1.msra.mxu0 %v58
    %1927 = vmatprep.subr.mxu0 %v62
    %1928 = vmatpush1.msra.mxu0 %v61
    %1929 = vmatprep.subr.mxu0 0.0
    %1930 = vmatpush1.msra.mxu0 0.0
    %1931 = vmatprep.subr.mxu0 0.0
    %1932 = vmatpush1.msra.mxu0 0.0
    %1933 = vmatprep.subr.mxu0 0.0
    %1934 = vmatpush1.msra.mxu0 0.0
    %1935 = vmatprep.subr.mxu0 0.0
    %1936 = vmatpush1.msra.mxu0 0.0
    %1937 = vmatprep.subr.mxu0 0.0
    %1938 = vmatpush1.msra.mxu0 0.0
    %1939 = vmatprep.subr.mxu0 0.0
    %1940 = vmatpush1.msra.mxu0 0.0
    %1941 = vmatprep.subr.mxu0 0.0
    %1942 = vmatpush1.msra.mxu0 0.0
    %1943 = vmatprep.subr.mxu0 0.0
    %1944 = vmatpush1.msra.mxu0 0.0
    %1945 = vmatprep.subr.mxu0 0.0
    %1946 = vmatpush1.msra.mxu0 0.0
    %1947 = vmatprep.subr.mxu0 0.0
    %1948 = vmatpush1.msra.mxu0 0.0
    %1949 = vmatprep.subr.mxu0 0.0
    %1950 = vmatpush1.msra.mxu0 0.0
    %1951 = vmatprep.subr.mxu0 0.0
    %1952 = vmatpush1.msra.mxu0 0.0
    %1953 = vmatprep.subr.mxu0 0.0
    %1954 = vmatpush1.msra.mxu0 0.0
    %1955 = vmatprep.subr.mxu0 0.0
    %1956 = vmatpush1.msra.mxu0 0.0
    %1957 = vmatprep.subr.mxu0 0.0
    %1958 = vmatpush1.msra.mxu0 0.0
    %1959 = vmatprep.subr.mxu0 0.0
    %1960 = vmatpush1.msra.mxu0 0.0
    %1961 = vmatprep.mubr.f32.mxu0 0.0
    %1962 = vmatmul.mubr.f32.gmra.mrb[0].mxu0 %v1892
    %v1963 = vpop.f32.mrb[0].mxu0
    %v1964 = vadd.f32 0.0, %v1963
    %v1965 = vpop.f32.mrb[0].mxu0
    %v1966 = vadd.f32 0.0, %v1965
    %1967 = vdwg.mxu0
    %1968 = vmatprep.subr.mxu0 0.0
    %1969 = vmatpush1.msra.mxu0 %v18
    %1970 = vmatprep.subr.mxu0 0.0
    %1971 = vmatpush1.msra.mxu0 %v21
    %1972 = vmatprep.subr.mxu0 0.0
    %1973 = vmatpush1.msra.mxu0 %v24
    %1974 = vmatprep.subr.mxu0 0.0
    %1975 = vmatpush1.msra.mxu0 %v27
    %1976 = vmatprep.subr.mxu0 0.0
    %1977 = vmatpush1.msra.mxu0 %v30
    %1978 = vmatprep.subr.mxu0 0.0
    %1979 = vmatpush1.msra.mxu0 %v33
    %1980 = vmatprep.subr.mxu0 0.0
    %1981 = vmatpush1.msra.mxu0 %v36
    %1982 = vmatprep.subr.mxu0 0.0
    %1983 = vmatpush1.msra.mxu0 %v39
    %1984 = vmatprep.subr.mxu0 0.0
    %1985 = vmatpush1.msra.mxu0 %v42
    %1986 = vmatprep.subr.mxu0 0.0
    %1987 = vmatpush1.msra.mxu0 %v45
    %1988 = vmatprep.subr.mxu0 0.0
    %1989 = vmatpush1.msra.mxu0 %v48
    %1990 = vmatprep.subr.mxu0 0.0
    %1991 = vmatpush1.msra.mxu0 %v51
    %1992 = vmatprep.subr.mxu0 0.0
    %1993 = vmatpush1.msra.mxu0 %v54
    %1994 = vmatprep.subr.mxu0 0.0
    %1995 = vmatpush1.msra.mxu0 %v57
    %1996 = vmatprep.subr.mxu0 0.0
    %1997 = vmatpush1.msra.mxu0 %v60
    %1998 = vmatprep.subr.mxu0 0.0
    %1999 = vmatpush1.msra.mxu0 %v63
    %2000 = vmatprep.subr.mxu0 0.0
    %2001 = vmatpush1.msra.mxu0 0.0
    %2002 = vmatprep.subr.mxu0 0.0
    %2003 = vmatpush1.msra.mxu0 0.0
    %2004 = vmatprep.subr.mxu0 0.0
    %2005 = vmatpush1.msra.mxu0 0.0
    %2006 = vmatprep.subr.mxu0 0.0
    %2007 = vmatpush1.msra.mxu0 0.0
    %2008 = vmatprep.subr.mxu0 0.0
    %2009 = vmatpush1.msra.mxu0 0.0
    %2010 = vmatprep.subr.mxu0 0.0
    %2011 = vmatpush1.msra.mxu0 0.0
    %2012 = vmatprep.subr.mxu0 0.0
    %2013 = vmatpush1.msra.mxu0 0.0
    %2014 = vmatprep.subr.mxu0 0.0
    %2015 = vmatpush1.msra.mxu0 0.0
    %2016 = vmatprep.subr.mxu0 0.0
    %2017 = vmatpush1.msra.mxu0 0.0
    %2018 = vmatprep.subr.mxu0 0.0
    %2019 = vmatpush1.msra.mxu0 0.0
    %2020 = vmatprep.subr.mxu0 0.0
    %2021 = vmatpush1.msra.mxu0 0.0
    %2022 = vmatprep.subr.mxu0 0.0
    %2023 = vmatpush1.msra.mxu0 0.0
    %2024 = vmatprep.subr.mxu0 0.0
    %2025 = vmatpush1.msra.mxu0 0.0
    %2026 = vmatprep.subr.mxu0 0.0
    %2027 = vmatpush1.msra.mxu0 0.0
    %2028 = vmatprep.subr.mxu0 0.0
    %2029 = vmatpush1.msra.mxu0 0.0
    %2030 = vmatprep.subr.mxu0 0.0
    %2031 = vmatpush1.msra.mxu0 0.0
    %2032 = vmatprep.mubr.f32.mxu0 0.0
    %2033 = vmatmul.mubr.f32.gmra.mrb[0].mxu0 %v1892
    %v2034 = vpop.f32.mrb[0].mxu0
    %v2035 = vadd.f32 0.0, %v2034
    %v2036 = vpop.f32.mrb[0].mxu0
    %2037 = vdwg.mxu0
    %v2038 = vadd.f32 %v1894, %v1964
    %v2039 = vxor.u32 %v2038, 2147483648
    %v2040 = vmul.f32 %v2039, 1.442695
    %v2041 = vpow.pop %v2040
    %v2042 = vadd.f32 %v2041, 1.0
    %v2043 = vrcp.pop %v2042
    %v2044 = vmul.f32 1.0, %v2043
    %v2045 = vadd.f32 %v1895, %v1966
    %v2046 = vxor.u32 %v2045, 2147483648
    %v2047 = vmul.f32 %v2046, 1.442695
    %v2048 = vpow.pop %v2047
    %v2049 = vadd.f32 %v2048, 1.0
    %v2050 = vrcp.pop %v2049
    %v2051 = vmul.f32 1.0, %v2050
    %v2052 = vmul.f32 %v2044, %v2035
    %v2053 = vadd.f32 %v1896, %v2052
    %v2054 = vtanh.pop %v2053
    %v2055 = vsub.f32 1.0, %v2051
    %v2056 = vmul.f32 %v2055, %v2054
    %v2057 = vmul.f32 %v2051, %v1892
    %v2058 = vadd.f32 %v2056, %v2057
    %s2059 = scalar_lea.vmem %s0, 288
    %v2060 = vld [vmem:[%s2059] sm:$0xff]
    %v2061 = vld [vmem:[%s2059 + $0x8] sm:$0xff]
    %v2062 = vld [vmem:[%s2059 + $0x10] sm:$0xff]
    %2063 = vmatprep.subr.mxu0 %v17
    %2064 = vmatpush1.msra.mxu0 %v16
    %2065 = vmatprep.subr.mxu0 %v20
    %2066 = vmatpush1.msra.mxu0 %v19
    %2067 = vmatprep.subr.mxu0 %v23
    %2068 = vmatpush1.msra.mxu0 %v22
    %2069 = vmatprep.subr.mxu0 %v26
    %2070 = vmatpush1.msra.mxu0 %v25
    %2071 = vmatprep.subr.mxu0 %v29
    %2072 = vmatpush1.msra.mxu0 %v28
    %2073 = vmatprep.subr.mxu0 %v32
    %2074 = vmatpush1.msra.mxu0 %v31
    %2075 = vmatprep.subr.mxu0 %v35
    %2076 = vmatpush1.msra.mxu0 %v34
    %2077 = vmatprep.subr.mxu0 %v38
    %2078 = vmatpush1.msra.mxu0 %v37
    %2079 = vmatprep.subr.mxu0 %v41
    %2080 = vmatpush1.msra.mxu0 %v40
    %2081 = vmatprep.subr.mxu0 %v44
    %2082 = vmatpush1.msra.mxu0 %v43
    %2083 = vmatprep.subr.mxu0 %v47
    %2084 = vmatpush1.msra.mxu0 %v46
    %2085 = vmatprep.subr.mxu0 %v50
    %2086 = vmatpush1.msra.mxu0 %v49
    %2087 = vmatprep.subr.mxu0 %v53
    %2088 = vmatpush1.msra.mxu0 %v52
    %2089 = vmatprep.subr.mxu0 %v56
    %2090 = vmatpush1.msra.mxu0 %v55
    %2091 = vmatprep.subr.mxu0 %v59
    %2092 = vmatpush1.msra.mxu0 %v58
    %2093 = vmatprep.subr.mxu0 %v62
    %2094 = vmatpush1.msra.mxu0 %v61
    %2095 = vmatprep.subr.mxu0 0.0
    %2096 = vmatpush1.msra.mxu0 0.0
    %2097 = vmatprep.subr.mxu0 0.0
    %2098 = vmatpush1.msra.mxu0 0.0
    %2099 = vmatprep.subr.mxu0 0.0
    %2100 = vmatpush1.msra.mxu0 0.0
    %2101 = vmatprep.subr.mxu0 0.0
    %2102 = vmatpush1.msra.mxu0 0.0
    %2103 = vmatprep.subr.mxu0 0.0
    %2104 = vmatpush1.msra.mxu0 0.0
    %2105 = vmatprep.subr.mxu0 0.0
    %2106 = vmatpush1.msra.mxu0 0.0
    %2107 = vmatprep.subr.mxu0 0.0
    %2108 = vmatpush1.msra.mxu0 0.0
    %2109 = vmatprep.subr.mxu0 0.0
    %2110 = vmatpush1.msra.mxu0 0.0
    %2111 = vmatprep.subr.mxu0 0.0
    %2112 = vmatpush1.msra.mxu0 0.0
    %2113 = vmatprep.subr.mxu0 0.0
    %2114 = vmatpush1.msra.mxu0 0.0
    %2115 = vmatprep.subr.mxu0 0.0
    %2116 = vmatpush1.msra.mxu0 0.0
    %2117 = vmatprep.subr.mxu0 0.0
    %2118 = vmatpush1.msra.mxu0 0.0
    %2119 = vmatprep.subr.mxu0 0.0
    %2120 = vmatpush1.msra.mxu0 0.0
    %2121 = vmatprep.subr.mxu0 0.0
    %2122 = vmatpush1.msra.mxu0 0.0
    %2123 = vmatprep.subr.mxu0 0.0
    %2124 = vmatpush1.msra.mxu0 0.0
    %2125 = vmatprep.subr.mxu0 0.0
    %2126 = vmatpush1.msra.mxu0 0.0
    %2127 = vmatprep.mubr.f32.mxu0 0.0
    %2128 = vmatmul.mubr.f32.gmra.mrb[0].mxu0 %v2058
    %v2129 = vpop.f32.mrb[0].mxu0
    %v2130 = vadd.f32 0.0, %v2129
    %v2131 = vpop.f32.mrb[0].mxu0
    %v2132 = vadd.f32 0.0, %v2131
    %2133 = vdwg.mxu0
    %2134 = vmatprep.subr.mxu0 0.0
    %2135 = vmatpush1.msra.mxu0 %v18
    %2136 = vmatprep.subr.mxu0 0.0
    %2137 = vmatpush1.msra.mxu0 %v21
    %2138 = vmatprep.subr.mxu0 0.0
    %2139 = vmatpush1.msra.mxu0 %v24
    %2140 = vmatprep.subr.mxu0 0.0
    %2141 = vmatpush1.msra.mxu0 %v27
    %2142 = vmatprep.subr.mxu0 0.0
    %2143 = vmatpush1.msra.mxu0 %v30
    %2144 = vmatprep.subr.mxu0 0.0
    %2145 = vmatpush1.msra.mxu0 %v33
    %2146 = vmatprep.subr.mxu0 0.0
    %2147 = vmatpush1.msra.mxu0 %v36
    %2148 = vmatprep.subr.mxu0 0.0
    %2149 = vmatpush1.msra.mxu0 %v39
    %2150 = vmatprep.subr.mxu0 0.0
    %2151 = vmatpush1.msra.mxu0 %v42
    %2152 = vmatprep.subr.mxu0 0.0
    %2153 = vmatpush1.msra.mxu0 %v45
    %2154 = vmatprep.subr.mxu0 0.0
    %2155 = vmatpush1.msra.mxu0 %v48
    %2156 = vmatprep.subr.mxu0 0.0
    %2157 = vmatpush1.msra.mxu0 %v51
    %2158 = vmatprep.subr.mxu0 0.0
    %2159 = vmatpush1.msra.mxu0 %v54
    %2160 = vmatprep.subr.mxu0 0.0
    %2161 = vmatpush1.msra.mxu0 %v57
    %2162 = vmatprep.subr.mxu0 0.0
    %2163 = vmatpush1.msra.mxu0 %v60
    %2164 = vmatprep.subr.mxu0 0.0
    %2165 = vmatpush1.msra.mxu0 %v63
    %2166 = vmatprep.subr.mxu0 0.0
    %2167 = vmatpush1.msra.mxu0 0.0
    %2168 = vmatprep.subr.mxu0 0.0
    %2169 = vmatpush1.msra.mxu0 0.0
    %2170 = vmatprep.subr.mxu0 0.0
    %2171 = vmatpush1.msra.mxu0 0.0
    %2172 = vmatprep.subr.mxu0 0.0
    %2173 = vmatpush1.msra.mxu0 0.0
    %2174 = vmatprep.subr.mxu0 0.0
    %2175 = vmatpush1.msra.mxu0 0.0
    %2176 = vmatprep.subr.mxu0 0.0
    %2177 = vmatpush1.msra.mxu0 0.0
    %2178 = vmatprep.subr.mxu0 0.0
    %2179 = vmatpush1.msra.mxu0 0.0
    %2180 = vmatprep.subr.mxu0 0.0
    %2181 = vmatpush1.msra.mxu0 0.0
    %2182 = vmatprep.subr.mxu0 0.0
    %2183 = vmatpush1.msra.mxu0 0.0
    %2184 = vmatprep.subr.mxu0 0.0
    %2185 = vmatpush1.msra.mxu0 0.0
    %2186 = vmatprep.subr.mxu0 0.0
    %2187 = vmatpush1.msra.mxu0 0.0
    %2188 = vmatprep.subr.mxu0 0.0
    %2189 = vmatpush1.msra.mxu0 0.0
    %2190 = vmatprep.subr.mxu0 0.0
    %2191 = vmatpush1.msra.mxu0 0.0
    %2192 = vmatprep.subr.mxu0 0.0
    %2193 = vmatpush1.msra.mxu0 0.0
    %2194 = vmatprep.subr.mxu0 0.0
    %2195 = vmatpush1.msra.mxu0 0.0
    %2196 = vmatprep.subr.mxu0 0.0
    %2197 = vmatpush1.msra.mxu0 0.0
    %2198 = vmatprep.mubr.f32.mxu0 0.0
    %2199 = vmatmul.mubr.f32.gmra.mrb[0].mxu0 %v2058
    %v2200 = vpop.f32.mrb[0].mxu0
    %v2201 = vadd.f32 0.0, %v2200
    %v2202 = vpop.f32.mrb[0].mxu0
    %2203 = vdwg.mxu0
    %v2204 = vadd.f32 %v2060, %v2130
    %v2205 = vxor.u32 %v2204, 2147483648
    %v2206 = vmul.f32 %v2205, 1.442695
    %v2207 = vpow.pop %v2206
    %v2208 = vadd.f32 %v2207, 1.0
    %v2209 = vrcp.pop %v2208
    %v2210 = vmul.f32 1.0, %v2209
    %v2211 = vadd.f32 %v2061, %v2132
    %v2212 = vxor.u32 %v2211, 2147483648
    %v2213 = vmul.f32 %v2212, 1.442695
    %v2214 = vpow.pop %v2213
    %v2215 = vadd.f32 %v2214, 1.0
    %v2216 = vrcp.pop %v2215
    %v2217 = vmul.f32 1.0, %v2216
    %v2218 = vmul.f32 %v2210, %v2201
    %v2219 = vadd.f32 %v2062, %v2218
    %v2220 = vtanh.pop %v2219
    %v2221 = vsub.f32 1.0, %v2217
    %v2222 = vmul.f32 %v2221, %v2220
    %v2223 = vmul.f32 %v2217, %v2058
    %v2224 = vadd.f32 %v2222, %v2223
    %s2225 = scalar_lea.vmem %s0, 312
    %v2226 = vld [vmem:[%s2225] sm:$0xff]
    %v2227 = vld [vmem:[%s2225 + $0x8] sm:$0xff]
    %v2228 = vld [vmem:[%s2225 + $0x10] sm:$0xff]
    %2229 = vmatprep.subr.mxu0 %v17
    %2230 = vmatpush1.msra.mxu0 %v16
    %2231 = vmatprep.subr.mxu0 %v20
    %2232 = vmatpush1.msra.mxu0 %v19
    %2233 = vmatprep.subr.mxu0 %v23
    %2234 = vmatpush1.msra.mxu0 %v22
    %2235 = vmatprep.subr.mxu0 %v26
    %2236 = vmatpush1.msra.mxu0 %v25
    %2237 = vmatprep.subr.mxu0 %v29
    %2238 = vmatpush1.msra.mxu0 %v28
    %2239 = vmatprep.subr.mxu0 %v32
    %2240 = vmatpush1.msra.mxu0 %v31
    %2241 = vmatprep.subr.mxu0 %v35
    %2242 = vmatpush1.msra.mxu0 %v34
    %2243 = vmatprep.subr.mxu0 %v38
    %2244 = vmatpush1.msra.mxu0 %v37
    %2245 = vmatprep.subr.mxu0 %v41
    %2246 = vmatpush1.msra.mxu0 %v40
    %2247 = vmatprep.subr.mxu0 %v44
    %2248 = vmatpush1.msra.mxu0 %v43
    %2249 = vmatprep.subr.mxu0 %v47
    %2250 = vmatpush1.msra.mxu0 %v46
    %2251 = vmatprep.subr.mxu0 %v50
    %2252 = vmatpush1.msra.mxu0 %v49
    %2253 = vmatprep.subr.mxu0 %v53
    %2254 = vmatpush1.msra.mxu0 %v52
    %2255 = vmatprep.subr.mxu0 %v56
    %2256 = vmatpush1.msra.mxu0 %v55
    %2257 = vmatprep.subr.mxu0 %v59
    %2258 = vmatpush1.msra.mxu0 %v58
    %2259 = vmatprep.subr.mxu0 %v62
    %2260 = vmatpush1.msra.mxu0 %v61
    %2261 = vmatprep.subr.mxu0 0.0
    %2262 = vmatpush1.msra.mxu0 0.0
    %2263 = vmatprep.subr.mxu0 0.0
    %2264 = vmatpush1.msra.mxu0 0.0
    %2265 = vmatprep.subr.mxu0 0.0
    %2266 = vmatpush1.msra.mxu0 0.0
    %2267 = vmatprep.subr.mxu0 0.0
    %2268 = vmatpush1.msra.mxu0 0.0
    %2269 = vmatprep.subr.mxu0 0.0
    %2270 = vmatpush1.msra.mxu0 0.0
    %2271 = vmatprep.subr.mxu0 0.0
    %2272 = vmatpush1.msra.mxu0 0.0
    %2273 = vmatprep.subr.mxu0 0.0
    %2274 = vmatpush1.msra.mxu0 0.0
    %2275 = vmatprep.subr.mxu0 0.0
    %2276 = vmatpush1.msra.mxu0 0.0
    %2277 = vmatprep.subr.mxu0 0.0
    %2278 = vmatpush1.msra.mxu0 0.0
    %2279 = vmatprep.subr.mxu0 0.0
    %2280 = vmatpush1.msra.mxu0 0.0
    %2281 = vmatprep.subr.mxu0 0.0
    %2282 = vmatpush1.msra.mxu0 0.0
    %2283 = vmatprep.subr.mxu0 0.0
    %2284 = vmatpush1.msra.mxu0 0.0
    %2285 = vmatprep.subr.mxu0 0.0
    %2286 = vmatpush1.msra.mxu0 0.0
    %2287 = vmatprep.subr.mxu0 0.0
    %2288 = vmatpush1.msra.mxu0 0.0
    %2289 = vmatprep.subr.mxu0 0.0
    %2290 = vmatpush1.msra.mxu0 0.0
    %2291 = vmatprep.subr.mxu0 0.0
    %2292 = vmatpush1.msra.mxu0 0.0
    %2293 = vmatprep.mubr.f32.mxu0 0.0
    %2294 = vmatmul.mubr.f32.gmra.mrb[0].mxu0 %v2224
    %v2295 = vpop.f32.mrb[0].mxu0
    %v2296 = vadd.f32 0.0, %v2295
    %v2297 = vpop.f32.mrb[0].mxu0
    %v2298 = vadd.f32 0.0, %v2297
    %2299 = vdwg.mxu0
    %2300 = vmatprep.subr.mxu0 0.0
    %2301 = vmatpush1.msra.mxu0 %v18
    %2302 = vmatprep.subr.mxu0 0.0
    %2303 = vmatpush1.msra.mxu0 %v21
    %2304 = vmatprep.subr.mxu0 0.0
    %2305 = vmatpush1.msra.mxu0 %v24
    %2306 = vmatprep.subr.mxu0 0.0
    %2307 = vmatpush1.msra.mxu0 %v27
    %2308 = vmatprep.subr.mxu0 0.0
    %2309 = vmatpush1.msra.mxu0 %v30
    %2310 = vmatprep.subr.mxu0 0.0
    %2311 = vmatpush1.msra.mxu0 %v33
    %2312 = vmatprep.subr.mxu0 0.0
    %2313 = vmatpush1.msra.mxu0 %v36
    %2314 = vmatprep.subr.mxu0 0.0
    %2315 = vmatpush1.msra.mxu0 %v39
    %2316 = vmatprep.subr.mxu0 0.0
    %2317 = vmatpush1.msra.mxu0 %v42
    %2318 = vmatprep.subr.mxu0 0.0
    %2319 = vmatpush1.msra.mxu0 %v45
    %2320 = vmatprep.subr.mxu0 0.0
    %2321 = vmatpush1.msra.mxu0 %v48
    %2322 = vmatprep.subr.mxu0 0.0
    %2323 = vmatpush1.msra.mxu0 %v51
    %2324 = vmatprep.subr.mxu0 0.0
    %2325 = vmatpush1.msra.mxu0 %v54
    %2326 = vmatprep.subr.mxu0 0.0
    %2327 = vmatpush1.msra.mxu0 %v57
    %2328 = vmatprep.subr.mxu0 0.0
    %2329 = vmatpush1.msra.mxu0 %v60
    %2330 = vmatprep.subr.mxu0 0.0
    %2331 = vmatpush1.msra.mxu0 %v63
    %2332 = vmatprep.subr.mxu0 0.0
    %2333 = vmatpush1.msra.mxu0 0.0
    %2334 = vmatprep.subr.mxu0 0.0
    %2335 = vmatpush1.msra.mxu0 0.0
    %2336 = vmatprep.subr.mxu0 0.0
    %2337 = vmatpush1.msra.mxu0 0.0
    %2338 = vmatprep.subr.mxu0 0.0
    %2339 = vmatpush1.msra.mxu0 0.0
    %2340 = vmatprep.subr.mxu0 0.0
    %2341 = vmatpush1.msra.mxu0 0.0
    %2342 = vmatprep.subr.mxu0 0.0
    %2343 = vmatpush1.msra.mxu0 0.0
    %2344 = vmatprep.subr.mxu0 0.0
    %2345 = vmatpush1.msra.mxu0 0.0
    %2346 = vmatprep.subr.mxu0 0.0
    %2347 = vmatpush1.msra.mxu0 0.0
    %2348 = vmatprep.subr.mxu0 0.0
    %2349 = vmatpush1.msra.mxu0 0.0
    %2350 = vmatprep.subr.mxu0 0.0
    %2351 = vmatpush1.msra.mxu0 0.0
    %2352 = vmatprep.subr.mxu0 0.0
    %2353 = vmatpush1.msra.mxu0 0.0
    %2354 = vmatprep.subr.mxu0 0.0
    %2355 = vmatpush1.msra.mxu0 0.0
    %2356 = vmatprep.subr.mxu0 0.0
    %2357 = vmatpush1.msra.mxu0 0.0
    %2358 = vmatprep.subr.mxu0 0.0
    %2359 = vmatpush1.msra.mxu0 0.0
    %2360 = vmatprep.subr.mxu0 0.0
    %2361 = vmatpush1.msra.mxu0 0.0
    %2362 = vmatprep.subr.mxu0 0.0
    %2363 = vmatpush1.msra.mxu0 0.0
    %2364 = vmatprep.mubr.f32.mxu0 0.0
    %2365 = vmatmul.mubr.f32.gmra.mrb[0].mxu0 %v2224
    %v2366 = vpop.f32.mrb[0].mxu0
    %v2367 = vadd.f32 0.0, %v2366
    %v2368 = vpop.f32.mrb[0].mxu0
    %2369 = vdwg.mxu0
    %v2370 = vadd.f32 %v2226, %v2296
    %v2371 = vxor.u32 %v2370, 2147483648
    %v2372 = vmul.f32 %v2371, 1.442695
    %v2373 = vpow.pop %v2372
    %v2374 = vadd.f32 %v2373, 1.0
    %v2375 = vrcp.pop %v2374
    %v2376 = vmul.f32 1.0, %v2375
    %v2377 = vadd.f32 %v2227, %v2298
    %v2378 = vxor.u32 %v2377, 2147483648
    %v2379 = vmul.f32 %v2378, 1.442695
    %v2380 = vpow.pop %v2379
    %v2381 = vadd.f32 %v2380, 1.0
    %v2382 = vrcp.pop %v2381
    %v2383 = vmul.f32 1.0, %v2382
    %v2384 = vmul.f32 %v2376, %v2367
    %v2385 = vadd.f32 %v2228, %v2384
    %v2386 = vtanh.pop %v2385
    %v2387 = vsub.f32 1.0, %v2383
    %v2388 = vmul.f32 %v2387, %v2386
    %v2389 = vmul.f32 %v2383, %v2224
    %v2390 = vadd.f32 %v2388, %v2389
    %s2391 = scalar_lea.vmem %s0, 336
    %v2392 = vld [vmem:[%s2391] sm:$0xff]
    %v2393 = vld [vmem:[%s2391 + $0x8] sm:$0xff]
    %v2394 = vld [vmem:[%s2391 + $0x10] sm:$0xff]
    %2395 = vmatprep.subr.mxu0 %v17
    %2396 = vmatpush1.msra.mxu0 %v16
    %2397 = vmatprep.subr.mxu0 %v20
    %2398 = vmatpush1.msra.mxu0 %v19
    %2399 = vmatprep.subr.mxu0 %v23
    %2400 = vmatpush1.msra.mxu0 %v22
    %2401 = vmatprep.subr.mxu0 %v26
    %2402 = vmatpush1.msra.mxu0 %v25
    %2403 = vmatprep.subr.mxu0 %v29
    %2404 = vmatpush1.msra.mxu0 %v28
    %2405 = vmatprep.subr.mxu0 %v32
    %2406 = vmatpush1.msra.mxu0 %v31
    %2407 = vmatprep.subr.mxu0 %v35
    %2408 = vmatpush1.msra.mxu0 %v34
    %2409 = vmatprep.subr.mxu0 %v38
    %2410 = vmatpush1.msra.mxu0 %v37
    %2411 = vmatprep.subr.mxu0 %v41
    %2412 = vmatpush1.msra.mxu0 %v40
    %2413 = vmatprep.subr.mxu0 %v44
    %2414 = vmatpush1.msra.mxu0 %v43
    %2415 = vmatprep.subr.mxu0 %v47
    %2416 = vmatpush1.msra.mxu0 %v46
    %2417 = vmatprep.subr.mxu0 %v50
    %2418 = vmatpush1.msra.mxu0 %v49
    %2419 = vmatprep.subr.mxu0 %v53
    %2420 = vmatpush1.msra.mxu0 %v52
    %2421 = vmatprep.subr.mxu0 %v56
    %2422 = vmatpush1.msra.mxu0 %v55
    %2423 = vmatprep.subr.mxu0 %v59
    %2424 = vmatpush1.msra.mxu0 %v58
    %2425 = vmatprep.subr.mxu0 %v62
    %2426 = vmatpush1.msra.mxu0 %v61
    %2427 = vmatprep.subr.mxu0 0.0
    %2428 = vmatpush1.msra.mxu0 0.0
    %2429 = vmatprep.subr.mxu0 0.0
    %2430 = vmatpush1.msra.mxu0 0.0
    %2431 = vmatprep.subr.mxu0 0.0
    %2432 = vmatpush1.msra.mxu0 0.0
    %2433 = vmatprep.subr.mxu0 0.0
    %2434 = vmatpush1.msra.mxu0 0.0
    %2435 = vmatprep.subr.mxu0 0.0
    %2436 = vmatpush1.msra.mxu0 0.0
    %2437 = vmatprep.subr.mxu0 0.0
    %2438 = vmatpush1.msra.mxu0 0.0
    %2439 = vmatprep.subr.mxu0 0.0
    %2440 = vmatpush1.msra.mxu0 0.0
    %2441 = vmatprep.subr.mxu0 0.0
    %2442 = vmatpush1.msra.mxu0 0.0
    %2443 = vmatprep.subr.mxu0 0.0
    %2444 = vmatpush1.msra.mxu0 0.0
    %2445 = vmatprep.subr.mxu0 0.0
    %2446 = vmatpush1.msra.mxu0 0.0
    %2447 = vmatprep.subr.mxu0 0.0
    %2448 = vmatpush1.msra.mxu0 0.0
    %2449 = vmatprep.subr.mxu0 0.0
    %2450 = vmatpush1.msra.mxu0 0.0
    %2451 = vmatprep.subr.mxu0 0.0
    %2452 = vmatpush1.msra.mxu0 0.0
    %2453 = vmatprep.subr.mxu0 0.0
    %2454 = vmatpush1.msra.mxu0 0.0
    %2455 = vmatprep.subr.mxu0 0.0
    %2456 = vmatpush1.msra.mxu0 0.0
    %2457 = vmatprep.subr.mxu0 0.0
    %2458 = vmatpush1.msra.mxu0 0.0
    %2459 = vmatprep.mubr.f32.mxu0 0.0
    %2460 = vmatmul.mubr.f32.gmra.mrb[0].mxu0 %v2390
    %v2461 = vpop.f32.mrb[0].mxu0
    %v2462 = vadd.f32 0.0, %v2461
    %v2463 = vpop.f32.mrb[0].mxu0
    %v2464 = vadd.f32 0.0, %v2463
    %2465 = vdwg.mxu0
    %2466 = vmatprep.subr.mxu0 0.0
    %2467 = vmatpush1.msra.mxu0 %v18
    %2468 = vmatprep.subr.mxu0 0.0
    %2469 = vmatpush1.msra.mxu0 %v21
    %2470 = vmatprep.subr.mxu0 0.0
    %2471 = vmatpush1.msra.mxu0 %v24
    %2472 = vmatprep.subr.mxu0 0.0
    %2473 = vmatpush1.msra.mxu0 %v27
    %2474 = vmatprep.subr.mxu0 0.0
    %2475 = vmatpush1.msra.mxu0 %v30
    %2476 = vmatprep.subr.mxu0 0.0
    %2477 = vmatpush1.msra.mxu0 %v33
    %2478 = vmatprep.subr.mxu0 0.0
    %2479 = vmatpush1.msra.mxu0 %v36
    %2480 = vmatprep.subr.mxu0 0.0
    %2481 = vmatpush1.msra.mxu0 %v39
    %2482 = vmatprep.subr.mxu0 0.0
    %2483 = vmatpush1.msra.mxu0 %v42
    %2484 = vmatprep.subr.mxu0 0.0
    %2485 = vmatpush1.msra.mxu0 %v45
    %2486 = vmatprep.subr.mxu0 0.0
    %2487 = vmatpush1.msra.mxu0 %v48
    %2488 = vmatprep.subr.mxu0 0.0
    %2489 = vmatpush1.msra.mxu0 %v51
    %2490 = vmatprep.subr.mxu0 0.0
    %2491 = vmatpush1.msra.mxu0 %v54
    %2492 = vmatprep.subr.mxu0 0.0
    %2493 = vmatpush1.msra.mxu0 %v57
    %2494 = vmatprep.subr.mxu0 0.0
    %2495 = vmatpush1.msra.mxu0 %v60
    %2496 = vmatprep.subr.mxu0 0.0
    %2497 = vmatpush1.msra.mxu0 %v63
    %2498 = vmatprep.subr.mxu0 0.0
    %2499 = vmatpush1.msra.mxu0 0.0
    %2500 = vmatprep.subr.mxu0 0.0
    %2501 = vmatpush1.msra.mxu0 0.0
    %2502 = vmatprep.subr.mxu0 0.0
    %2503 = vmatpush1.msra.mxu0 0.0
    %2504 = vmatprep.subr.mxu0 0.0
    %2505 = vmatpush1.msra.mxu0 0.0
    %2506 = vmatprep.subr.mxu0 0.0
    %2507 = vmatpush1.msra.mxu0 0.0
    %2508 = vmatprep.subr.mxu0 0.0
    %2509 = vmatpush1.msra.mxu0 0.0
    %2510 = vmatprep.subr.mxu0 0.0
    %2511 = vmatpush1.msra.mxu0 0.0
    %2512 = vmatprep.subr.mxu0 0.0
    %2513 = vmatpush1.msra.mxu0 0.0
    %2514 = vmatprep.subr.mxu0 0.0
    %2515 = vmatpush1.msra.mxu0 0.0
    %2516 = vmatprep.subr.mxu0 0.0
    %2517 = vmatpush1.msra.mxu0 0.0
    %2518 = vmatprep.subr.mxu0 0.0
    %2519 = vmatpush1.msra.mxu0 0.0
    %2520 = vmatprep.subr.mxu0 0.0
    %2521 = vmatpush1.msra.mxu0 0.0
    %2522 = vmatprep.subr.mxu0 0.0
    %2523 = vmatpush1.msra.mxu0 0.0
    %2524 = vmatprep.subr.mxu0 0.0
    %2525 = vmatpush1.msra.mxu0 0.0
    %2526 = vmatprep.subr.mxu0 0.0
    %2527 = vmatpush1.msra.mxu0 0.0
    %2528 = vmatprep.subr.mxu0 0.0
    %2529 = vmatpush1.msra.mxu0 0.0
    %2530 = vmatprep.mubr.f32.mxu0 0.0
    %2531 = vmatmul.mubr.f32.gmra.mrb[0].mxu0 %v2390
    %v2532 = vpop.f32.mrb[0].mxu0
    %v2533 = vadd.f32 0.0, %v2532
    %v2534 = vpop.f32.mrb[0].mxu0
    %2535 = vdwg.mxu0
    %v2536 = vadd.f32 %v2392, %v2462
    %v2537 = vxor.u32 %v2536, 2147483648
    %v2538 = vmul.f32 %v2537, 1.442695
    %v2539 = vpow.pop %v2538
    %v2540 = vadd.f32 %v2539, 1.0
    %v2541 = vrcp.pop %v2540
    %v2542 = vmul.f32 1.0, %v2541
    %v2543 = vadd.f32 %v2393, %v2464
    %v2544 = vxor.u32 %v2543, 2147483648
    %v2545 = vmul.f32 %v2544, 1.442695
    %v2546 = vpow.pop %v2545
    %v2547 = vadd.f32 %v2546, 1.0
    %v2548 = vrcp.pop %v2547
    %v2549 = vmul.f32 1.0, %v2548
    %v2550 = vmul.f32 %v2542, %v2533
    %v2551 = vadd.f32 %v2394, %v2550
    %v2552 = vtanh.pop %v2551
    %v2553 = vsub.f32 1.0, %v2549
    %v2554 = vmul.f32 %v2553, %v2552
    %v2555 = vmul.f32 %v2549, %v2390
    %v2556 = vadd.f32 %v2554, %v2555
    %s2557 = scalar_lea.vmem %s0, 360
    %v2558 = vld [vmem:[%s2557] sm:$0xff]
    %v2559 = vld [vmem:[%s2557 + $0x8] sm:$0xff]
    %v2560 = vld [vmem:[%s2557 + $0x10] sm:$0xff]
    %2561 = vmatprep.subr.mxu0 %v17
    %2562 = vmatpush1.msra.mxu0 %v16
    %2563 = vmatprep.subr.mxu0 %v20
    %2564 = vmatpush1.msra.mxu0 %v19
    %2565 = vmatprep.subr.mxu0 %v23
    %2566 = vmatpush1.msra.mxu0 %v22
    %2567 = vmatprep.subr.mxu0 %v26
    %2568 = vmatpush1.msra.mxu0 %v25
    %2569 = vmatprep.subr.mxu0 %v29
    %2570 = vmatpush1.msra.mxu0 %v28
    %2571 = vmatprep.subr.mxu0 %v32
    %2572 = vmatpush1.msra.mxu0 %v31
    %2573 = vmatprep.subr.mxu0 %v35
    %2574 = vmatpush1.msra.mxu0 %v34
    %2575 = vmatprep.subr.mxu0 %v38
    %2576 = vmatpush1.msra.mxu0 %v37
    %2577 = vmatprep.subr.mxu0 %v41
    %2578 = vmatpush1.msra.mxu0 %v40
    %2579 = vmatprep.subr.mxu0 %v44
    %2580 = vmatpush1.msra.mxu0 %v43
    %2581 = vmatprep.subr.mxu0 %v47
    %2582 = vmatpush1.msra.mxu0 %v46
    %2583 = vmatprep.subr.mxu0 %v50
    %2584 = vmatpush1.msra.mxu0 %v49
    %2585 = vmatprep.subr.mxu0 %v53
    %2586 = vmatpush1.msra.mxu0 %v52
    %2587 = vmatprep.subr.mxu0 %v56
    %2588 = vmatpush1.msra.mxu0 %v55
    %2589 = vmatprep.subr.mxu0 %v59
    %2590 = vmatpush1.msra.mxu0 %v58
    %2591 = vmatprep.subr.mxu0 %v62
    %2592 = vmatpush1.msra.mxu0 %v61
    %2593 = vmatprep.subr.mxu0 0.0
    %2594 = vmatpush1.msra.mxu0 0.0
    %2595 = vmatprep.subr.mxu0 0.0
    %2596 = vmatpush1.msra.mxu0 0.0
    %2597 = vmatprep.subr.mxu0 0.0
    %2598 = vmatpush1.msra.mxu0 0.0
    %2599 = vmatprep.subr.mxu0 0.0
    %2600 = vmatpush1.msra.mxu0 0.0
    %2601 = vmatprep.subr.mxu0 0.0
    %2602 = vmatpush1.msra.mxu0 0.0
    %2603 = vmatprep.subr.mxu0 0.0
    %2604 = vmatpush1.msra.mxu0 0.0
    %2605 = vmatprep.subr.mxu0 0.0
    %2606 = vmatpush1.msra.mxu0 0.0
    %2607 = vmatprep.subr.mxu0 0.0
    %2608 = vmatpush1.msra.mxu0 0.0
    %2609 = vmatprep.subr.mxu0 0.0
    %2610 = vmatpush1.msra.mxu0 0.0
    %2611 = vmatprep.subr.mxu0 0.0
    %2612 = vmatpush1.msra.mxu0 0.0
    %2613 = vmatprep.subr.mxu0 0.0
    %2614 = vmatpush1.msra.mxu0 0.0
    %2615 = vmatprep.subr.mxu0 0.0
    %2616 = vmatpush1.msra.mxu0 0.0
    %2617 = vmatprep.subr.mxu0 0.0
    %2618 = vmatpush1.msra.mxu0 0.0
    %2619 = vmatprep.subr.mxu0 0.0
    %2620 = vmatpush1.msra.mxu0 0.0
    %2621 = vmatprep.subr.mxu0 0.0
    %2622 = vmatpush1.msra.mxu0 0.0
    %2623 = vmatprep.subr.mxu0 0.0
    %2624 = vmatpush1.msra.mxu0 0.0
    %2625 = vmatprep.mubr.f32.mxu0 0.0
    %2626 = vmatmul.mubr.f32.gmra.mrb[0].mxu0 %v2556
    %v2627 = vpop.f32.mrb[0].mxu0
    %v2628 = vadd.f32 0.0, %v2627
    %v2629 = vpop.f32.mrb[0].mxu0
    %v2630 = vadd.f32 0.0, %v2629
    %2631 = vdwg.mxu0
    %2632 = vmatprep.subr.mxu0 0.0
    %2633 = vmatpush1.msra.mxu0 %v18
    %2634 = vmatprep.subr.mxu0 0.0
    %2635 = vmatpush1.msra.mxu0 %v21
    %2636 = vmatprep.subr.mxu0 0.0
    %2637 = vmatpush1.msra.mxu0 %v24
    %2638 = vmatprep.subr.mxu0 0.0
    %2639 = vmatpush1.msra.mxu0 %v27
    %2640 = vmatprep.subr.mxu0 0.0
    %2641 = vmatpush1.msra.mxu0 %v30
    %2642 = vmatprep.subr.mxu0 0.0
    %2643 = vmatpush1.msra.mxu0 %v33
    %2644 = vmatprep.subr.mxu0 0.0
    %2645 = vmatpush1.msra.mxu0 %v36
    %2646 = vmatprep.subr.mxu0 0.0
    %2647 = vmatpush1.msra.mxu0 %v39
    %2648 = vmatprep.subr.mxu0 0.0
    %2649 = vmatpush1.msra.mxu0 %v42
    %2650 = vmatprep.subr.mxu0 0.0
    %2651 = vmatpush1.msra.mxu0 %v45
    %2652 = vmatprep.subr.mxu0 0.0
    %2653 = vmatpush1.msra.mxu0 %v48
    %2654 = vmatprep.subr.mxu0 0.0
    %2655 = vmatpush1.msra.mxu0 %v51
    %2656 = vmatprep.subr.mxu0 0.0
    %2657 = vmatpush1.msra.mxu0 %v54
    %2658 = vmatprep.subr.mxu0 0.0
    %2659 = vmatpush1.msra.mxu0 %v57
    %2660 = vmatprep.subr.mxu0 0.0
    %2661 = vmatpush1.msra.mxu0 %v60
    %2662 = vmatprep.subr.mxu0 0.0
    %2663 = vmatpush1.msra.mxu0 %v63
    %2664 = vmatprep.subr.mxu0 0.0
    %2665 = vmatpush1.msra.mxu0 0.0
    %2666 = vmatprep.subr.mxu0 0.0
    %2667 = vmatpush1.msra.mxu0 0.0
    %2668 = vmatprep.subr.mxu0 0.0
    %2669 = vmatpush1.msra.mxu0 0.0
    %2670 = vmatprep.subr.mxu0 0.0
    %2671 = vmatpush1.msra.mxu0 0.0
    %2672 = vmatprep.subr.mxu0 0.0
    %2673 = vmatpush1.msra.mxu0 0.0
    %2674 = vmatprep.subr.mxu0 0.0
    %2675 = vmatpush1.msra.mxu0 0.0
    %2676 = vmatprep.subr.mxu0 0.0
    %2677 = vmatpush1.msra.mxu0 0.0
    %2678 = vmatprep.subr.mxu0 0.0
    %2679 = vmatpush1.msra.mxu0 0.0
    %2680 = vmatprep.subr.mxu0 0.0
    %2681 = vmatpush1.msra.mxu0 0.0
    %2682 = vmatprep.subr.mxu0 0.0
    %2683 = vmatpush1.msra.mxu0 0.0
    %2684 = vmatprep.subr.mxu0 0.0
    %2685 = vmatpush1.msra.mxu0 0.0
    %2686 = vmatprep.subr.mxu0 0.0
    %2687 = vmatpush1.msra.mxu0 0.0
    %2688 = vmatprep.subr.mxu0 0.0
    %2689 = vmatpush1.msra.mxu0 0.0
    %2690 = vmatprep.subr.mxu0 0.0
    %2691 = vmatpush1.msra.mxu0 0.0
    %2692 = vmatprep.subr.mxu0 0.0
    %2693 = vmatpush1.msra.mxu0 0.0
    %2694 = vmatprep.subr.mxu0 0.0
    %2695 = vmatpush1.msra.mxu0 0.0
    %2696 = vmatprep.mubr.f32.mxu0 0.0
    %2697 = vmatmul.mubr.f32.gmra.mrb[0].mxu0 %v2556
    %v2698 = vpop.f32.mrb[0].mxu0
    %v2699 = vadd.f32 0.0, %v2698
    %v2700 = vpop.f32.mrb[0].mxu0
    %2701 = vdwg.mxu0
    %v2702 = vadd.f32 %v2558, %v2628
    %v2703 = vxor.u32 %v2702, 2147483648
    %v2704 = vmul.f32 %v2703, 1.442695
    %v2705 = vpow.pop %v2704
    %v2706 = vadd.f32 %v2705, 1.0
    %v2707 = vrcp.pop %v2706
    %v2708 = vmul.f32 1.0, %v2707
    %v2709 = vadd.f32 %v2559, %v2630
    %v2710 = vxor.u32 %v2709, 2147483648
    %v2711 = vmul.f32 %v2710, 1.442695
    %v2712 = vpow.pop %v2711
    %v2713 = vadd.f32 %v2712, 1.0
    %v2714 = vrcp.pop %v2713
    %v2715 = vmul.f32 1.0, %v2714
    %v2716 = vmul.f32 %v2708, %v2699
    %v2717 = vadd.f32 %v2560, %v2716
    %v2718 = vtanh.pop %v2717
    %v2719 = vsub.f32 1.0, %v2715
    %v2720 = vmul.f32 %v2719, %v2718
    %v2721 = vmul.f32 %v2715, %v2556
    %v2722 = vadd.f32 %v2720, %v2721
    %2724 = vrot.lane.b32.xlu0 %v2722, 96
    %v2725 = vpop.permute.xlu0 %2724
    %v2727 = vadd.f32 %v2722, %v2725
    %v2728 = vlaneseq
    %v2729 = vshrl.u32 %v2728, 7
    %s2730 = sld [smem:[#allocation2]]
    %v2731 = vstv %s2730
    %vm2732 = vcmp.lt.s32.totalorder %v2729, %v2731
    %v2733 = vsel %vm2732, %v2727, -inf
    %vm2734 = vcmask 261120
    %v2735 = vsel %vm2734, %v2733, -inf
    %v2736 = vrot.slane %v2735, 4
    %v2737 = vmax.f32 %v2735, %v2736
    %v2738 = vrot.slane %v2737, 2
    %v2739 = vmax.f32 %v2737, %v2738
    %v2740 = vrot.slane %v2739, 1
    %v2741 = vmax.f32 %v2739, %v2740
    %vm2742 = vcmask 253952
    %2743 = vst.msk [vmem:[#allocation3] sm:$0x1] %vm2742, %v2741
    // Predicated region
    $region14: #{_encode.1} parent=1 // pred_check
      _
    $region15: #{_encode.1} parent=1 // pred_check_branch
      %2745 = sbr.rel (0) target = $region17
    $region16: #{_encode.1} parent=1 // pred_region
      %s2747 = ssub.s32 16, 16
      %2748 = vsyncadd [#allocation4], %s2747
      %s2750 = sshll.u32 [#allocation3], 4
      %s2751 = int_to_ptr.vmem [resolvable:$true] %s2750
      %2753 = dma.vmem_to_hbm [thread:$0]  %s2751, 16, %s3, [#allocation4]
    $region17: #{_encode.1} parent=1 // pred_fallthru
      _
    // Predicated region
    $region18: #{_encode.1} parent=1 // pred_check
      _
    $region19: #{_encode.1} parent=1 // pred_check_branch
      %2755 = sbr.rel (0) target = $region21
    $region20: #{_encode.1} parent=1 // pred_region
      %2756 = dma.done [#allocation4], 16
    $region21: #{_encode.1} parent=1 // pred_fallthru
      _
    %2757 = vsyncpa [#allocation4], 1

</llo_original>
